<compile_context>
chip_gen: v5e
topology: v5e:2x2
jax: 0.10.0
libtpu: 0.0.40
codegen_flags: <defaults>
</compile_context>

<pallas_src>
import math
import numpy as np
import jax
import jax.numpy as jnp
from jax import lax
from jax.experimental import pallas as pl
from jax.experimental.pallas import tpu as pltpu

_SQRT_2_OVER_PI = math.sqrt(2.0 / math.pi)

# --------------------------- per-generation VMEM budget ---------------------------

_VMEM_BUDGET_CACHE = None


def _budget():
    """~3/4 of physical VMEM (96-100 MiB on v5e/v6e, ~48 MiB on v7x)."""
    global _VMEM_BUDGET_CACHE
    if _VMEM_BUDGET_CACHE is None:
        cap = None
        try:
            info = pltpu.get_tpu_info()
            cap = int(getattr(info, "vmem_capacity_bytes", 0)) or None
        except Exception:
            cap = None
        if cap is None:
            _VMEM_BUDGET_CACHE = 48 * 1024 * 1024          # conservative fallback
        else:
            _VMEM_BUDGET_CACHE = min((cap * 3) // 4, 100 * 1024 * 1024)
    return _VMEM_BUDGET_CACHE


def _pick_tile(dim, target, aligns):
    """Largest divisor of `dim` <= target that is a multiple of one of `aligns`
    (tried in preference order); falls back to the full dim."""
    if dim <= target:
        return dim
    for a in aligns:
        t = (target // a) * a
        while t >= a:
            if dim % t == 0:
                return t
            t -= a
    # TODO(synk): awkward (non-divisible) dims fall back to a full-extent block.
    return dim


# --------------------- fused (LN) + matmul + bias/GELU/residual ---------------------

def _make_matmul_kernel(fuse_ln, gelu, add_res):
    def kernel(*refs):
        i = 0
        x_ref = refs[i]; i += 1
        if fuse_ln:
            g_ref, bln_ref = refs[i], refs[i + 1]; i += 2
        w_ref, b_ref = refs[i], refs[i + 1]; i += 2
        if add_res:
            res_ref = refs[i]; i += 1
        o_ref = refs[i]

        x = x_ref[...]
        if fuse_ln:
            # LayerNorm over the (full, un-tiled) K axis; torch defaults: eps=1e-5, biased var.
            # TODO(synk): when N is tiled, LN is recomputed per output-column tile; a
            # K-tiled accumulator + precomputed (mean, rsqrt(var)) pass would avoid this.
            x = x.astype(jnp.float32)
            mean = jnp.mean(x, axis=-1, keepdims=True)
            var = jnp.mean(jnp.square(x - mean), axis=-1, keepdims=True)
            x = (x - mean) * lax.rsqrt(var + 1e-5) * g_ref[...] + bln_ref[...]
        acc = jnp.dot(x.astype(jnp.bfloat16), w_ref[...],
                      preferred_element_type=jnp.float32) + b_ref[...]
        if gelu:
            # GELU(approximate='tanh'), computed on the f32 accumulator (v5e-friendly).
            acc = 0.5 * acc * (1.0 + jnp.tanh(
                _SQRT_2_OVER_PI * (acc + 0.044715 * acc * acc * acc)))
        if add_res:
            acc = acc + res_ref[...].astype(jnp.float32)
        o_ref[...] = acc.astype(o_ref.dtype)
    return kernel


def _plan_tiles(M, K, N, x_bytes, out_bytes, has_ln, has_res, budget):
    """Pick (tm, tn). Prefers tn == N (weight resident, 1-D grid) when it fits."""
    m_aligns = (256, 128, 16) if out_bytes == 2 else (256, 128, 8)

    def usage(tm, tn):
        u = (tm * K * x_bytes            # x tile
             + K * tn * 2                # bf16 weight tile
             + tn * 4                    # bias
             + tm * tn * out_bytes)      # output tile
        if has_res:
            u += tm * tn * 4
        if has_ln:
            u += 2 * K * 4
        u *= 2                           # double buffering
        u += 2 * tm * max(K, tn) * 4     # f32 compute temporaries headroom
        return u

    tm_cands = []
    for t in (512, 256, 128, 64, 32, 16, 8):
        tm = _pick_tile(M, t, m_aligns)
        if tm not in tm_cands:
            tm_cands.append(tm)
    tn_cands = [N] + [t for t in (2048, 1024, 512, 256, 128)
                      if t < N and N % t == 0]

    for tn in tn_cands:                  # weight residency first, then wide tiles
        for tm in tm_cands:
            if usage(tm, tn) <= budget:
                return tm, tn
    # TODO(synk): K-tiled accumulator variant (3-D grid, f32 scratch) for huge d_model.
    return tm_cands[-1], tn_cands[-1]


def fused_matmul(x2d, w, b, *, ln=None, gelu=False, residual=None,
                 out_dtype=jnp.bfloat16):
    """out = [LN(x)] @ w + b  [-> GELU] [+ residual].  w is bf16, accumulation is f32."""
    M, K = x2d.shape
    N = w.shape[1]
    x_bytes = jnp.dtype(x2d.dtype).itemsize
    out_bytes = jnp.dtype(out_dtype).itemsize
    tm, tn = _plan_tiles(M, K, N, x_bytes, out_bytes, ln is not None,
                         residual is not None, _budget())
    weight_resident = (tn == N)

    if weight_resident:
        grid = (M // tm,)
        xmap = lambda i: (i, 0)
        cmap = lambda i: (0, 0)          # constant blocks (LN params, weight, bias)
        omap = lambda i: (i, 0)
        wmap = cmap
        sem = ("parallel",)
    else:
        grid = (M // tm, N // tn)        # i outer, j inner: x tile deduped across j
        xmap = lambda i, j: (i, 0)
        cmap = lambda i, j: (0, 0)
        wmap = lambda i, j: (0, j)
        omap = lambda i, j: (i, j)
        sem = ("parallel", "parallel")

    in_specs = [pl.BlockSpec((tm, K), xmap)]
    args = [x2d]
    if ln is not None:
        in_specs += [pl.BlockSpec((1, K), cmap), pl.BlockSpec((1, K), cmap)]
        args += [ln[0].reshape(1, K).astype(jnp.float32),
                 ln[1].reshape(1, K).astype(jnp.float32)]
    in_specs += [pl.BlockSpec((K, tn), wmap), pl.BlockSpec((1, tn), wmap)]
    args += [w, b.reshape(1, N).astype(jnp.float32)]
    if residual is not None:
        in_specs.append(pl.BlockSpec((tm, tn), omap))
        args.append(residual)

    return pl.pallas_call(
        _make_matmul_kernel(ln is not None, gelu, residual is not None),
        out_shape=jax.ShapeDtypeStruct((M, N), out_dtype),
        grid=grid,
        in_specs=in_specs,
        out_specs=pl.BlockSpec((tm, tn), omap),
        compiler_params=pltpu.CompilerParams(
            dimension_semantics=sem, vmem_limit_bytes=_budget()),
    )(*args)


# ------------------------------ standalone LayerNorm ------------------------------

def _ln_kernel(x_ref, g_ref, b_ref, o_ref):
    x = x_ref[...].astype(jnp.float32)
    mean = jnp.mean(x, axis=-1, keepdims=True)
    var = jnp.mean(jnp.square(x - mean), axis=-1, keepdims=True)
    o_ref[...] = ((x - mean) * lax.rsqrt(var + 1e-5) * g_ref[...]
                  + b_ref[...]).astype(o_ref.dtype)


def layernorm(x, g, b):
    B, T, D = x.shape
    M = B * T
    tm = _pick_tile(M, 512, (256, 128, 8))
    out = pl.pallas_call(
        _ln_kernel,
        out_shape=jax.ShapeDtypeStruct((M, D), jnp.float32),
        grid=(M // tm,),
        in_specs=[pl.BlockSpec((tm, D), lambda i: (i, 0)),
                  pl.BlockSpec((1, D), lambda i: (0, 0)),
                  pl.BlockSpec((1, D), lambda i: (0, 0))],
        out_specs=pl.BlockSpec((tm, D), lambda i: (i, 0)),
        compiler_params=pltpu.CompilerParams(
            dimension_semantics=("parallel",), vmem_limit_bytes=_budget()),
    )(x.reshape(M, D), g.reshape(1, D).astype(jnp.float32),
      b.reshape(1, D).astype(jnp.float32))
    return out.reshape(B, T, D)


# --------------------------------- attention cores ---------------------------------
# Grid = (batch, query-tile), both parallel (B*nq steps -> real megacore work on v7x
# even for small B). The full [T, 3D] (or [N, 2D]) block is deduped across query tiles,
# scores are [tq, T] f32 for ONE head at a time, and each head's output is stored
# directly into its lane slice of the lane-dense [tq, D] output (no concatenate).
# TODO(synk): for very long T/N convert to a KV-tiled online-softmax (flash) form; the
# current kernels hold the full [T, 3D] qkv block and one [tq, T] score tensor in VMEM.

def _make_self_attn_kernel(H, hd, T, tq, masked):
    D = H * hd
    scale = 1.0 / math.sqrt(hd)

    def kernel(*refs):
        if masked:
            qkv_ref, m_ref, o_ref = refs
        else:
            qkv_ref, o_ref = refs
            m_ref = None
        if tq == T:
            rows = slice(None)
        else:
            qi = pl.program_id(1)
            rows = pl.ds(pl.multiple_of(qi * tq, tq), tq)
        for h in range(H):
            qh = qkv_ref[0, rows, h * hd:(h + 1) * hd]                      # [tq, hd]
            kh = qkv_ref[0, :, D + h * hd: D + (h + 1) * hd]                # [T,  hd]
            vh = qkv_ref[0, :, 2 * D + h * hd: 2 * D + (h + 1) * hd]        # [T,  hd]
            s = lax.dot_general(qh, kh, (((1,), (1,)), ((), ())),
                                preferred_element_type=jnp.float32) * scale
            if masked:
                s = s + m_ref[...]
            s = s - jnp.max(s, axis=-1, keepdims=True)
            p = jnp.exp(s)
            p = p * pl.reciprocal(jnp.sum(p, axis=-1, keepdims=True), approx=True)
            o_ref[0, :, h * hd:(h + 1) * hd] = jnp.dot(
                p.astype(jnp.bfloat16), vh,
                preferred_element_type=jnp.float32).astype(o_ref.dtype)
    return kernel


def _make_cross_attn_kernel(H, hd):
    D = H * hd
    scale = 1.0 / math.sqrt(hd)

    def kernel(q_ref, kv_ref, o_ref):        # mask-free variant (attn_mask is None)
        for h in range(H):
            qh = q_ref[0, :, h * hd:(h + 1) * hd]                 # [tq, hd]
            kh = kv_ref[0, :, h * hd:(h + 1) * hd]                # [N,  hd]
            vh = kv_ref[0, :, D + h * hd: D + (h + 1) * hd]       # [N,  hd]
            s = lax.dot_general(qh, kh, (((1,), (1,)), ((), ())),
                                preferred_element_type=jnp.float32) * scale
            s = s - jnp.max(s, axis=-1, keepdims=True)
            p = jnp.exp(s)
            p = p * pl.reciprocal(jnp.sum(p, axis=-1, keepdims=True), approx=True)
            o_ref[0, :, h * hd:(h + 1) * hd] = jnp.dot(
                p.astype(jnp.bfloat16), vh,
                preferred_element_type=jnp.float32).astype(o_ref.dtype)
    return kernel


def self_attention_core(qkv, mask2d, num_heads):
    B, T, threeD = qkv.shape
    D = threeD // 3
    hd = D // num_heads
    tq = _pick_tile(T, 256, (256, 128, 16))
    nq = T // tq
    masked = mask2d is not None

    in_specs = [pl.BlockSpec((1, T, threeD), lambda b, q: (b, 0, 0))]  # deduped over q
    args = [qkv]
    if masked:
        in_specs.append(pl.BlockSpec((tq, T), lambda b, q: (q, 0)))    # shared over b/h
        args.append(mask2d)

    return pl.pallas_call(
        _make_self_attn_kernel(num_heads, hd, T, tq, masked),
        out_shape=jax.ShapeDtypeStruct((B, T, D), jnp.bfloat16),
        grid=(B, nq),
        in_specs=in_specs,
        out_specs=pl.BlockSpec((1, tq, D), lambda b, q: (b, q, 0)),
        compiler_params=pltpu.CompilerParams(
            dimension_semantics=("parallel", "parallel"),
            vmem_limit_bytes=_budget()),
    )(*args)


def cross_attention_core(q, kv, num_heads):
    B, T, D = q.shape
    N = kv.shape[1]
    hd = D // num_heads
    tq = _pick_tile(T, 256, (256, 128, 16))
    return pl.pallas_call(
        _make_cross_attn_kernel(num_heads, hd),
        out_shape=jax.ShapeDtypeStruct((B, T, D), jnp.bfloat16),
        grid=(B, T // tq),
        in_specs=[pl.BlockSpec((1, tq, D), lambda b, q: (b, q, 0)),
                  pl.BlockSpec((1, N, 2 * D), lambda b, q: (b, 0, 0))],  # deduped over q
        out_specs=pl.BlockSpec((1, tq, D), lambda b, q: (b, q, 0)),
        compiler_params=pltpu.CompilerParams(
            dimension_semantics=("parallel", "parallel"),
            vmem_limit_bytes=_budget()),
    )(q, kv)


def _mask_2d(attn_mask, T, N):
    if attn_mask is None:
        return None                      # mask-free kernel variant: nothing DMA'd/added
    m = jnp.asarray(attn_mask, jnp.float32)
    # TODO(synk): per-batch / per-head masks (leading dims > 1) would need a streamed
    # [B*H, T, N] variant; the module's window mask broadcasts over batch & heads.
    return m.reshape(m.shape[-2], m.shape[-1])


# ----------------------------------- model forward -----------------------------------

def transformer_forward(params, xrc, conditioning_tensor, xrc_att_mask, num_heads):
    B, T, D = xrc.shape
    # TODO(synk): dropout layers are no-ops (dropout_rate=0.0 / eval mode), omitted.
    x = xrc + params["pos_emb"]                 # requires T == max_seq_len (as in torch)
    mask2d = _mask_2d(xrc_att_mask, T, T)

    for lp in params["layers"]:
        xf = x.reshape(B * T, D)                # f32 residual stream (flat view)
        # TODO(synk): a bf16 residual stream would halve residual HBM traffic at the
        # cost of accumulated rounding; kept f32 for closeness to the torch reference.

        # ---- self-attention: LN1 fused into QKV proj; out-proj + residual fused
        qkv = fused_matmul(xf, lp["satt"]["wqkv"], lp["satt"]["bqkv"],
                           ln=(lp["ln1_g"], lp["ln1_b"]))
        att = self_attention_core(qkv.reshape(B, T, 3 * D), mask2d, num_heads)
        xf = fused_matmul(att.reshape(B * T, D), lp["satt"]["wo"], lp["satt"]["bo"],
                          residual=xf, out_dtype=jnp.float32)

        # ---- cross-attention (q from LN2(x); k,v from raw conditioning tensor)
        if conditioning_tensor is not None:
            Nc = conditioning_tensor.shape[1]
            q = fused_matmul(xf, lp["catt"]["wq"], lp["catt"]["bq"],
                             ln=(lp["ln2_g"], lp["ln2_b"]))
            kv = fused_matmul(conditioning_tensor.reshape(B * Nc, D),
                              lp["catt"]["wkv"], lp["catt"]["bkv"])
            catt = cross_attention_core(q.reshape(B, T, D),
                                        kv.reshape(B, Nc, 2 * D), num_heads)
            xf = fused_matmul(catt.reshape(B * T, D), lp["catt"]["wo"], lp["catt"]["bo"],
                              residual=xf, out_dtype=jnp.float32)

        # ---- FFN: LN3 + up-proj + GELU fused; down-proj + residual fused
        h = fused_matmul(xf, lp["ffn_w1"], lp["ffn_b1"],
                         ln=(lp["ln3_g"], lp["ln3_b"]), gelu=True)
        xf = fused_matmul(h, lp["ffn_w2"], lp["ffn_b2"],
                          residual=xf, out_dtype=jnp.float32)

        x = xf.reshape(B, T, D)

    if params["out_g"] is not None:
        x = layernorm(x, params["out_g"], params["out_b"])
    return x


# ----------------------------------- parameter init -----------------------------------

def sinusoidal_pos_emb(maxlen, dim):
    p, i = np.meshgrid(np.arange(float(maxlen)), np.arange(dim / 2.0) * 2)
    theta = (p / 10000.0 ** (i / dim)).T
    pos = np.stack([np.sin(theta), np.cos(theta)], axis=-1).reshape(maxlen, dim)[None]
    return jnp.asarray(pos, jnp.float32)


def init_linear(key, din, dout):
    kw, kb = jax.random.split(key)
    bound = 1.0 / math.sqrt(din)
    w = jax.random.uniform(kw, (din, dout), jnp.float32, -bound, bound)
    b = jax.random.uniform(kb, (dout,), jnp.float32, -bound, bound)
    return w, b


def init_attention_self(key, d_model):
    ks = jax.random.split(key, 4)
    wq, bq = init_linear(ks[0], d_model, d_model)
    wk, bk = init_linear(ks[1], d_model, d_model)
    wv, bv = init_linear(ks[2], d_model, d_model)
    wo, bo = init_linear(ks[3], d_model, d_model)
    return dict(wqkv=jnp.concatenate([wq, wk, wv], axis=1).astype(jnp.bfloat16),
                bqkv=jnp.concatenate([bq, bk, bv]),
                wo=wo.astype(jnp.bfloat16), bo=bo)


def init_attention_cross(key, d_model):
    ks = jax.random.split(key, 4)
    wq, bq = init_linear(ks[0], d_model, d_model)
    wk, bk = init_linear(ks[1], d_model, d_model)
    wv, bv = init_linear(ks[2], d_model, d_model)
    wo, bo = init_linear(ks[3], d_model, d_model)
    return dict(wq=wq.astype(jnp.bfloat16), bq=bq,
                wkv=jnp.concatenate([wk, wv], axis=1).astype(jnp.bfloat16),
                bkv=jnp.concatenate([bk, bv]),
                wo=wo.astype(jnp.bfloat16), bo=bo)


def init_params(key, d_model, num_layers, max_seq_len, out_norm=True):
    layers = []
    for _ in range(num_layers):
        key, k1, k2, k3, k4 = jax.random.split(key, 5)
        w1, b1 = init_linear(k3, d_model, 4 * d_model)
        w2, b2 = init_linear(k4, 4 * d_model, d_model)
        layers.append(dict(
            ln1_g=jnp.ones((d_model,), jnp.float32), ln1_b=jnp.zeros((d_model,), jnp.float32),
            satt=init_attention_self(k1, d_model),
            ln2_g=jnp.ones((d_model,), jnp.float32), ln2_b=jnp.zeros((d_model,), jnp.float32),
            catt=init_attention_cross(k2, d_model),
            ln3_g=jnp.ones((d_model,), jnp.float32), ln3_b=jnp.zeros((d_model,), jnp.float32),
            ffn_w1=w1.astype(jnp.bfloat16), ffn_b1=b1,
            ffn_w2=w2.astype(jnp.bfloat16), ffn_b2=b2,
        ))
    return dict(
        pos_emb=sinusoidal_pos_emb(max_seq_len, d_model),
        layers=layers,
        out_g=jnp.ones((d_model,), jnp.float32) if out_norm else None,
        out_b=jnp.zeros((d_model,), jnp.float32) if out_norm else None,
    )


# ----------------------------------------- main -----------------------------------------

if __name__ == "__main__":
    # Small config consistent with the module (d_model % num_heads == 0, d_model even).
    B, T, D, H, L = 2, 8, 32, 4, 2
    N_COND = 8
    MAX_SEQ_LEN = T          # forward requires seq_len == max_seq_len for pos-emb broadcast
    ATTN_WINDOW = 5

    key = jax.random.PRNGKey(0)
    kp, kx, kc = jax.random.split(key, 3)

    params = init_params(kp, d_model=D, num_layers=L, max_seq_len=MAX_SEQ_LEN,
                         out_norm=True)

    xrc = jax.random.normal(kx, (B, T, D), jnp.float32)
    conditioning_tensor = jax.random.normal(kc, (B, N_COND, D), jnp.float32)

    # Additive local-attention-window mask, broadcastable to (B, H, T, T),
    # matching F.scaled_dot_product_attention's float attn_mask semantics.
    idx = jnp.arange(T)
    allowed = jnp.abs(idx[:, None] - idx[None, :]) <= (ATTN_WINDOW // 2)
    xrc_att_mask = jnp.where(allowed, 0.0, -1e9).astype(jnp.float32)[None, None]  # [1,1,T,T]

    fwd = jax.jit(lambda p, x, c, m: transformer_forward(p, x, c, m, num_heads=H))
    out = fwd(params, xrc, conditioning_tensor, xrc_att_mask)
    out = jax.block_until_ready(out)

    assert out.shape == (B, T, D) and out.dtype == jnp.float32
    assert bool(jnp.all(jnp.isfinite(out)))
    print("KERNEL_OK")
</pallas_src>

<mosaic_0001>
module attributes {stable_mosaic.version = 11 : i64} {
  func.func @kernel(%arg0: i32, %arg1: memref<16x32xbf16, #tpu.memory_space<vmem>>, %arg2: memref<32x32xbf16, #tpu.memory_space<vmem>>, %arg3: memref<1x32xf32, #tpu.memory_space<vmem>>, %arg4: memref<16x32xf32, #tpu.memory_space<vmem>>, %arg5: memref<16x32xf32, #tpu.memory_space<vmem>>) attributes {dimension_semantics = [#tpu.dimension_semantics<parallel>], iteration_bounds = array<i64: 1>, scalar_prefetch = 0 : i64, scratch_operands = 0 : i64, tpu.core_type = #tpu.core_type<tc>, window_params = [{transform_indices = @transform_0, window_bounds = array<i64: 16, 32>}, {pipeline_mode = #tpu.pipeline_mode<synchronous>, transform_indices = @transform_1, window_bounds = array<i64: 32, 32>}, {pipeline_mode = #tpu.pipeline_mode<synchronous>, transform_indices = @transform_2, window_bounds = array<i64: 1, 32>}, {transform_indices = @transform_3, window_bounds = array<i64: 16, 32>}, {transform_indices = @transform_4, window_bounds = array<i64: 16, 32>}]} {
    %c0 = arith.constant 0 : index
    %c0_0 = arith.constant 0 : index
    %0 = vector.load %arg1[%c0, %c0_0] : memref<16x32xbf16, #tpu.memory_space<vmem>>, vector<16x32xbf16>
    %c0_1 = arith.constant 0 : index
    %c0_2 = arith.constant 0 : index
    %1 = vector.load %arg2[%c0_1, %c0_2] : memref<32x32xbf16, #tpu.memory_space<vmem>>, vector<32x32xbf16>
    %cst = arith.constant dense<0.000000e+00> : vector<16x32xf32>
    %2 = tpu.matmul %0, %1, %cst {dimension_numbers = #tpu.dot_dimension_numbers<[1], [0], [0], [1], [0, 0, 1, 1], [], []>} : vector<16x32xbf16>, vector<32x32xbf16>, vector<16x32xf32> -> vector<16x32xf32>
    %c0_3 = arith.constant 0 : index
    %c0_4 = arith.constant 0 : index
    %3 = vector.load %arg3[%c0_3, %c0_4] : memref<1x32xf32, #tpu.memory_space<vmem>>, vector<1x32xf32>
    %4 = vector.broadcast %3 : vector<1x32xf32> to vector<16x32xf32>
    %5 = arith.addf %2, %4 : vector<16x32xf32>
    %c0_5 = arith.constant 0 : index
    %c0_6 = arith.constant 0 : index
    %6 = vector.load %arg4[%c0_5, %c0_6] : memref<16x32xf32, #tpu.memory_space<vmem>>, vector<16x32xf32>
    %7 = arith.addf %5, %6 : vector<16x32xf32>
    %c0_7 = arith.constant 0 : index
    %c0_8 = arith.constant 0 : index
    %8 = vector.load %arg5[%c0_7, %c0_8] : memref<16x32xf32, #tpu.memory_space<vmem>>, vector<16x32xf32>
    tpu.vector_store %arg5[%c0_7, %c0_8], %7 {strides = array<i32>} : memref<16x32xf32, #tpu.memory_space<vmem>>, vector<16x32xf32>,
    return
  }
  func.func @transform_0(%arg0: i32) -> (i32, i32) {
    %c0_i32 = arith.constant 0 : i32
    %c0_i32_0 = arith.constant 0 : i32
    return %arg0, %c0_i32 : i32, i32
  }
  func.func @transform_1(%arg0: i32) -> (i32, i32) {
    %c0_i32 = arith.constant 0 : i32
    %c0_i32_0 = arith.constant 0 : i32
    %c0_i32_1 = arith.constant 0 : i32
    return %c0_i32, %c0_i32_0 : i32, i32
  }
  func.func @transform_2(%arg0: i32) -> (i32, i32) {
    %c0_i32 = arith.constant 0 : i32
    %c0_i32_0 = arith.constant 0 : i32
    %c0_i32_1 = arith.constant 0 : i32
    return %c0_i32, %c0_i32_0 : i32, i32
  }
  func.func @transform_3(%arg0: i32) -> (i32, i32) {
    %c0_i32 = arith.constant 0 : i32
    %c0_i32_0 = arith.constant 0 : i32
    return %arg0, %c0_i32 : i32, i32
  }
  func.func @transform_4(%arg0: i32) -> (i32, i32) {
    %c0_i32 = arith.constant 0 : i32
    %c0_i32_0 = arith.constant 0 : i32
    return %arg0, %c0_i32 : i32, i32
  }
}

module attributes {stable_mosaic.version = 11 : i64} {
  func.func @kernel(%arg0: i32, %arg1: memref<16x32xf32, #tpu.memory_space<vmem>>, %arg2: memref<1x32xf32, #tpu.memory_space<vmem>>, %arg3: memref<1x32xf32, #tpu.memory_space<vmem>>, %arg4: memref<32x96xbf16, #tpu.memory_space<vmem>>, %arg5: memref<1x96xf32, #tpu.memory_space<vmem>>, %arg6: memref<16x96xbf16, #tpu.memory_space<vmem>>) attributes {dimension_semantics = [#tpu.dimension_semantics<parallel>], iteration_bounds = array<i64: 1>, scalar_prefetch = 0 : i64, scratch_operands = 0 : i64, tpu.core_type = #tpu.core_type<tc>, window_params = [{transform_indices = @transform_0, window_bounds = array<i64: 16, 32>}, {pipeline_mode = #tpu.pipeline_mode<synchronous>, transform_indices = @transform_1, window_bounds = array<i64: 1, 32>}, {pipeline_mode = #tpu.pipeline_mode<synchronous>, transform_indices = @transform_2, window_bounds = array<i64: 1, 32>}, {pipeline_mode = #tpu.pipeline_mode<synchronous>, transform_indices = @transform_3, window_bounds = array<i64: 32, 96>}, {pipeline_mode = #tpu.pipeline_mode<synchronous>, transform_indices = @transform_4, window_bounds = array<i64: 1, 96>}, {transform_indices = @transform_5, window_bounds = array<i64: 16, 96>}]} {
    %c0 = arith.constant 0 : index
    %c0_0 = arith.constant 0 : index
    %0 = vector.load %arg1[%c0, %c0_0] : memref<16x32xf32, #tpu.memory_space<vmem>>, vector<16x32xf32>
    %cst = arith.constant dense<0.000000e+00> : vector<16xf32>
    %1 = vector.multi_reduction <add>, %0, %cst [1] : vector<16x32xf32> to vector<16xf32>
    %2 = vector.shape_cast %1 : vector<16xf32> to vector<16x1xf32>
    %cst_1 = arith.constant 3.200000e+01 : f32
    %3 = vector.broadcast %cst_1 : f32 to vector<16x1xf32>
    %4 = arith.divf %2, %3 : vector<16x1xf32>
    %5 = vector.broadcast %4 : vector<16x1xf32> to vector<16x32xf32>
    %6 = arith.subf %0, %5 : vector<16x32xf32>
    %7 = arith.mulf %6, %6 : vector<16x32xf32>
    %cst_2 = arith.constant dense<0.000000e+00> : vector<16xf32>
    %8 = vector.multi_reduction <add>, %7, %cst_2 [1] : vector<16x32xf32> to vector<16xf32>
    %9 = vector.shape_cast %8 : vector<16xf32> to vector<16x1xf32>
    %cst_3 = arith.constant 3.200000e+01 : f32
    %10 = vector.broadcast %cst_3 : f32 to vector<16x1xf32>
    %11 = arith.divf %9, %10 : vector<16x1xf32>
    %12 = vector.broadcast %4 : vector<16x1xf32> to vector<16x32xf32>
    %13 = arith.subf %0, %12 : vector<16x32xf32>
    %cst_4 = arith.constant 9.99999974E-6 : f32
    %14 = vector.broadcast %cst_4 : f32 to vector<16x1xf32>
    %15 = arith.addf %11, %14 : vector<16x1xf32>
    %16 = math.rsqrt %15 : vector<16x1xf32>
    %17 = vector.broadcast %16 : vector<16x1xf32> to vector<16x32xf32>
    %18 = arith.mulf %13, %17 : vector<16x32xf32>
    %c0_5 = arith.constant 0 : index
    %c0_6 = arith.constant 0 : index
    %19 = vector.load %arg2[%c0_5, %c0_6] : memref<1x32xf32, #tpu.memory_space<vmem>>, vector<1x32xf32>
    %20 = vector.broadcast %19 : vector<1x32xf32> to vector<16x32xf32>
    %21 = arith.mulf %18, %20 : vector<16x32xf32>
    %c0_7 = arith.constant 0 : index
    %c0_8 = arith.constant 0 : index
    %22 = vector.load %arg3[%c0_7, %c0_8] : memref<1x32xf32, #tpu.memory_space<vmem>>, vector<1x32xf32>
    %23 = vector.broadcast %22 : vector<1x32xf32> to vector<16x32xf32>
    %24 = arith.addf %21, %23 : vector<16x32xf32>
    %25 = arith.truncf %24 : vector<16x32xf32> to vector<16x32xbf16>
    %c0_9 = arith.constant 0 : index
    %c0_10 = arith.constant 0 : index
    %26 = vector.load %arg4[%c0_9, %c0_10] : memref<32x96xbf16, #tpu.memory_space<vmem>>, vector<32x96xbf16>
    %cst_11 = arith.constant dense<0.000000e+00> : vector<16x96xf32>
    %27 = tpu.matmul %25, %26, %cst_11 {dimension_numbers = #tpu.dot_dimension_numbers<[1], [0], [0], [1], [0, 0, 1, 1], [], []>} : vector<16x32xbf16>, vector<32x96xbf16>, vector<16x96xf32> -> vector<16x96xf32>
    %c0_12 = arith.constant 0 : index
    %c0_13 = arith.constant 0 : index
    %28 = vector.load %arg5[%c0_12, %c0_13] : memref<1x96xf32, #tpu.memory_space<vmem>>, vector<1x96xf32>
    %29 = vector.broadcast %28 : vector<1x96xf32> to vector<16x96xf32>
    %30 = arith.addf %27, %29 : vector<16x96xf32>
    %31 = arith.truncf %30 : vector<16x96xf32> to vector<16x96xbf16>
    %c0_14 = arith.constant 0 : index
    %c0_15 = arith.constant 0 : index
    %32 = vector.load %arg6[%c0_14, %c0_15] : memref<16x96xbf16, #tpu.memory_space<vmem>>, vector<16x96xbf16>
    tpu.vector_store %arg6[%c0_14, %c0_15], %31 {strides = array<i32>} : memref<16x96xbf16, #tpu.memory_space<vmem>>, vector<16x96xbf16>,
    return
  }
  func.func @transform_0(%arg0: i32) -> (i32, i32) {
    %c0_i32 = arith.constant 0 : i32
    %c0_i32_0 = arith.constant 0 : i32
    return %arg0, %c0_i32 : i32, i32
  }
  func.func @transform_1(%arg0: i32) -> (i32, i32) {
    %c0_i32 = arith.constant 0 : i32
    %c0_i32_0 = arith.constant 0 : i32
    %c0_i32_1 = arith.constant 0 : i32
    return %c0_i32, %c0_i32_0 : i32, i32
  }
  func.func @transform_2(%arg0: i32) -> (i32, i32) {
    %c0_i32 = arith.constant 0 : i32
    %c0_i32_0 = arith.constant 0 : i32
    %c0_i32_1 = arith.constant 0 : i32
    return %c0_i32, %c0_i32_0 : i32, i32
  }
  func.func @transform_3(%arg0: i32) -> (i32, i32) {
    %c0_i32 = arith.constant 0 : i32
    %c0_i32_0 = arith.constant 0 : i32
    %c0_i32_1 = arith.constant 0 : i32
    return %c0_i32, %c0_i32_0 : i32, i32
  }
  func.func @transform_4(%arg0: i32) -> (i32, i32) {
    %c0_i32 = arith.constant 0 : i32
    %c0_i32_0 = arith.constant 0 : i32
    %c0_i32_1 = arith.constant 0 : i32
    return %c0_i32, %c0_i32_0 : i32, i32
  }
  func.func @transform_5(%arg0: i32) -> (i32, i32) {
    %c0_i32 = arith.constant 0 : i32
    %c0_i32_0 = arith.constant 0 : i32
    return %arg0, %c0_i32 : i32, i32
  }
}

module attributes {stable_mosaic.version = 11 : i64} {
  func.func @kernel(%arg0: i32, %arg1: i32, %arg2: memref<1x8x96xbf16, #tpu.memory_space<vmem>>, %arg3: memref<8x8xf32, #tpu.memory_space<vmem>>, %arg4: memref<1x8x32xbf16, #tpu.memory_space<vmem>>) attributes {dimension_semantics = [#tpu.dimension_semantics<parallel>, #tpu.dimension_semantics<parallel>], iteration_bounds = array<i64: 2, 1>, scalar_prefetch = 0 : i64, scratch_operands = 0 : i64, tpu.core_type = #tpu.core_type<tc>, window_params = [{transform_indices = @transform_0, window_bounds = array<i64: 1, 8, 96>}, {transform_indices = @transform_1, window_bounds = array<i64: 8, 8>}, {transform_indices = @transform_2, window_bounds = array<i64: 1, 8, 32>}]} {
    %c0 = arith.constant 0 : index
    %c0_0 = arith.constant 0 : index
    %c0_1 = arith.constant 0 : index
    %0 = vector.load %arg2[%c0, %c0_0, %c0_1] : memref<1x8x96xbf16, #tpu.memory_space<vmem>>, vector<1x8x8xbf16>
    %1 = vector.shape_cast %0 : vector<1x8x8xbf16> to vector<8x8xbf16>
    %c0_2 = arith.constant 0 : index
    %c0_3 = arith.constant 0 : index
    %c32 = arith.constant 32 : index
    %2 = vector.load %arg2[%c0_2, %c0_3, %c32] : memref<1x8x96xbf16, #tpu.memory_space<vmem>>, vector<1x8x8xbf16>
    %3 = vector.shape_cast %2 : vector<1x8x8xbf16> to vector<8x8xbf16>
    %c0_4 = arith.constant 0 : index
    %c0_5 = arith.constant 0 : index
    %c64 = arith.constant 64 : index
    %4 = vector.load %arg2[%c0_4, %c0_5, %c64] : memref<1x8x96xbf16, #tpu.memory_space<vmem>>, vector<1x8x8xbf16>
    %5 = vector.shape_cast %4 : vector<1x8x8xbf16> to vector<8x8xbf16>
    %cst = arith.constant dense<0.000000e+00> : vector<8x8xf32>
    %6 = tpu.matmul %1, %3, %cst {dimension_numbers = #tpu.dot_dimension_numbers<[1], [1], [0], [0], [0, 0, 1, 0], [], []>} : vector<8x8xbf16>, vector<8x8xbf16>, vector<8x8xf32> -> vector<8x8xf32>
    %cst_6 = arith.constant 0.353553385 : f32
    %7 = vector.broadcast %cst_6 : f32 to vector<8x8xf32>
    %8 = arith.mulf %6, %7 : vector<8x8xf32>
    %c0_7 = arith.constant 0 : index
    %c0_8 = arith.constant 0 : index
    %9 = vector.load %arg3[%c0_7, %c0_8] : memref<8x8xf32, #tpu.memory_space<vmem>>, vector<8x8xf32>
    %10 = arith.addf %8, %9 : vector<8x8xf32>
    %cst_9 = arith.constant dense<0xFF800000> : vector<8xf32>
    %11 = vector.multi_reduction <maximumf>, %10, %cst_9 [1] : vector<8x8xf32> to vector<8xf32>
    %12 = vector.shape_cast %11 : vector<8xf32> to vector<8x1xf32>
    %13 = vector.broadcast %12 : vector<8x1xf32> to vector<8x8xf32>
    %14 = arith.subf %10, %13 : vector<8x8xf32>
    %15 = math.exp %14 : vector<8x8xf32>
    %cst_10 = arith.constant dense<0.000000e+00> : vector<8xf32>
    %16 = vector.multi_reduction <add>, %15, %cst_10 [1] : vector<8x8xf32> to vector<8xf32>
    %17 = vector.shape_cast %16 : vector<8xf32> to vector<8x1xf32>
    %18 = tpu.reciprocal %17 {approx = true} : vector<8x1xf32> -> vector<8x1xf32>
    %19 = vector.broadcast %18 : vector<8x1xf32> to vector<8x8xf32>
    %20 = arith.mulf %15, %19 : vector<8x8xf32>
    %21 = arith.truncf %20 : vector<8x8xf32> to vector<8x8xbf16>
    %cst_11 = arith.constant dense<0.000000e+00> : vector<8x8xf32>
    %22 = tpu.matmul %21, %5, %cst_11 {dimension_numbers = #tpu.dot_dimension_numbers<[1], [0], [0], [1], [0, 0, 1, 1], [], []>} : vector<8x8xbf16>, vector<8x8xbf16>, vector<8x8xf32> -> vector<8x8xf32>
    %23 = arith.truncf %22 : vector<8x8xf32> to vector<8x8xbf16>
    %c0_12 = arith.constant 0 : index
    %c0_13 = arith.constant 0 : index
    %c0_14 = arith.constant 0 : index
    %24 = vector.load %arg4[%c0_12, %c0_13, %c0_14] : memref<1x8x32xbf16, #tpu.memory_space<vmem>>, vector<1x8x8xbf16>
    %25 = vector.shape_cast %24 : vector<1x8x8xbf16> to vector<8x8xbf16>
    %26 = vector.shape_cast %23 : vector<8x8xbf16> to vector<1x8x8xbf16>
    tpu.vector_store %arg4[%c0_12, %c0_13, %c0_14], %26 {strides = array<i32>} : memref<1x8x32xbf16, #tpu.memory_space<vmem>>, vector<1x8x8xbf16>,
    %c0_15 = arith.constant 0 : index
    %c0_16 = arith.constant 0 : index
    %c8 = arith.constant 8 : index
    %27 = vector.load %arg2[%c0_15, %c0_16, %c8] : memref<1x8x96xbf16, #tpu.memory_space<vmem>>, vector<1x8x8xbf16>
    %28 = vector.shape_cast %27 : vector<1x8x8xbf16> to vector<8x8xbf16>
    %c0_17 = arith.constant 0 : index
    %c0_18 = arith.constant 0 : index
    %c40 = arith.constant 40 : index
    %29 = vector.load %arg2[%c0_17, %c0_18, %c40] : memref<1x8x96xbf16, #tpu.memory_space<vmem>>, vector<1x8x8xbf16>
    %30 = vector.shape_cast %29 : vector<1x8x8xbf16> to vector<8x8xbf16>
    %c0_19 = arith.constant 0 : index
    %c0_20 = arith.constant 0 : index
    %c72 = arith.constant 72 : index
    %31 = vector.load %arg2[%c0_19, %c0_20, %c72] : memref<1x8x96xbf16, #tpu.memory_space<vmem>>, vector<1x8x8xbf16>
    %32 = vector.shape_cast %31 : vector<1x8x8xbf16> to vector<8x8xbf16>
    %cst_21 = arith.constant dense<0.000000e+00> : vector<8x8xf32>
    %33 = tpu.matmul %28, %30, %cst_21 {dimension_numbers = #tpu.dot_dimension_numbers<[1], [1], [0], [0], [0, 0, 1, 0], [], []>} : vector<8x8xbf16>, vector<8x8xbf16>, vector<8x8xf32> -> vector<8x8xf32>
    %cst_22 = arith.constant 0.353553385 : f32
    %34 = vector.broadcast %cst_22 : f32 to vector<8x8xf32>
    %35 = arith.mulf %33, %34 : vector<8x8xf32>
    %c0_23 = arith.constant 0 : index
    %c0_24 = arith.constant 0 : index
    %36 = vector.load %arg3[%c0_23, %c0_24] : memref<8x8xf32, #tpu.memory_space<vmem>>, vector<8x8xf32>
    %37 = arith.addf %35, %36 : vector<8x8xf32>
    %cst_25 = arith.constant dense<0xFF800000> : vector<8xf32>
    %38 = vector.multi_reduction <maximumf>, %37, %cst_25 [1] : vector<8x8xf32> to vector<8xf32>
    %39 = vector.shape_cast %38 : vector<8xf32> to vector<8x1xf32>
    %40 = vector.broadcast %39 : vector<8x1xf32> to vector<8x8xf32>
    %41 = arith.subf %37, %40 : vector<8x8xf32>
    %42 = math.exp %41 : vector<8x8xf32>
    %cst_26 = arith.constant dense<0.000000e+00> : vector<8xf32>
    %43 = vector.multi_reduction <add>, %42, %cst_26 [1] : vector<8x8xf32> to vector<8xf32>
    %44 = vector.shape_cast %43 : vector<8xf32> to vector<8x1xf32>
    %45 = tpu.reciprocal %44 {approx = true} : vector<8x1xf32> -> vector<8x1xf32>
    %46 = vector.broadcast %45 : vector<8x1xf32> to vector<8x8xf32>
    %47 = arith.mulf %42, %46 : vector<8x8xf32>
    %48 = arith.truncf %47 : vector<8x8xf32> to vector<8x8xbf16>
    %cst_27 = arith.constant dense<0.000000e+00> : vector<8x8xf32>
    %49 = tpu.matmul %48, %32, %cst_27 {dimension_numbers = #tpu.dot_dimension_numbers<[1], [0], [0], [1], [0, 0, 1, 1], [], []>} : vector<8x8xbf16>, vector<8x8xbf16>, vector<8x8xf32> -> vector<8x8xf32>
    %50 = arith.truncf %49 : vector<8x8xf32> to vector<8x8xbf16>
    %c0_28 = arith.constant 0 : index
    %c0_29 = arith.constant 0 : index
    %c8_30 = arith.constant 8 : index
    %51 = vector.load %arg4[%c0_28, %c0_29, %c8_30] : memref<1x8x32xbf16, #tpu.memory_space<vmem>>, vector<1x8x8xbf16>
    %52 = vector.shape_cast %51 : vector<1x8x8xbf16> to vector<8x8xbf16>
    %53 = vector.shape_cast %50 : vector<8x8xbf16> to vector<1x8x8xbf16>
    tpu.vector_store %arg4[%c0_28, %c0_29, %c8_30], %53 {strides = array<i32>} : memref<1x8x32xbf16, #tpu.memory_space<vmem>>, vector<1x8x8xbf16>,
    %c0_31 = arith.constant 0 : index
    %c0_32 = arith.constant 0 : index
    %c16 = arith.constant 16 : index
    %54 = vector.load %arg2[%c0_31, %c0_32, %c16] : memref<1x8x96xbf16, #tpu.memory_space<vmem>>, vector<1x8x8xbf16>
    %55 = vector.shape_cast %54 : vector<1x8x8xbf16> to vector<8x8xbf16>
    %c0_33 = arith.constant 0 : index
    %c0_34 = arith.constant 0 : index
    %c48 = arith.constant 48 : index
    %56 = vector.load %arg2[%c0_33, %c0_34, %c48] : memref<1x8x96xbf16, #tpu.memory_space<vmem>>, vector<1x8x8xbf16>
    %57 = vector.shape_cast %56 : vector<1x8x8xbf16> to vector<8x8xbf16>
    %c0_35 = arith.constant 0 : index
    %c0_36 = arith.constant 0 : index
    %c80 = arith.constant 80 : index
    %58 = vector.load %arg2[%c0_35, %c0_36, %c80] : memref<1x8x96xbf16, #tpu.memory_space<vmem>>, vector<1x8x8xbf16>
    %59 = vector.shape_cast %58 : vector<1x8x8xbf16> to vector<8x8xbf16>
    %cst_37 = arith.constant dense<0.000000e+00> : vector<8x8xf32>
    %60 = tpu.matmul %55, %57, %cst_37 {dimension_numbers = #tpu.dot_dimension_numbers<[1], [1], [0], [0], [0, 0, 1, 0], [], []>} : vector<8x8xbf16>, vector<8x8xbf16>, vector<8x8xf32> -> vector<8x8xf32>
    %cst_38 = arith.constant 0.353553385 : f32
    %61 = vector.broadcast %cst_38 : f32 to vector<8x8xf32>
    %62 = arith.mulf %60, %61 : vector<8x8xf32>
    %c0_39 = arith.constant 0 : index
    %c0_40 = arith.constant 0 : index
    %63 = vector.load %arg3[%c0_39, %c0_40] : memref<8x8xf32, #tpu.memory_space<vmem>>, vector<8x8xf32>
    %64 = arith.addf %62, %63 : vector<8x8xf32>
    %cst_41 = arith.constant dense<0xFF800000> : vector<8xf32>
    %65 = vector.multi_reduction <maximumf>, %64, %cst_41 [1] : vector<8x8xf32> to vector<8xf32>
    %66 = vector.shape_cast %65 : vector<8xf32> to vector<8x1xf32>
    %67 = vector.broadcast %66 : vector<8x1xf32> to vector<8x8xf32>
    %68 = arith.subf %64, %67 : vector<8x8xf32>
    %69 = math.exp %68 : vector<8x8xf32>
    %cst_42 = arith.constant dense<0.000000e+00> : vector<8xf32>
    %70 = vector.multi_reduction <add>, %69, %cst_42 [1] : vector<8x8xf32> to vector<8xf32>
    %71 = vector.shape_cast %70 : vector<8xf32> to vector<8x1xf32>
    %72 = tpu.reciprocal %71 {approx = true} : vector<8x1xf32> -> vector<8x1xf32>
    %73 = vector.broadcast %72 : vector<8x1xf32> to vector<8x8xf32>
    %74 = arith.mulf %69, %73 : vector<8x8xf32>
    %75 = arith.truncf %74 : vector<8x8xf32> to vector<8x8xbf16>
    %cst_43 = arith.constant dense<0.000000e+00> : vector<8x8xf32>
    %76 = tpu.matmul %75, %59, %cst_43 {dimension_numbers = #tpu.dot_dimension_numbers<[1], [0], [0], [1], [0, 0, 1, 1], [], []>} : vector<8x8xbf16>, vector<8x8xbf16>, vector<8x8xf32> -> vector<8x8xf32>
    %77 = arith.truncf %76 : vector<8x8xf32> to vector<8x8xbf16>
    %c0_44 = arith.constant 0 : index
    %c0_45 = arith.constant 0 : index
    %c16_46 = arith.constant 16 : index
    %78 = vector.load %arg4[%c0_44, %c0_45, %c16_46] : memref<1x8x32xbf16, #tpu.memory_space<vmem>>, vector<1x8x8xbf16>
    %79 = vector.shape_cast %78 : vector<1x8x8xbf16> to vector<8x8xbf16>
    %80 = vector.shape_cast %77 : vector<8x8xbf16> to vector<1x8x8xbf16>
    tpu.vector_store %arg4[%c0_44, %c0_45, %c16_46], %80 {strides = array<i32>} : memref<1x8x32xbf16, #tpu.memory_space<vmem>>, vector<1x8x8xbf16>,
    %c0_47 = arith.constant 0 : index
    %c0_48 = arith.constant 0 : index
    %c24 = arith.constant 24 : index
    %81 = vector.load %arg2[%c0_47, %c0_48, %c24] : memref<1x8x96xbf16, #tpu.memory_space<vmem>>, vector<1x8x8xbf16>
    %82 = vector.shape_cast %81 : vector<1x8x8xbf16> to vector<8x8xbf16>
    %c0_49 = arith.constant 0 : index
    %c0_50 = arith.constant 0 : index
    %c56 = arith.constant 56 : index
    %83 = vector.load %arg2[%c0_49, %c0_50, %c56] : memref<1x8x96xbf16, #tpu.memory_space<vmem>>, vector<1x8x8xbf16>
    %84 = vector.shape_cast %83 : vector<1x8x8xbf16> to vector<8x8xbf16>
    %c0_51 = arith.constant 0 : index
    %c0_52 = arith.constant 0 : index
    %c88 = arith.constant 88 : index
    %85 = vector.load %arg2[%c0_51, %c0_52, %c88] : memref<1x8x96xbf16, #tpu.memory_space<vmem>>, vector<1x8x8xbf16>
    %86 = vector.shape_cast %85 : vector<1x8x8xbf16> to vector<8x8xbf16>
    %cst_53 = arith.constant dense<0.000000e+00> : vector<8x8xf32>
    %87 = tpu.matmul %82, %84, %cst_53 {dimension_numbers = #tpu.dot_dimension_numbers<[1], [1], [0], [0], [0, 0, 1, 0], [], []>} : vector<8x8xbf16>, vector<8x8xbf16>, vector<8x8xf32> -> vector<8x8xf32>
    %cst_54 = arith.constant 0.353553385 : f32
    %88 = vector.broadcast %cst_54 : f32 to vector<8x8xf32>
    %89 = arith.mulf %87, %88 : vector<8x8xf32>
    %c0_55 = arith.constant 0 : index
    %c0_56 = arith.constant 0 : index
    %90 = vector.load %arg3[%c0_55, %c0_56] : memref<8x8xf32, #tpu.memory_space<vmem>>, vector<8x8xf32>
    %91 = arith.addf %89, %90 : vector<8x8xf32>
    %cst_57 = arith.constant dense<0xFF800000> : vector<8xf32>
    %92 = vector.multi_reduction <maximumf>, %91, %cst_57 [1] : vector<8x8xf32> to vector<8xf32>
    %93 = vector.shape_cast %92 : vector<8xf32> to vector<8x1xf32>
    %94 = vector.broadcast %93 : vector<8x1xf32> to vector<8x8xf32>
    %95 = arith.subf %91, %94 : vector<8x8xf32>
    %96 = math.exp %95 : vector<8x8xf32>
    %cst_58 = arith.constant dense<0.000000e+00> : vector<8xf32>
    %97 = vector.multi_reduction <add>, %96, %cst_58 [1] : vector<8x8xf32> to vector<8xf32>
    %98 = vector.shape_cast %97 : vector<8xf32> to vector<8x1xf32>
    %99 = tpu.reciprocal %98 {approx = true} : vector<8x1xf32> -> vector<8x1xf32>
    %100 = vector.broadcast %99 : vector<8x1xf32> to vector<8x8xf32>
    %101 = arith.mulf %96, %100 : vector<8x8xf32>
    %102 = arith.truncf %101 : vector<8x8xf32> to vector<8x8xbf16>
    %cst_59 = arith.constant dense<0.000000e+00> : vector<8x8xf32>
    %103 = tpu.matmul %102, %86, %cst_59 {dimension_numbers = #tpu.dot_dimension_numbers<[1], [0], [0], [1], [0, 0, 1, 1], [], []>} : vector<8x8xbf16>, vector<8x8xbf16>, vector<8x8xf32> -> vector<8x8xf32>
    %104 = arith.truncf %103 : vector<8x8xf32> to vector<8x8xbf16>
    %c0_60 = arith.constant 0 : index
    %c0_61 = arith.constant 0 : index
    %c24_62 = arith.constant 24 : index
    %105 = vector.load %arg4[%c0_60, %c0_61, %c24_62] : memref<1x8x32xbf16, #tpu.memory_space<vmem>>, vector<1x8x8xbf16>
    %106 = vector.shape_cast %105 : vector<1x8x8xbf16> to vector<8x8xbf16>
    %107 = vector.shape_cast %104 : vector<8x8xbf16> to vector<1x8x8xbf16>
    tpu.vector_store %arg4[%c0_60, %c0_61, %c24_62], %107 {strides = array<i32>} : memref<1x8x32xbf16, #tpu.memory_space<vmem>>, vector<1x8x8xbf16>,
    return
  }
  func.func @transform_0(%arg0: i32, %arg1: i32) -> (i32, i32, i32) {
    %c0_i32 = arith.constant 0 : i32
    %c0_i32_0 = arith.constant 0 : i32
    %c0_i32_1 = arith.constant 0 : i32
    return %arg0, %c0_i32, %c0_i32_0 : i32, i32, i32
  }
  func.func @transform_1(%arg0: i32, %arg1: i32) -> (i32, i32) {
    %c0_i32 = arith.constant 0 : i32
    %c0_i32_0 = arith.constant 0 : i32
    return %arg1, %c0_i32 : i32, i32
  }
  func.func @transform_2(%arg0: i32, %arg1: i32) -> (i32, i32, i32) {
    %c0_i32 = arith.constant 0 : i32
    %c0_i32_0 = arith.constant 0 : i32
    return %arg0, %arg1, %c0_i32 : i32, i32, i32
  }
}

module attributes {stable_mosaic.version = 11 : i64} {
  func.func @kernel(%arg0: i32, %arg1: memref<16x32xf32, #tpu.memory_space<vmem>>, %arg2: memref<1x32xf32, #tpu.memory_space<vmem>>, %arg3: memref<1x32xf32, #tpu.memory_space<vmem>>, %arg4: memref<32x32xbf16, #tpu.memory_space<vmem>>, %arg5: memref<1x32xf32, #tpu.memory_space<vmem>>, %arg6: memref<16x32xbf16, #tpu.memory_space<vmem>>) attributes {dimension_semantics = [#tpu.dimension_semantics<parallel>], iteration_bounds = array<i64: 1>, scalar_prefetch = 0 : i64, scratch_operands = 0 : i64, tpu.core_type = #tpu.core_type<tc>, window_params = [{transform_indices = @transform_0, window_bounds = array<i64: 16, 32>}, {pipeline_mode = #tpu.pipeline_mode<synchronous>, transform_indices = @transform_1, window_bounds = array<i64: 1, 32>}, {pipeline_mode = #tpu.pipeline_mode<synchronous>, transform_indices = @transform_2, window_bounds = array<i64: 1, 32>}, {pipeline_mode = #tpu.pipeline_mode<synchronous>, transform_indices = @transform_3, window_bounds = array<i64: 32, 32>}, {pipeline_mode = #tpu.pipeline_mode<synchronous>, transform_indices = @transform_4, window_bounds = array<i64: 1, 32>}, {transform_indices = @transform_5, window_bounds = array<i64: 16, 32>}]} {
    %c0 = arith.constant 0 : index
    %c0_0 = arith.constant 0 : index
    %0 = vector.load %arg1[%c0, %c0_0] : memref<16x32xf32, #tpu.memory_space<vmem>>, vector<16x32xf32>
    %cst = arith.constant dense<0.000000e+00> : vector<16xf32>
    %1 = vector.multi_reduction <add>, %0, %cst [1] : vector<16x32xf32> to vector<16xf32>
    %2 = vector.shape_cast %1 : vector<16xf32> to vector<16x1xf32>
    %cst_1 = arith.constant 3.200000e+01 : f32
    %3 = vector.broadcast %cst_1 : f32 to vector<16x1xf32>
    %4 = arith.divf %2, %3 : vector<16x1xf32>
    %5 = vector.broadcast %4 : vector<16x1xf32> to vector<16x32xf32>
    %6 = arith.subf %0, %5 : vector<16x32xf32>
    %7 = arith.mulf %6, %6 : vector<16x32xf32>
    %cst_2 = arith.constant dense<0.000000e+00> : vector<16xf32>
    %8 = vector.multi_reduction <add>, %7, %cst_2 [1] : vector<16x32xf32> to vector<16xf32>
    %9 = vector.shape_cast %8 : vector<16xf32> to vector<16x1xf32>
    %cst_3 = arith.constant 3.200000e+01 : f32
    %10 = vector.broadcast %cst_3 : f32 to vector<16x1xf32>
    %11 = arith.divf %9, %10 : vector<16x1xf32>
    %12 = vector.broadcast %4 : vector<16x1xf32> to vector<16x32xf32>
    %13 = arith.subf %0, %12 : vector<16x32xf32>
    %cst_4 = arith.constant 9.99999974E-6 : f32
    %14 = vector.broadcast %cst_4 : f32 to vector<16x1xf32>
    %15 = arith.addf %11, %14 : vector<16x1xf32>
    %16 = math.rsqrt %15 : vector<16x1xf32>
    %17 = vector.broadcast %16 : vector<16x1xf32> to vector<16x32xf32>
    %18 = arith.mulf %13, %17 : vector<16x32xf32>
    %c0_5 = arith.constant 0 : index
    %c0_6 = arith.constant 0 : index
    %19 = vector.load %arg2[%c0_5, %c0_6] : memref<1x32xf32, #tpu.memory_space<vmem>>, vector<1x32xf32>
    %20 = vector.broadcast %19 : vector<1x32xf32> to vector<16x32xf32>
    %21 = arith.mulf %18, %20 : vector<16x32xf32>
    %c0_7 = arith.constant 0 : index
    %c0_8 = arith.constant 0 : index
    %22 = vector.load %arg3[%c0_7, %c0_8] : memref<1x32xf32, #tpu.memory_space<vmem>>, vector<1x32xf32>
    %23 = vector.broadcast %22 : vector<1x32xf32> to vector<16x32xf32>
    %24 = arith.addf %21, %23 : vector<16x32xf32>
    %25 = arith.truncf %24 : vector<16x32xf32> to vector<16x32xbf16>
    %c0_9 = arith.constant 0 : index
    %c0_10 = arith.constant 0 : index
    %26 = vector.load %arg4[%c0_9, %c0_10] : memref<32x32xbf16, #tpu.memory_space<vmem>>, vector<32x32xbf16>
    %cst_11 = arith.constant dense<0.000000e+00> : vector<16x32xf32>
    %27 = tpu.matmul %25, %26, %cst_11 {dimension_numbers = #tpu.dot_dimension_numbers<[1], [0], [0], [1], [0, 0, 1, 1], [], []>} : vector<16x32xbf16>, vector<32x32xbf16>, vector<16x32xf32> -> vector<16x32xf32>
    %c0_12 = arith.constant 0 : index
    %c0_13 = arith.constant 0 : index
    %28 = vector.load %arg5[%c0_12, %c0_13] : memref<1x32xf32, #tpu.memory_space<vmem>>, vector<1x32xf32>
    %29 = vector.broadcast %28 : vector<1x32xf32> to vector<16x32xf32>
    %30 = arith.addf %27, %29 : vector<16x32xf32>
    %31 = arith.truncf %30 : vector<16x32xf32> to vector<16x32xbf16>
    %c0_14 = arith.constant 0 : index
    %c0_15 = arith.constant 0 : index
    %32 = vector.load %arg6[%c0_14, %c0_15] : memref<16x32xbf16, #tpu.memory_space<vmem>>, vector<16x32xbf16>
    tpu.vector_store %arg6[%c0_14, %c0_15], %31 {strides = array<i32>} : memref<16x32xbf16, #tpu.memory_space<vmem>>, vector<16x32xbf16>,
    return
  }
  func.func @transform_0(%arg0: i32) -> (i32, i32) {
    %c0_i32 = arith.constant 0 : i32
    %c0_i32_0 = arith.constant 0 : i32
    return %arg0, %c0_i32 : i32, i32
  }
  func.func @transform_1(%arg0: i32) -> (i32, i32) {
    %c0_i32 = arith.constant 0 : i32
    %c0_i32_0 = arith.constant 0 : i32
    %c0_i32_1 = arith.constant 0 : i32
    return %c0_i32, %c0_i32_0 : i32, i32
  }
  func.func @transform_2(%arg0: i32) -> (i32, i32) {
    %c0_i32 = arith.constant 0 : i32
    %c0_i32_0 = arith.constant 0 : i32
    %c0_i32_1 = arith.constant 0 : i32
    return %c0_i32, %c0_i32_0 : i32, i32
  }
  func.func @transform_3(%arg0: i32) -> (i32, i32) {
    %c0_i32 = arith.constant 0 : i32
    %c0_i32_0 = arith.constant 0 : i32
    %c0_i32_1 = arith.constant 0 : i32
    return %c0_i32, %c0_i32_0 : i32, i32
  }
  func.func @transform_4(%arg0: i32) -> (i32, i32) {
    %c0_i32 = arith.constant 0 : i32
    %c0_i32_0 = arith.constant 0 : i32
    %c0_i32_1 = arith.constant 0 : i32
    return %c0_i32, %c0_i32_0 : i32, i32
  }
  func.func @transform_5(%arg0: i32) -> (i32, i32) {
    %c0_i32 = arith.constant 0 : i32
    %c0_i32_0 = arith.constant 0 : i32
    return %arg0, %c0_i32 : i32, i32
  }
}

module attributes {stable_mosaic.version = 11 : i64} {
  func.func @kernel(%arg0: i32, %arg1: memref<16x32xf32, #tpu.memory_space<vmem>>, %arg2: memref<32x64xbf16, #tpu.memory_space<vmem>>, %arg3: memref<1x64xf32, #tpu.memory_space<vmem>>, %arg4: memref<16x64xbf16, #tpu.memory_space<vmem>>) attributes {dimension_semantics = [#tpu.dimension_semantics<parallel>], iteration_bounds = array<i64: 1>, scalar_prefetch = 0 : i64, scratch_operands = 0 : i64, tpu.core_type = #tpu.core_type<tc>, window_params = [{transform_indices = @transform_0, window_bounds = array<i64: 16, 32>}, {pipeline_mode = #tpu.pipeline_mode<synchronous>, transform_indices = @transform_1, window_bounds = array<i64: 32, 64>}, {pipeline_mode = #tpu.pipeline_mode<synchronous>, transform_indices = @transform_2, window_bounds = array<i64: 1, 64>}, {transform_indices = @transform_3, window_bounds = array<i64: 16, 64>}]} {
    %c0 = arith.constant 0 : index
    %c0_0 = arith.constant 0 : index
    %0 = vector.load %arg1[%c0, %c0_0] : memref<16x32xf32, #tpu.memory_space<vmem>>, vector<16x32xf32>
    %1 = arith.truncf %0 : vector<16x32xf32> to vector<16x32xbf16>
    %c0_1 = arith.constant 0 : index
    %c0_2 = arith.constant 0 : index
    %2 = vector.load %arg2[%c0_1, %c0_2] : memref<32x64xbf16, #tpu.memory_space<vmem>>, vector<32x64xbf16>
    %cst = arith.constant dense<0.000000e+00> : vector<16x64xf32>
    %3 = tpu.matmul %1, %2, %cst {dimension_numbers = #tpu.dot_dimension_numbers<[1], [0], [0], [1], [0, 0, 1, 1], [], []>} : vector<16x32xbf16>, vector<32x64xbf16>, vector<16x64xf32> -> vector<16x64xf32>
    %c0_3 = arith.constant 0 : index
    %c0_4 = arith.constant 0 : index
    %4 = vector.load %arg3[%c0_3, %c0_4] : memref<1x64xf32, #tpu.memory_space<vmem>>, vector<1x64xf32>
    %5 = vector.broadcast %4 : vector<1x64xf32> to vector<16x64xf32>
    %6 = arith.addf %3, %5 : vector<16x64xf32>
    %7 = arith.truncf %6 : vector<16x64xf32> to vector<16x64xbf16>
    %c0_5 = arith.constant 0 : index
    %c0_6 = arith.constant 0 : index
    %8 = vector.load %arg4[%c0_5, %c0_6] : memref<16x64xbf16, #tpu.memory_space<vmem>>, vector<16x64xbf16>
    tpu.vector_store %arg4[%c0_5, %c0_6], %7 {strides = array<i32>} : memref<16x64xbf16, #tpu.memory_space<vmem>>, vector<16x64xbf16>,
    return
  }
  func.func @transform_0(%arg0: i32) -> (i32, i32) {
    %c0_i32 = arith.constant 0 : i32
    %c0_i32_0 = arith.constant 0 : i32
    return %arg0, %c0_i32 : i32, i32
  }
  func.func @transform_1(%arg0: i32) -> (i32, i32) {
    %c0_i32 = arith.constant 0 : i32
    %c0_i32_0 = arith.constant 0 : i32
    %c0_i32_1 = arith.constant 0 : i32
    return %c0_i32, %c0_i32_0 : i32, i32
  }
  func.func @transform_2(%arg0: i32) -> (i32, i32) {
    %c0_i32 = arith.constant 0 : i32
    %c0_i32_0 = arith.constant 0 : i32
    %c0_i32_1 = arith.constant 0 : i32
    return %c0_i32, %c0_i32_0 : i32, i32
  }
  func.func @transform_3(%arg0: i32) -> (i32, i32) {
    %c0_i32 = arith.constant 0 : i32
    %c0_i32_0 = arith.constant 0 : i32
    return %arg0, %c0_i32 : i32, i32
  }
}

module attributes {stable_mosaic.version = 11 : i64} {
  func.func @kernel(%arg0: i32, %arg1: memref<16x32xbf16, #tpu.memory_space<vmem>>, %arg2: memref<32x32xbf16, #tpu.memory_space<vmem>>, %arg3: memref<1x32xf32, #tpu.memory_space<vmem>>, %arg4: memref<16x32xf32, #tpu.memory_space<vmem>>, %arg5: memref<16x32xf32, #tpu.memory_space<vmem>>) attributes {dimension_semantics = [#tpu.dimension_semantics<parallel>], iteration_bounds = array<i64: 1>, scalar_prefetch = 0 : i64, scratch_operands = 0 : i64, tpu.core_type = #tpu.core_type<tc>, window_params = [{transform_indices = @transform_0, window_bounds = array<i64: 16, 32>}, {pipeline_mode = #tpu.pipeline_mode<synchronous>, transform_indices = @transform_1, window_bounds = array<i64: 32, 32>}, {pipeline_mode = #tpu.pipeline_mode<synchronous>, transform_indices = @transform_2, window_bounds = array<i64: 1, 32>}, {transform_indices = @transform_3, window_bounds = array<i64: 16, 32>}, {transform_indices = @transform_4, window_bounds = array<i64: 16, 32>}]} {
    %c0 = arith.constant 0 : index
    %c0_0 = arith.constant 0 : index
    %0 = vector.load %arg1[%c0, %c0_0] : memref<16x32xbf16, #tpu.memory_space<vmem>>, vector<16x32xbf16>
    %c0_1 = arith.constant 0 : index
    %c0_2 = arith.constant 0 : index
    %1 = vector.load %arg2[%c0_1, %c0_2] : memref<32x32xbf16, #tpu.memory_space<vmem>>, vector<32x32xbf16>
    %cst = arith.constant dense<0.000000e+00> : vector<16x32xf32>
    %2 = tpu.matmul %0, %1, %cst {dimension_numbers = #tpu.dot_dimension_numbers<[1], [0], [0], [1], [0, 0, 1, 1], [], []>} : vector<16x32xbf16>, vector<32x32xbf16>, vector<16x32xf32> -> vector<16x32xf32>
    %c0_3 = arith.constant 0 : index
    %c0_4 = arith.constant 0 : index
    %3 = vector.load %arg3[%c0_3, %c0_4] : memref<1x32xf32, #tpu.memory_space<vmem>>, vector<1x32xf32>
    %4 = vector.broadcast %3 : vector<1x32xf32> to vector<16x32xf32>
    %5 = arith.addf %2, %4 : vector<16x32xf32>
    %c0_5 = arith.constant 0 : index
    %c0_6 = arith.constant 0 : index
    %6 = vector.load %arg4[%c0_5, %c0_6] : memref<16x32xf32, #tpu.memory_space<vmem>>, vector<16x32xf32>
    %7 = arith.addf %5, %6 : vector<16x32xf32>
    %c0_7 = arith.constant 0 : index
    %c0_8 = arith.constant 0 : index
    %8 = vector.load %arg5[%c0_7, %c0_8] : memref<16x32xf32, #tpu.memory_space<vmem>>, vector<16x32xf32>
    tpu.vector_store %arg5[%c0_7, %c0_8], %7 {strides = array<i32>} : memref<16x32xf32, #tpu.memory_space<vmem>>, vector<16x32xf32>,
    return
  }
  func.func @transform_0(%arg0: i32) -> (i32, i32) {
    %c0_i32 = arith.constant 0 : i32
    %c0_i32_0 = arith.constant 0 : i32
    return %arg0, %c0_i32 : i32, i32
  }
  func.func @transform_1(%arg0: i32) -> (i32, i32) {
    %c0_i32 = arith.constant 0 : i32
    %c0_i32_0 = arith.constant 0 : i32
    %c0_i32_1 = arith.constant 0 : i32
    return %c0_i32, %c0_i32_0 : i32, i32
  }
  func.func @transform_2(%arg0: i32) -> (i32, i32) {
    %c0_i32 = arith.constant 0 : i32
    %c0_i32_0 = arith.constant 0 : i32
    %c0_i32_1 = arith.constant 0 : i32
    return %c0_i32, %c0_i32_0 : i32, i32
  }
  func.func @transform_3(%arg0: i32) -> (i32, i32) {
    %c0_i32 = arith.constant 0 : i32
    %c0_i32_0 = arith.constant 0 : i32
    return %arg0, %c0_i32 : i32, i32
  }
  func.func @transform_4(%arg0: i32) -> (i32, i32) {
    %c0_i32 = arith.constant 0 : i32
    %c0_i32_0 = arith.constant 0 : i32
    return %arg0, %c0_i32 : i32, i32
  }
}

module attributes {stable_mosaic.version = 11 : i64} {
  func.func @kernel(%arg0: i32, %arg1: i32, %arg2: memref<1x8x32xbf16, #tpu.memory_space<vmem>>, %arg3: memref<1x8x64xbf16, #tpu.memory_space<vmem>>, %arg4: memref<1x8x32xbf16, #tpu.memory_space<vmem>>) attributes {dimension_semantics = [#tpu.dimension_semantics<parallel>, #tpu.dimension_semantics<parallel>], iteration_bounds = array<i64: 2, 1>, scalar_prefetch = 0 : i64, scratch_operands = 0 : i64, tpu.core_type = #tpu.core_type<tc>, window_params = [{transform_indices = @transform_0, window_bounds = array<i64: 1, 8, 32>}, {transform_indices = @transform_1, window_bounds = array<i64: 1, 8, 64>}, {transform_indices = @transform_2, window_bounds = array<i64: 1, 8, 32>}]} {
    %c0 = arith.constant 0 : index
    %c0_0 = arith.constant 0 : index
    %c0_1 = arith.constant 0 : index
    %0 = vector.load %arg2[%c0, %c0_0, %c0_1] : memref<1x8x32xbf16, #tpu.memory_space<vmem>>, vector<1x8x8xbf16>
    %1 = vector.shape_cast %0 : vector<1x8x8xbf16> to vector<8x8xbf16>
    %c0_2 = arith.constant 0 : index
    %c0_3 = arith.constant 0 : index
    %c0_4 = arith.constant 0 : index
    %2 = vector.load %arg3[%c0_2, %c0_3, %c0_4] : memref<1x8x64xbf16, #tpu.memory_space<vmem>>, vector<1x8x8xbf16>
    %3 = vector.shape_cast %2 : vector<1x8x8xbf16> to vector<8x8xbf16>
    %c0_5 = arith.constant 0 : index
    %c0_6 = arith.constant 0 : index
    %c32 = arith.constant 32 : index
    %4 = vector.load %arg3[%c0_5, %c0_6, %c32] : memref<1x8x64xbf16, #tpu.memory_space<vmem>>, vector<1x8x8xbf16>
    %5 = vector.shape_cast %4 : vector<1x8x8xbf16> to vector<8x8xbf16>
    %cst = arith.constant dense<0.000000e+00> : vector<8x8xf32>
    %6 = tpu.matmul %1, %3, %cst {dimension_numbers = #tpu.dot_dimension_numbers<[1], [1], [0], [0], [0, 0, 1, 0], [], []>} : vector<8x8xbf16>, vector<8x8xbf16>, vector<8x8xf32> -> vector<8x8xf32>
    %cst_7 = arith.constant 0.353553385 : f32
    %7 = vector.broadcast %cst_7 : f32 to vector<8x8xf32>
    %8 = arith.mulf %6, %7 : vector<8x8xf32>
    %cst_8 = arith.constant dense<0xFF800000> : vector<8xf32>
    %9 = vector.multi_reduction <maximumf>, %8, %cst_8 [1] : vector<8x8xf32> to vector<8xf32>
    %10 = vector.shape_cast %9 : vector<8xf32> to vector<8x1xf32>
    %11 = vector.broadcast %10 : vector<8x1xf32> to vector<8x8xf32>
    %12 = arith.subf %8, %11 : vector<8x8xf32>
    %13 = math.exp %12 : vector<8x8xf32>
    %cst_9 = arith.constant dense<0.000000e+00> : vector<8xf32>
    %14 = vector.multi_reduction <add>, %13, %cst_9 [1] : vector<8x8xf32> to vector<8xf32>
    %15 = vector.shape_cast %14 : vector<8xf32> to vector<8x1xf32>
    %16 = tpu.reciprocal %15 {approx = true} : vector<8x1xf32> -> vector<8x1xf32>
    %17 = vector.broadcast %16 : vector<8x1xf32> to vector<8x8xf32>
    %18 = arith.mulf %13, %17 : vector<8x8xf32>
    %19 = arith.truncf %18 : vector<8x8xf32> to vector<8x8xbf16>
    %cst_10 = arith.constant dense<0.000000e+00> : vector<8x8xf32>
    %20 = tpu.matmul %19, %5, %cst_10 {dimension_numbers = #tpu.dot_dimension_numbers<[1], [0], [0], [1], [0, 0, 1, 1], [], []>} : vector<8x8xbf16>, vector<8x8xbf16>, vector<8x8xf32> -> vector<8x8xf32>
    %21 = arith.truncf %20 : vector<8x8xf32> to vector<8x8xbf16>
    %c0_11 = arith.constant 0 : index
    %c0_12 = arith.constant 0 : index
    %c0_13 = arith.constant 0 : index
    %22 = vector.load %arg4[%c0_11, %c0_12, %c0_13] : memref<1x8x32xbf16, #tpu.memory_space<vmem>>, vector<1x8x8xbf16>
    %23 = vector.shape_cast %22 : vector<1x8x8xbf16> to vector<8x8xbf16>
    %24 = vector.shape_cast %21 : vector<8x8xbf16> to vector<1x8x8xbf16>
    tpu.vector_store %arg4[%c0_11, %c0_12, %c0_13], %24 {strides = array<i32>} : memref<1x8x32xbf16, #tpu.memory_space<vmem>>, vector<1x8x8xbf16>,
    %c0_14 = arith.constant 0 : index
    %c0_15 = arith.constant 0 : index
    %c8 = arith.constant 8 : index
    %25 = vector.load %arg2[%c0_14, %c0_15, %c8] : memref<1x8x32xbf16, #tpu.memory_space<vmem>>, vector<1x8x8xbf16>
    %26 = vector.shape_cast %25 : vector<1x8x8xbf16> to vector<8x8xbf16>
    %c0_16 = arith.constant 0 : index
    %c0_17 = arith.constant 0 : index
    %c8_18 = arith.constant 8 : index
    %27 = vector.load %arg3[%c0_16, %c0_17, %c8_18] : memref<1x8x64xbf16, #tpu.memory_space<vmem>>, vector<1x8x8xbf16>
    %28 = vector.shape_cast %27 : vector<1x8x8xbf16> to vector<8x8xbf16>
    %c0_19 = arith.constant 0 : index
    %c0_20 = arith.constant 0 : index
    %c40 = arith.constant 40 : index
    %29 = vector.load %arg3[%c0_19, %c0_20, %c40] : memref<1x8x64xbf16, #tpu.memory_space<vmem>>, vector<1x8x8xbf16>
    %30 = vector.shape_cast %29 : vector<1x8x8xbf16> to vector<8x8xbf16>
    %cst_21 = arith.constant dense<0.000000e+00> : vector<8x8xf32>
    %31 = tpu.matmul %26, %28, %cst_21 {dimension_numbers = #tpu.dot_dimension_numbers<[1], [1], [0], [0], [0, 0, 1, 0], [], []>} : vector<8x8xbf16>, vector<8x8xbf16>, vector<8x8xf32> -> vector<8x8xf32>
    %cst_22 = arith.constant 0.353553385 : f32
    %32 = vector.broadcast %cst_22 : f32 to vector<8x8xf32>
    %33 = arith.mulf %31, %32 : vector<8x8xf32>
    %cst_23 = arith.constant dense<0xFF800000> : vector<8xf32>
    %34 = vector.multi_reduction <maximumf>, %33, %cst_23 [1] : vector<8x8xf32> to vector<8xf32>
    %35 = vector.shape_cast %34 : vector<8xf32> to vector<8x1xf32>
    %36 = vector.broadcast %35 : vector<8x1xf32> to vector<8x8xf32>
    %37 = arith.subf %33, %36 : vector<8x8xf32>
    %38 = math.exp %37 : vector<8x8xf32>
    %cst_24 = arith.constant dense<0.000000e+00> : vector<8xf32>
    %39 = vector.multi_reduction <add>, %38, %cst_24 [1] : vector<8x8xf32> to vector<8xf32>
    %40 = vector.shape_cast %39 : vector<8xf32> to vector<8x1xf32>
    %41 = tpu.reciprocal %40 {approx = true} : vector<8x1xf32> -> vector<8x1xf32>
    %42 = vector.broadcast %41 : vector<8x1xf32> to vector<8x8xf32>
    %43 = arith.mulf %38, %42 : vector<8x8xf32>
    %44 = arith.truncf %43 : vector<8x8xf32> to vector<8x8xbf16>
    %cst_25 = arith.constant dense<0.000000e+00> : vector<8x8xf32>
    %45 = tpu.matmul %44, %30, %cst_25 {dimension_numbers = #tpu.dot_dimension_numbers<[1], [0], [0], [1], [0, 0, 1, 1], [], []>} : vector<8x8xbf16>, vector<8x8xbf16>, vector<8x8xf32> -> vector<8x8xf32>
    %46 = arith.truncf %45 : vector<8x8xf32> to vector<8x8xbf16>
    %c0_26 = arith.constant 0 : index
    %c0_27 = arith.constant 0 : index
    %c8_28 = arith.constant 8 : index
    %47 = vector.load %arg4[%c0_26, %c0_27, %c8_28] : memref<1x8x32xbf16, #tpu.memory_space<vmem>>, vector<1x8x8xbf16>
    %48 = vector.shape_cast %47 : vector<1x8x8xbf16> to vector<8x8xbf16>
    %49 = vector.shape_cast %46 : vector<8x8xbf16> to vector<1x8x8xbf16>
    tpu.vector_store %arg4[%c0_26, %c0_27, %c8_28], %49 {strides = array<i32>} : memref<1x8x32xbf16, #tpu.memory_space<vmem>>, vector<1x8x8xbf16>,
    %c0_29 = arith.constant 0 : index
    %c0_30 = arith.constant 0 : index
    %c16 = arith.constant 16 : index
    %50 = vector.load %arg2[%c0_29, %c0_30, %c16] : memref<1x8x32xbf16, #tpu.memory_space<vmem>>, vector<1x8x8xbf16>
    %51 = vector.shape_cast %50 : vector<1x8x8xbf16> to vector<8x8xbf16>
    %c0_31 = arith.constant 0 : index
    %c0_32 = arith.constant 0 : index
    %c16_33 = arith.constant 16 : index
    %52 = vector.load %arg3[%c0_31, %c0_32, %c16_33] : memref<1x8x64xbf16, #tpu.memory_space<vmem>>, vector<1x8x8xbf16>
    %53 = vector.shape_cast %52 : vector<1x8x8xbf16> to vector<8x8xbf16>
    %c0_34 = arith.constant 0 : index
    %c0_35 = arith.constant 0 : index
    %c48 = arith.constant 48 : index
    %54 = vector.load %arg3[%c0_34, %c0_35, %c48] : memref<1x8x64xbf16, #tpu.memory_space<vmem>>, vector<1x8x8xbf16>
    %55 = vector.shape_cast %54 : vector<1x8x8xbf16> to vector<8x8xbf16>
    %cst_36 = arith.constant dense<0.000000e+00> : vector<8x8xf32>
    %56 = tpu.matmul %51, %53, %cst_36 {dimension_numbers = #tpu.dot_dimension_numbers<[1], [1], [0], [0], [0, 0, 1, 0], [], []>} : vector<8x8xbf16>, vector<8x8xbf16>, vector<8x8xf32> -> vector<8x8xf32>
    %cst_37 = arith.constant 0.353553385 : f32
    %57 = vector.broadcast %cst_37 : f32 to vector<8x8xf32>
    %58 = arith.mulf %56, %57 : vector<8x8xf32>
    %cst_38 = arith.constant dense<0xFF800000> : vector<8xf32>
    %59 = vector.multi_reduction <maximumf>, %58, %cst_38 [1] : vector<8x8xf32> to vector<8xf32>
    %60 = vector.shape_cast %59 : vector<8xf32> to vector<8x1xf32>
    %61 = vector.broadcast %60 : vector<8x1xf32> to vector<8x8xf32>
    %62 = arith.subf %58, %61 : vector<8x8xf32>
    %63 = math.exp %62 : vector<8x8xf32>
    %cst_39 = arith.constant dense<0.000000e+00> : vector<8xf32>
    %64 = vector.multi_reduction <add>, %63, %cst_39 [1] : vector<8x8xf32> to vector<8xf32>
    %65 = vector.shape_cast %64 : vector<8xf32> to vector<8x1xf32>
    %66 = tpu.reciprocal %65 {approx = true} : vector<8x1xf32> -> vector<8x1xf32>
    %67 = vector.broadcast %66 : vector<8x1xf32> to vector<8x8xf32>
    %68 = arith.mulf %63, %67 : vector<8x8xf32>
    %69 = arith.truncf %68 : vector<8x8xf32> to vector<8x8xbf16>
    %cst_40 = arith.constant dense<0.000000e+00> : vector<8x8xf32>
    %70 = tpu.matmul %69, %55, %cst_40 {dimension_numbers = #tpu.dot_dimension_numbers<[1], [0], [0], [1], [0, 0, 1, 1], [], []>} : vector<8x8xbf16>, vector<8x8xbf16>, vector<8x8xf32> -> vector<8x8xf32>
    %71 = arith.truncf %70 : vector<8x8xf32> to vector<8x8xbf16>
    %c0_41 = arith.constant 0 : index
    %c0_42 = arith.constant 0 : index
    %c16_43 = arith.constant 16 : index
    %72 = vector.load %arg4[%c0_41, %c0_42, %c16_43] : memref<1x8x32xbf16, #tpu.memory_space<vmem>>, vector<1x8x8xbf16>
    %73 = vector.shape_cast %72 : vector<1x8x8xbf16> to vector<8x8xbf16>
    %74 = vector.shape_cast %71 : vector<8x8xbf16> to vector<1x8x8xbf16>
    tpu.vector_store %arg4[%c0_41, %c0_42, %c16_43], %74 {strides = array<i32>} : memref<1x8x32xbf16, #tpu.memory_space<vmem>>, vector<1x8x8xbf16>,
    %c0_44 = arith.constant 0 : index
    %c0_45 = arith.constant 0 : index
    %c24 = arith.constant 24 : index
    %75 = vector.load %arg2[%c0_44, %c0_45, %c24] : memref<1x8x32xbf16, #tpu.memory_space<vmem>>, vector<1x8x8xbf16>
    %76 = vector.shape_cast %75 : vector<1x8x8xbf16> to vector<8x8xbf16>
    %c0_46 = arith.constant 0 : index
    %c0_47 = arith.constant 0 : index
    %c24_48 = arith.constant 24 : index
    %77 = vector.load %arg3[%c0_46, %c0_47, %c24_48] : memref<1x8x64xbf16, #tpu.memory_space<vmem>>, vector<1x8x8xbf16>
    %78 = vector.shape_cast %77 : vector<1x8x8xbf16> to vector<8x8xbf16>
    %c0_49 = arith.constant 0 : index
    %c0_50 = arith.constant 0 : index
    %c56 = arith.constant 56 : index
    %79 = vector.load %arg3[%c0_49, %c0_50, %c56] : memref<1x8x64xbf16, #tpu.memory_space<vmem>>, vector<1x8x8xbf16>
    %80 = vector.shape_cast %79 : vector<1x8x8xbf16> to vector<8x8xbf16>
    %cst_51 = arith.constant dense<0.000000e+00> : vector<8x8xf32>
    %81 = tpu.matmul %76, %78, %cst_51 {dimension_numbers = #tpu.dot_dimension_numbers<[1], [1], [0], [0], [0, 0, 1, 0], [], []>} : vector<8x8xbf16>, vector<8x8xbf16>, vector<8x8xf32> -> vector<8x8xf32>
    %cst_52 = arith.constant 0.353553385 : f32
    %82 = vector.broadcast %cst_52 : f32 to vector<8x8xf32>
    %83 = arith.mulf %81, %82 : vector<8x8xf32>
    %cst_53 = arith.constant dense<0xFF800000> : vector<8xf32>
    %84 = vector.multi_reduction <maximumf>, %83, %cst_53 [1] : vector<8x8xf32> to vector<8xf32>
    %85 = vector.shape_cast %84 : vector<8xf32> to vector<8x1xf32>
    %86 = vector.broadcast %85 : vector<8x1xf32> to vector<8x8xf32>
    %87 = arith.subf %83, %86 : vector<8x8xf32>
    %88 = math.exp %87 : vector<8x8xf32>
    %cst_54 = arith.constant dense<0.000000e+00> : vector<8xf32>
    %89 = vector.multi_reduction <add>, %88, %cst_54 [1] : vector<8x8xf32> to vector<8xf32>
    %90 = vector.shape_cast %89 : vector<8xf32> to vector<8x1xf32>
    %91 = tpu.reciprocal %90 {approx = true} : vector<8x1xf32> -> vector<8x1xf32>
    %92 = vector.broadcast %91 : vector<8x1xf32> to vector<8x8xf32>
    %93 = arith.mulf %88, %92 : vector<8x8xf32>
    %94 = arith.truncf %93 : vector<8x8xf32> to vector<8x8xbf16>
    %cst_55 = arith.constant dense<0.000000e+00> : vector<8x8xf32>
    %95 = tpu.matmul %94, %80, %cst_55 {dimension_numbers = #tpu.dot_dimension_numbers<[1], [0], [0], [1], [0, 0, 1, 1], [], []>} : vector<8x8xbf16>, vector<8x8xbf16>, vector<8x8xf32> -> vector<8x8xf32>
    %96 = arith.truncf %95 : vector<8x8xf32> to vector<8x8xbf16>
    %c0_56 = arith.constant 0 : index
    %c0_57 = arith.constant 0 : index
    %c24_58 = arith.constant 24 : index
    %97 = vector.load %arg4[%c0_56, %c0_57, %c24_58] : memref<1x8x32xbf16, #tpu.memory_space<vmem>>, vector<1x8x8xbf16>
    %98 = vector.shape_cast %97 : vector<1x8x8xbf16> to vector<8x8xbf16>
    %99 = vector.shape_cast %96 : vector<8x8xbf16> to vector<1x8x8xbf16>
    tpu.vector_store %arg4[%c0_56, %c0_57, %c24_58], %99 {strides = array<i32>} : memref<1x8x32xbf16, #tpu.memory_space<vmem>>, vector<1x8x8xbf16>,
    return
  }
  func.func @transform_0(%arg0: i32, %arg1: i32) -> (i32, i32, i32) {
    %c0_i32 = arith.constant 0 : i32
    %c0_i32_0 = arith.constant 0 : i32
    return %arg0, %arg1, %c0_i32 : i32, i32, i32
  }
  func.func @transform_1(%arg0: i32, %arg1: i32) -> (i32, i32, i32) {
    %c0_i32 = arith.constant 0 : i32
    %c0_i32_0 = arith.constant 0 : i32
    %c0_i32_1 = arith.constant 0 : i32
    return %arg0, %c0_i32, %c0_i32_0 : i32, i32, i32
  }
  func.func @transform_2(%arg0: i32, %arg1: i32) -> (i32, i32, i32) {
    %c0_i32 = arith.constant 0 : i32
    %c0_i32_0 = arith.constant 0 : i32
    return %arg0, %arg1, %c0_i32 : i32, i32, i32
  }
}

module attributes {stable_mosaic.version = 11 : i64} {
  func.func @kernel(%arg0: i32, %arg1: memref<16x32xf32, #tpu.memory_space<vmem>>, %arg2: memref<1x32xf32, #tpu.memory_space<vmem>>, %arg3: memref<1x32xf32, #tpu.memory_space<vmem>>, %arg4: memref<32x128xbf16, #tpu.memory_space<vmem>>, %arg5: memref<1x128xf32, #tpu.memory_space<vmem>>, %arg6: memref<16x128xbf16, #tpu.memory_space<vmem>>) attributes {dimension_semantics = [#tpu.dimension_semantics<parallel>], iteration_bounds = array<i64: 1>, scalar_prefetch = 0 : i64, scratch_operands = 0 : i64, tpu.core_type = #tpu.core_type<tc>, window_params = [{transform_indices = @transform_0, window_bounds = array<i64: 16, 32>}, {pipeline_mode = #tpu.pipeline_mode<synchronous>, transform_indices = @transform_1, window_bounds = array<i64: 1, 32>}, {pipeline_mode = #tpu.pipeline_mode<synchronous>, transform_indices = @transform_2, window_bounds = array<i64: 1, 32>}, {pipeline_mode = #tpu.pipeline_mode<synchronous>, transform_indices = @transform_3, window_bounds = array<i64: 32, 128>}, {pipeline_mode = #tpu.pipeline_mode<synchronous>, transform_indices = @transform_4, window_bounds = array<i64: 1, 128>}, {transform_indices = @transform_5, window_bounds = array<i64: 16, 128>}]} {
    %c0 = arith.constant 0 : index
    %c0_0 = arith.constant 0 : index
    %0 = vector.load %arg1[%c0, %c0_0] : memref<16x32xf32, #tpu.memory_space<vmem>>, vector<16x32xf32>
    %cst = arith.constant dense<0.000000e+00> : vector<16xf32>
    %1 = vector.multi_reduction <add>, %0, %cst [1] : vector<16x32xf32> to vector<16xf32>
    %2 = vector.shape_cast %1 : vector<16xf32> to vector<16x1xf32>
    %cst_1 = arith.constant 3.200000e+01 : f32
    %3 = vector.broadcast %cst_1 : f32 to vector<16x1xf32>
    %4 = arith.divf %2, %3 : vector<16x1xf32>
    %5 = vector.broadcast %4 : vector<16x1xf32> to vector<16x32xf32>
    %6 = arith.subf %0, %5 : vector<16x32xf32>
    %7 = arith.mulf %6, %6 : vector<16x32xf32>
    %cst_2 = arith.constant dense<0.000000e+00> : vector<16xf32>
    %8 = vector.multi_reduction <add>, %7, %cst_2 [1] : vector<16x32xf32> to vector<16xf32>
    %9 = vector.shape_cast %8 : vector<16xf32> to vector<16x1xf32>
    %cst_3 = arith.constant 3.200000e+01 : f32
    %10 = vector.broadcast %cst_3 : f32 to vector<16x1xf32>
    %11 = arith.divf %9, %10 : vector<16x1xf32>
    %12 = vector.broadcast %4 : vector<16x1xf32> to vector<16x32xf32>
    %13 = arith.subf %0, %12 : vector<16x32xf32>
    %cst_4 = arith.constant 9.99999974E-6 : f32
    %14 = vector.broadcast %cst_4 : f32 to vector<16x1xf32>
    %15 = arith.addf %11, %14 : vector<16x1xf32>
    %16 = math.rsqrt %15 : vector<16x1xf32>
    %17 = vector.broadcast %16 : vector<16x1xf32> to vector<16x32xf32>
    %18 = arith.mulf %13, %17 : vector<16x32xf32>
    %c0_5 = arith.constant 0 : index
    %c0_6 = arith.constant 0 : index
    %19 = vector.load %arg2[%c0_5, %c0_6] : memref<1x32xf32, #tpu.memory_space<vmem>>, vector<1x32xf32>
    %20 = vector.broadcast %19 : vector<1x32xf32> to vector<16x32xf32>
    %21 = arith.mulf %18, %20 : vector<16x32xf32>
    %c0_7 = arith.constant 0 : index
    %c0_8 = arith.constant 0 : index
    %22 = vector.load %arg3[%c0_7, %c0_8] : memref<1x32xf32, #tpu.memory_space<vmem>>, vector<1x32xf32>
    %23 = vector.broadcast %22 : vector<1x32xf32> to vector<16x32xf32>
    %24 = arith.addf %21, %23 : vector<16x32xf32>
    %25 = arith.truncf %24 : vector<16x32xf32> to vector<16x32xbf16>
    %c0_9 = arith.constant 0 : index
    %c0_10 = arith.constant 0 : index
    %26 = vector.load %arg4[%c0_9, %c0_10] : memref<32x128xbf16, #tpu.memory_space<vmem>>, vector<32x128xbf16>
    %cst_11 = arith.constant dense<0.000000e+00> : vector<16x128xf32>
    %27 = tpu.matmul %25, %26, %cst_11 {dimension_numbers = #tpu.dot_dimension_numbers<[1], [0], [0], [1], [0, 0, 1, 1], [], []>} : vector<16x32xbf16>, vector<32x128xbf16>, vector<16x128xf32> -> vector<16x128xf32>
    %c0_12 = arith.constant 0 : index
    %c0_13 = arith.constant 0 : index
    %28 = vector.load %arg5[%c0_12, %c0_13] : memref<1x128xf32, #tpu.memory_space<vmem>>, vector<1x128xf32>
    %29 = vector.broadcast %28 : vector<1x128xf32> to vector<16x128xf32>
    %30 = arith.addf %27, %29 : vector<16x128xf32>
    %cst_14 = arith.constant 5.000000e-01 : f32
    %31 = vector.broadcast %cst_14 : f32 to vector<16x128xf32>
    %32 = arith.mulf %31, %30 : vector<16x128xf32>
    %cst_15 = arith.constant 4.471500e-02 : f32
    %33 = vector.broadcast %cst_15 : f32 to vector<16x128xf32>
    %34 = arith.mulf %33, %30 : vector<16x128xf32>
    %35 = arith.mulf %34, %30 : vector<16x128xf32>
    %36 = arith.mulf %35, %30 : vector<16x128xf32>
    %37 = arith.addf %30, %36 : vector<16x128xf32>
    %cst_16 = arith.constant 0.797884583 : f32
    %38 = vector.broadcast %cst_16 : f32 to vector<16x128xf32>
    %39 = arith.mulf %38, %37 : vector<16x128xf32>
    %40 = math.tanh %39 : vector<16x128xf32>
    %cst_17 = arith.constant 1.000000e+00 : f32
    %41 = vector.broadcast %cst_17 : f32 to vector<16x128xf32>
    %42 = arith.addf %41, %40 : vector<16x128xf32>
    %43 = arith.mulf %32, %42 : vector<16x128xf32>
    %44 = arith.truncf %43 : vector<16x128xf32> to vector<16x128xbf16>
    %c0_18 = arith.constant 0 : index
    %c0_19 = arith.constant 0 : index
    %45 = vector.load %arg6[%c0_18, %c0_19] : memref<16x128xbf16, #tpu.memory_space<vmem>>, vector<16x128xbf16>
    tpu.vector_store %arg6[%c0_18, %c0_19], %44 {strides = array<i32>} : memref<16x128xbf16, #tpu.memory_space<vmem>>, vector<16x128xbf16>,
    return
  }
  func.func @transform_0(%arg0: i32) -> (i32, i32) {
    %c0_i32 = arith.constant 0 : i32
    %c0_i32_0 = arith.constant 0 : i32
    return %arg0, %c0_i32 : i32, i32
  }
  func.func @transform_1(%arg0: i32) -> (i32, i32) {
    %c0_i32 = arith.constant 0 : i32
    %c0_i32_0 = arith.constant 0 : i32
    %c0_i32_1 = arith.constant 0 : i32
    return %c0_i32, %c0_i32_0 : i32, i32
  }
  func.func @transform_2(%arg0: i32) -> (i32, i32) {
    %c0_i32 = arith.constant 0 : i32
    %c0_i32_0 = arith.constant 0 : i32
    %c0_i32_1 = arith.constant 0 : i32
    return %c0_i32, %c0_i32_0 : i32, i32
  }
  func.func @transform_3(%arg0: i32) -> (i32, i32) {
    %c0_i32 = arith.constant 0 : i32
    %c0_i32_0 = arith.constant 0 : i32
    %c0_i32_1 = arith.constant 0 : i32
    return %c0_i32, %c0_i32_0 : i32, i32
  }
  func.func @transform_4(%arg0: i32) -> (i32, i32) {
    %c0_i32 = arith.constant 0 : i32
    %c0_i32_0 = arith.constant 0 : i32
    %c0_i32_1 = arith.constant 0 : i32
    return %c0_i32, %c0_i32_0 : i32, i32
  }
  func.func @transform_5(%arg0: i32) -> (i32, i32) {
    %c0_i32 = arith.constant 0 : i32
    %c0_i32_0 = arith.constant 0 : i32
    return %arg0, %c0_i32 : i32, i32
  }
}

module attributes {stable_mosaic.version = 11 : i64} {
  func.func @kernel(%arg0: i32, %arg1: memref<16x128xbf16, #tpu.memory_space<vmem>>, %arg2: memref<128x32xbf16, #tpu.memory_space<vmem>>, %arg3: memref<1x32xf32, #tpu.memory_space<vmem>>, %arg4: memref<16x32xf32, #tpu.memory_space<vmem>>, %arg5: memref<16x32xf32, #tpu.memory_space<vmem>>) attributes {dimension_semantics = [#tpu.dimension_semantics<parallel>], iteration_bounds = array<i64: 1>, scalar_prefetch = 0 : i64, scratch_operands = 0 : i64, tpu.core_type = #tpu.core_type<tc>, window_params = [{transform_indices = @transform_0, window_bounds = array<i64: 16, 128>}, {pipeline_mode = #tpu.pipeline_mode<synchronous>, transform_indices = @transform_1, window_bounds = array<i64: 128, 32>}, {pipeline_mode = #tpu.pipeline_mode<synchronous>, transform_indices = @transform_2, window_bounds = array<i64: 1, 32>}, {transform_indices = @transform_3, window_bounds = array<i64: 16, 32>}, {transform_indices = @transform_4, window_bounds = array<i64: 16, 32>}]} {
    %c0 = arith.constant 0 : index
    %c0_0 = arith.constant 0 : index
    %0 = vector.load %arg1[%c0, %c0_0] : memref<16x128xbf16, #tpu.memory_space<vmem>>, vector<16x128xbf16>
    %c0_1 = arith.constant 0 : index
    %c0_2 = arith.constant 0 : index
    %1 = vector.load %arg2[%c0_1, %c0_2] : memref<128x32xbf16, #tpu.memory_space<vmem>>, vector<128x32xbf16>
    %cst = arith.constant dense<0.000000e+00> : vector<16x32xf32>
    %2 = tpu.matmul %0, %1, %cst {dimension_numbers = #tpu.dot_dimension_numbers<[1], [0], [0], [1], [0, 0, 1, 1], [], []>} : vector<16x128xbf16>, vector<128x32xbf16>, vector<16x32xf32> -> vector<16x32xf32>
    %c0_3 = arith.constant 0 : index
    %c0_4 = arith.constant 0 : index
    %3 = vector.load %arg3[%c0_3, %c0_4] : memref<1x32xf32, #tpu.memory_space<vmem>>, vector<1x32xf32>
    %4 = vector.broadcast %3 : vector<1x32xf32> to vector<16x32xf32>
    %5 = arith.addf %2, %4 : vector<16x32xf32>
    %c0_5 = arith.constant 0 : index
    %c0_6 = arith.constant 0 : index
    %6 = vector.load %arg4[%c0_5, %c0_6] : memref<16x32xf32, #tpu.memory_space<vmem>>, vector<16x32xf32>
    %7 = arith.addf %5, %6 : vector<16x32xf32>
    %c0_7 = arith.constant 0 : index
    %c0_8 = arith.constant 0 : index
    %8 = vector.load %arg5[%c0_7, %c0_8] : memref<16x32xf32, #tpu.memory_space<vmem>>, vector<16x32xf32>
    tpu.vector_store %arg5[%c0_7, %c0_8], %7 {strides = array<i32>} : memref<16x32xf32, #tpu.memory_space<vmem>>, vector<16x32xf32>,
    return
  }
  func.func @transform_0(%arg0: i32) -> (i32, i32) {
    %c0_i32 = arith.constant 0 : i32
    %c0_i32_0 = arith.constant 0 : i32
    return %arg0, %c0_i32 : i32, i32
  }
  func.func @transform_1(%arg0: i32) -> (i32, i32) {
    %c0_i32 = arith.constant 0 : i32
    %c0_i32_0 = arith.constant 0 : i32
    %c0_i32_1 = arith.constant 0 : i32
    return %c0_i32, %c0_i32_0 : i32, i32
  }
  func.func @transform_2(%arg0: i32) -> (i32, i32) {
    %c0_i32 = arith.constant 0 : i32
    %c0_i32_0 = arith.constant 0 : i32
    %c0_i32_1 = arith.constant 0 : i32
    return %c0_i32, %c0_i32_0 : i32, i32
  }
  func.func @transform_3(%arg0: i32) -> (i32, i32) {
    %c0_i32 = arith.constant 0 : i32
    %c0_i32_0 = arith.constant 0 : i32
    return %arg0, %c0_i32 : i32, i32
  }
  func.func @transform_4(%arg0: i32) -> (i32, i32) {
    %c0_i32 = arith.constant 0 : i32
    %c0_i32_0 = arith.constant 0 : i32
    return %arg0, %c0_i32 : i32, i32
  }
}

module attributes {stable_mosaic.version = 11 : i64} {
  func.func @kernel(%arg0: i32, %arg1: memref<16x32xf32, #tpu.memory_space<vmem>>, %arg2: memref<32x64xbf16, #tpu.memory_space<vmem>>, %arg3: memref<1x64xf32, #tpu.memory_space<vmem>>, %arg4: memref<16x64xbf16, #tpu.memory_space<vmem>>) attributes {dimension_semantics = [#tpu.dimension_semantics<parallel>], iteration_bounds = array<i64: 1>, scalar_prefetch = 0 : i64, scratch_operands = 0 : i64, tpu.core_type = #tpu.core_type<tc>, window_params = [{transform_indices = @transform_0, window_bounds = array<i64: 16, 32>}, {pipeline_mode = #tpu.pipeline_mode<synchronous>, transform_indices = @transform_1, window_bounds = array<i64: 32, 64>}, {pipeline_mode = #tpu.pipeline_mode<synchronous>, transform_indices = @transform_2, window_bounds = array<i64: 1, 64>}, {transform_indices = @transform_3, window_bounds = array<i64: 16, 64>}]} {
    %c0 = arith.constant 0 : index
    %c0_0 = arith.constant 0 : index
    %0 = vector.load %arg1[%c0, %c0_0] : memref<16x32xf32, #tpu.memory_space<vmem>>, vector<16x32xf32>
    %1 = arith.truncf %0 : vector<16x32xf32> to vector<16x32xbf16>
    %c0_1 = arith.constant 0 : index
    %c0_2 = arith.constant 0 : index
    %2 = vector.load %arg2[%c0_1, %c0_2] : memref<32x64xbf16, #tpu.memory_space<vmem>>, vector<32x64xbf16>
    %cst = arith.constant dense<0.000000e+00> : vector<16x64xf32>
    %3 = tpu.matmul %1, %2, %cst {dimension_numbers = #tpu.dot_dimension_numbers<[1], [0], [0], [1], [0, 0, 1, 1], [], []>} : vector<16x32xbf16>, vector<32x64xbf16>, vector<16x64xf32> -> vector<16x64xf32>
    %c0_3 = arith.constant 0 : index
    %c0_4 = arith.constant 0 : index
    %4 = vector.load %arg3[%c0_3, %c0_4] : memref<1x64xf32, #tpu.memory_space<vmem>>, vector<1x64xf32>
    %5 = vector.broadcast %4 : vector<1x64xf32> to vector<16x64xf32>
    %6 = arith.addf %3, %5 : vector<16x64xf32>
    %7 = arith.truncf %6 : vector<16x64xf32> to vector<16x64xbf16>
    %c0_5 = arith.constant 0 : index
    %c0_6 = arith.constant 0 : index
    %8 = vector.load %arg4[%c0_5, %c0_6] : memref<16x64xbf16, #tpu.memory_space<vmem>>, vector<16x64xbf16>
    tpu.vector_store %arg4[%c0_5, %c0_6], %7 {strides = array<i32>} : memref<16x64xbf16, #tpu.memory_space<vmem>>, vector<16x64xbf16>,
    return
  }
  func.func @transform_0(%arg0: i32) -> (i32, i32) {
    %c0_i32 = arith.constant 0 : i32
    %c0_i32_0 = arith.constant 0 : i32
    return %arg0, %c0_i32 : i32, i32
  }
  func.func @transform_1(%arg0: i32) -> (i32, i32) {
    %c0_i32 = arith.constant 0 : i32
    %c0_i32_0 = arith.constant 0 : i32
    %c0_i32_1 = arith.constant 0 : i32
    return %c0_i32, %c0_i32_0 : i32, i32
  }
  func.func @transform_2(%arg0: i32) -> (i32, i32) {
    %c0_i32 = arith.constant 0 : i32
    %c0_i32_0 = arith.constant 0 : i32
    %c0_i32_1 = arith.constant 0 : i32
    return %c0_i32, %c0_i32_0 : i32, i32
  }
  func.func @transform_3(%arg0: i32) -> (i32, i32) {
    %c0_i32 = arith.constant 0 : i32
    %c0_i32_0 = arith.constant 0 : i32
    return %arg0, %c0_i32 : i32, i32
  }
}

module attributes {stable_mosaic.version = 11 : i64} {
  func.func @kernel(%arg0: i32, %arg1: memref<16x32xf32, #tpu.memory_space<vmem>>, %arg2: memref<1x32xf32, #tpu.memory_space<vmem>>, %arg3: memref<1x32xf32, #tpu.memory_space<vmem>>, %arg4: memref<32x32xbf16, #tpu.memory_space<vmem>>, %arg5: memref<1x32xf32, #tpu.memory_space<vmem>>, %arg6: memref<16x32xbf16, #tpu.memory_space<vmem>>) attributes {dimension_semantics = [#tpu.dimension_semantics<parallel>], iteration_bounds = array<i64: 1>, scalar_prefetch = 0 : i64, scratch_operands = 0 : i64, tpu.core_type = #tpu.core_type<tc>, window_params = [{transform_indices = @transform_0, window_bounds = array<i64: 16, 32>}, {pipeline_mode = #tpu.pipeline_mode<synchronous>, transform_indices = @transform_1, window_bounds = array<i64: 1, 32>}, {pipeline_mode = #tpu.pipeline_mode<synchronous>, transform_indices = @transform_2, window_bounds = array<i64: 1, 32>}, {pipeline_mode = #tpu.pipeline_mode<synchronous>, transform_indices = @transform_3, window_bounds = array<i64: 32, 32>}, {pipeline_mode = #tpu.pipeline_mode<synchronous>, transform_indices = @transform_4, window_bounds = array<i64: 1, 32>}, {transform_indices = @transform_5, window_bounds = array<i64: 16, 32>}]} {
    %c0 = arith.constant 0 : index
    %c0_0 = arith.constant 0 : index
    %0 = vector.load %arg1[%c0, %c0_0] : memref<16x32xf32, #tpu.memory_space<vmem>>, vector<16x32xf32>
    %cst = arith.constant dense<0.000000e+00> : vector<16xf32>
    %1 = vector.multi_reduction <add>, %0, %cst [1] : vector<16x32xf32> to vector<16xf32>
    %2 = vector.shape_cast %1 : vector<16xf32> to vector<16x1xf32>
    %cst_1 = arith.constant 3.200000e+01 : f32
    %3 = vector.broadcast %cst_1 : f32 to vector<16x1xf32>
    %4 = arith.divf %2, %3 : vector<16x1xf32>
    %5 = vector.broadcast %4 : vector<16x1xf32> to vector<16x32xf32>
    %6 = arith.subf %0, %5 : vector<16x32xf32>
    %7 = arith.mulf %6, %6 : vector<16x32xf32>
    %cst_2 = arith.constant dense<0.000000e+00> : vector<16xf32>
    %8 = vector.multi_reduction <add>, %7, %cst_2 [1] : vector<16x32xf32> to vector<16xf32>
    %9 = vector.shape_cast %8 : vector<16xf32> to vector<16x1xf32>
    %cst_3 = arith.constant 3.200000e+01 : f32
    %10 = vector.broadcast %cst_3 : f32 to vector<16x1xf32>
    %11 = arith.divf %9, %10 : vector<16x1xf32>
    %12 = vector.broadcast %4 : vector<16x1xf32> to vector<16x32xf32>
    %13 = arith.subf %0, %12 : vector<16x32xf32>
    %cst_4 = arith.constant 9.99999974E-6 : f32
    %14 = vector.broadcast %cst_4 : f32 to vector<16x1xf32>
    %15 = arith.addf %11, %14 : vector<16x1xf32>
    %16 = math.rsqrt %15 : vector<16x1xf32>
    %17 = vector.broadcast %16 : vector<16x1xf32> to vector<16x32xf32>
    %18 = arith.mulf %13, %17 : vector<16x32xf32>
    %c0_5 = arith.constant 0 : index
    %c0_6 = arith.constant 0 : index
    %19 = vector.load %arg2[%c0_5, %c0_6] : memref<1x32xf32, #tpu.memory_space<vmem>>, vector<1x32xf32>
    %20 = vector.broadcast %19 : vector<1x32xf32> to vector<16x32xf32>
    %21 = arith.mulf %18, %20 : vector<16x32xf32>
    %c0_7 = arith.constant 0 : index
    %c0_8 = arith.constant 0 : index
    %22 = vector.load %arg3[%c0_7, %c0_8] : memref<1x32xf32, #tpu.memory_space<vmem>>, vector<1x32xf32>
    %23 = vector.broadcast %22 : vector<1x32xf32> to vector<16x32xf32>
    %24 = arith.addf %21, %23 : vector<16x32xf32>
    %25 = arith.truncf %24 : vector<16x32xf32> to vector<16x32xbf16>
    %c0_9 = arith.constant 0 : index
    %c0_10 = arith.constant 0 : index
    %26 = vector.load %arg4[%c0_9, %c0_10] : memref<32x32xbf16, #tpu.memory_space<vmem>>, vector<32x32xbf16>
    %cst_11 = arith.constant dense<0.000000e+00> : vector<16x32xf32>
    %27 = tpu.matmul %25, %26, %cst_11 {dimension_numbers = #tpu.dot_dimension_numbers<[1], [0], [0], [1], [0, 0, 1, 1], [], []>} : vector<16x32xbf16>, vector<32x32xbf16>, vector<16x32xf32> -> vector<16x32xf32>
    %c0_12 = arith.constant 0 : index
    %c0_13 = arith.constant 0 : index
    %28 = vector.load %arg5[%c0_12, %c0_13] : memref<1x32xf32, #tpu.memory_space<vmem>>, vector<1x32xf32>
    %29 = vector.broadcast %28 : vector<1x32xf32> to vector<16x32xf32>
    %30 = arith.addf %27, %29 : vector<16x32xf32>
    %31 = arith.truncf %30 : vector<16x32xf32> to vector<16x32xbf16>
    %c0_14 = arith.constant 0 : index
    %c0_15 = arith.constant 0 : index
    %32 = vector.load %arg6[%c0_14, %c0_15] : memref<16x32xbf16, #tpu.memory_space<vmem>>, vector<16x32xbf16>
    tpu.vector_store %arg6[%c0_14, %c0_15], %31 {strides = array<i32>} : memref<16x32xbf16, #tpu.memory_space<vmem>>, vector<16x32xbf16>,
    return
  }
  func.func @transform_0(%arg0: i32) -> (i32, i32) {
    %c0_i32 = arith.constant 0 : i32
    %c0_i32_0 = arith.constant 0 : i32
    return %arg0, %c0_i32 : i32, i32
  }
  func.func @transform_1(%arg0: i32) -> (i32, i32) {
    %c0_i32 = arith.constant 0 : i32
    %c0_i32_0 = arith.constant 0 : i32
    %c0_i32_1 = arith.constant 0 : i32
    return %c0_i32, %c0_i32_0 : i32, i32
  }
  func.func @transform_2(%arg0: i32) -> (i32, i32) {
    %c0_i32 = arith.constant 0 : i32
    %c0_i32_0 = arith.constant 0 : i32
    %c0_i32_1 = arith.constant 0 : i32
    return %c0_i32, %c0_i32_0 : i32, i32
  }
  func.func @transform_3(%arg0: i32) -> (i32, i32) {
    %c0_i32 = arith.constant 0 : i32
    %c0_i32_0 = arith.constant 0 : i32
    %c0_i32_1 = arith.constant 0 : i32
    return %c0_i32, %c0_i32_0 : i32, i32
  }
  func.func @transform_4(%arg0: i32) -> (i32, i32) {
    %c0_i32 = arith.constant 0 : i32
    %c0_i32_0 = arith.constant 0 : i32
    %c0_i32_1 = arith.constant 0 : i32
    return %c0_i32, %c0_i32_0 : i32, i32
  }
  func.func @transform_5(%arg0: i32) -> (i32, i32) {
    %c0_i32 = arith.constant 0 : i32
    %c0_i32_0 = arith.constant 0 : i32
    return %arg0, %c0_i32 : i32, i32
  }
}

module attributes {stable_mosaic.version = 11 : i64} {
  func.func @kernel(%arg0: i32, %arg1: memref<16x32xbf16, #tpu.memory_space<vmem>>, %arg2: memref<32x32xbf16, #tpu.memory_space<vmem>>, %arg3: memref<1x32xf32, #tpu.memory_space<vmem>>, %arg4: memref<16x32xf32, #tpu.memory_space<vmem>>, %arg5: memref<16x32xf32, #tpu.memory_space<vmem>>) attributes {dimension_semantics = [#tpu.dimension_semantics<parallel>], iteration_bounds = array<i64: 1>, scalar_prefetch = 0 : i64, scratch_operands = 0 : i64, tpu.core_type = #tpu.core_type<tc>, window_params = [{transform_indices = @transform_0, window_bounds = array<i64: 16, 32>}, {pipeline_mode = #tpu.pipeline_mode<synchronous>, transform_indices = @transform_1, window_bounds = array<i64: 32, 32>}, {pipeline_mode = #tpu.pipeline_mode<synchronous>, transform_indices = @transform_2, window_bounds = array<i64: 1, 32>}, {transform_indices = @transform_3, window_bounds = array<i64: 16, 32>}, {transform_indices = @transform_4, window_bounds = array<i64: 16, 32>}]} {
    %c0 = arith.constant 0 : index
    %c0_0 = arith.constant 0 : index
    %0 = vector.load %arg1[%c0, %c0_0] : memref<16x32xbf16, #tpu.memory_space<vmem>>, vector<16x32xbf16>
    %c0_1 = arith.constant 0 : index
    %c0_2 = arith.constant 0 : index
    %1 = vector.load %arg2[%c0_1, %c0_2] : memref<32x32xbf16, #tpu.memory_space<vmem>>, vector<32x32xbf16>
    %cst = arith.constant dense<0.000000e+00> : vector<16x32xf32>
    %2 = tpu.matmul %0, %1, %cst {dimension_numbers = #tpu.dot_dimension_numbers<[1], [0], [0], [1], [0, 0, 1, 1], [], []>} : vector<16x32xbf16>, vector<32x32xbf16>, vector<16x32xf32> -> vector<16x32xf32>
    %c0_3 = arith.constant 0 : index
    %c0_4 = arith.constant 0 : index
    %3 = vector.load %arg3[%c0_3, %c0_4] : memref<1x32xf32, #tpu.memory_space<vmem>>, vector<1x32xf32>
    %4 = vector.broadcast %3 : vector<1x32xf32> to vector<16x32xf32>
    %5 = arith.addf %2, %4 : vector<16x32xf32>
    %c0_5 = arith.constant 0 : index
    %c0_6 = arith.constant 0 : index
    %6 = vector.load %arg4[%c0_5, %c0_6] : memref<16x32xf32, #tpu.memory_space<vmem>>, vector<16x32xf32>
    %7 = arith.addf %5, %6 : vector<16x32xf32>
    %c0_7 = arith.constant 0 : index
    %c0_8 = arith.constant 0 : index
    %8 = vector.load %arg5[%c0_7, %c0_8] : memref<16x32xf32, #tpu.memory_space<vmem>>, vector<16x32xf32>
    tpu.vector_store %arg5[%c0_7, %c0_8], %7 {strides = array<i32>} : memref<16x32xf32, #tpu.memory_space<vmem>>, vector<16x32xf32>,
    return
  }
  func.func @transform_0(%arg0: i32) -> (i32, i32) {
    %c0_i32 = arith.constant 0 : i32
    %c0_i32_0 = arith.constant 0 : i32
    return %arg0, %c0_i32 : i32, i32
  }
  func.func @transform_1(%arg0: i32) -> (i32, i32) {
    %c0_i32 = arith.constant 0 : i32
    %c0_i32_0 = arith.constant 0 : i32
    %c0_i32_1 = arith.constant 0 : i32
    return %c0_i32, %c0_i32_0 : i32, i32
  }
  func.func @transform_2(%arg0: i32) -> (i32, i32) {
    %c0_i32 = arith.constant 0 : i32
    %c0_i32_0 = arith.constant 0 : i32
    %c0_i32_1 = arith.constant 0 : i32
    return %c0_i32, %c0_i32_0 : i32, i32
  }
  func.func @transform_3(%arg0: i32) -> (i32, i32) {
    %c0_i32 = arith.constant 0 : i32
    %c0_i32_0 = arith.constant 0 : i32
    return %arg0, %c0_i32 : i32, i32
  }
  func.func @transform_4(%arg0: i32) -> (i32, i32) {
    %c0_i32 = arith.constant 0 : i32
    %c0_i32_0 = arith.constant 0 : i32
    return %arg0, %c0_i32 : i32, i32
  }
}

module attributes {stable_mosaic.version = 11 : i64} {
  func.func @_ln_kernel(%arg0: i32, %arg1: memref<16x32xf32, #tpu.memory_space<vmem>>, %arg2: memref<1x32xf32, #tpu.memory_space<vmem>>, %arg3: memref<1x32xf32, #tpu.memory_space<vmem>>, %arg4: memref<16x32xf32, #tpu.memory_space<vmem>>) attributes {dimension_semantics = [#tpu.dimension_semantics<parallel>], iteration_bounds = array<i64: 1>, scalar_prefetch = 0 : i64, scratch_operands = 0 : i64, tpu.core_type = #tpu.core_type<tc>, window_params = [{transform_indices = @transform_0, window_bounds = array<i64: 16, 32>}, {pipeline_mode = #tpu.pipeline_mode<synchronous>, transform_indices = @transform_1, window_bounds = array<i64: 1, 32>}, {pipeline_mode = #tpu.pipeline_mode<synchronous>, transform_indices = @transform_2, window_bounds = array<i64: 1, 32>}, {transform_indices = @transform_3, window_bounds = array<i64: 16, 32>}]} {
    %c0 = arith.constant 0 : index
    %c0_0 = arith.constant 0 : index
    %0 = vector.load %arg1[%c0, %c0_0] : memref<16x32xf32, #tpu.memory_space<vmem>>, vector<16x32xf32>
    %cst = arith.constant dense<0.000000e+00> : vector<16xf32>
    %1 = vector.multi_reduction <add>, %0, %cst [1] : vector<16x32xf32> to vector<16xf32>
    %2 = vector.shape_cast %1 : vector<16xf32> to vector<16x1xf32>
    %cst_1 = arith.constant 3.200000e+01 : f32
    %3 = vector.broadcast %cst_1 : f32 to vector<16x1xf32>
    %4 = arith.divf %2, %3 : vector<16x1xf32>
    %5 = vector.broadcast %4 : vector<16x1xf32> to vector<16x32xf32>
    %6 = arith.subf %0, %5 : vector<16x32xf32>
    %7 = arith.mulf %6, %6 : vector<16x32xf32>
    %cst_2 = arith.constant dense<0.000000e+00> : vector<16xf32>
    %8 = vector.multi_reduction <add>, %7, %cst_2 [1] : vector<16x32xf32> to vector<16xf32>
    %9 = vector.shape_cast %8 : vector<16xf32> to vector<16x1xf32>
    %cst_3 = arith.constant 3.200000e+01 : f32
    %10 = vector.broadcast %cst_3 : f32 to vector<16x1xf32>
    %11 = arith.divf %9, %10 : vector<16x1xf32>
    %12 = vector.broadcast %4 : vector<16x1xf32> to vector<16x32xf32>
    %13 = arith.subf %0, %12 : vector<16x32xf32>
    %cst_4 = arith.constant 9.99999974E-6 : f32
    %14 = vector.broadcast %cst_4 : f32 to vector<16x1xf32>
    %15 = arith.addf %11, %14 : vector<16x1xf32>
    %16 = math.rsqrt %15 : vector<16x1xf32>
    %17 = vector.broadcast %16 : vector<16x1xf32> to vector<16x32xf32>
    %18 = arith.mulf %13, %17 : vector<16x32xf32>
    %c0_5 = arith.constant 0 : index
    %c0_6 = arith.constant 0 : index
    %19 = vector.load %arg2[%c0_5, %c0_6] : memref<1x32xf32, #tpu.memory_space<vmem>>, vector<1x32xf32>
    %20 = vector.broadcast %19 : vector<1x32xf32> to vector<16x32xf32>
    %21 = arith.mulf %18, %20 : vector<16x32xf32>
    %c0_7 = arith.constant 0 : index
    %c0_8 = arith.constant 0 : index
    %22 = vector.load %arg3[%c0_7, %c0_8] : memref<1x32xf32, #tpu.memory_space<vmem>>, vector<1x32xf32>
    %23 = vector.broadcast %22 : vector<1x32xf32> to vector<16x32xf32>
    %24 = arith.addf %21, %23 : vector<16x32xf32>
    %c0_9 = arith.constant 0 : index
    %c0_10 = arith.constant 0 : index
    %25 = vector.load %arg4[%c0_9, %c0_10] : memref<16x32xf32, #tpu.memory_space<vmem>>, vector<16x32xf32>
    tpu.vector_store %arg4[%c0_9, %c0_10], %24 {strides = array<i32>} : memref<16x32xf32, #tpu.memory_space<vmem>>, vector<16x32xf32>,
    return
  }
  func.func @transform_0(%arg0: i32) -> (i32, i32) {
    %c0_i32 = arith.constant 0 : i32
    %c0_i32_0 = arith.constant 0 : i32
    return %arg0, %c0_i32 : i32, i32
  }
  func.func @transform_1(%arg0: i32) -> (i32, i32) {
    %c0_i32 = arith.constant 0 : i32
    %c0_i32_0 = arith.constant 0 : i32
    %c0_i32_1 = arith.constant 0 : i32
    return %c0_i32, %c0_i32_0 : i32, i32
  }
  func.func @transform_2(%arg0: i32) -> (i32, i32) {
    %c0_i32 = arith.constant 0 : i32
    %c0_i32_0 = arith.constant 0 : i32
    %c0_i32_1 = arith.constant 0 : i32
    return %c0_i32, %c0_i32_0 : i32, i32
  }
  func.func @transform_3(%arg0: i32) -> (i32, i32) {
    %c0_i32 = arith.constant 0 : i32
    %c0_i32_0 = arith.constant 0 : i32
    return %arg0, %c0_i32 : i32, i32
  }
}

</mosaic_0001>

<llo_original>
// kernel: _lambda_.21
$region0: #{_lambda_.21}
  #allocation0 [shape = 'u32[]', space=smem, size = 0x4, offset = 0x4, fixed_abs, tag = 'smem constant byte address 0x4 - core index']
  #allocation1 [shape = 'u32[72,128]{1,0:T(1,128)}', space=vmem, size = 0x9000, scoped, tag = 'internal scratch']
  %s0 = inlined_call_operand.vmem [shape: bf16[16,32], index: 0, kind: input, shape index: {}]
  %s1 = inlined_call_operand.vmem [shape: bf16[32,32], index: 1, kind: input, shape index: {}]
  %s2 = inlined_call_operand.vmem [shape: f32[1,32], index: 2, kind: input, shape index: {}]
  %s3 = inlined_call_operand.vmem [shape: f32[16,32], index: 3, kind: input, shape index: {}]
  %s4 = inlined_call_operand.vmem [shape: f32[16,32], index: 4, kind: output, shape index: {}]
  %s5 = sld [smem:[#allocation0]]
  $region26: #{_lambda_.21} parent=0
    _
  %s7 = ssub.s32 1, %s5
  %s8 = scalar_select 0, %s7, %s5
  // Predicated region
  $region2: #{_lambda_.21} parent=0 // pred_check
    _
  $region3: #{_lambda_.21} parent=0 // pred_check_branch
    %10 = sbr.rel (0) target = $region5
  $region4: #{_lambda_.21} parent=0 // pred_region
    _
  $region5: #{_lambda_.21} parent=0 // pred_fallthru
    _
  // Predicated region
  $region6: #{_lambda_.21} parent=0 // pred_check
    _
  $region7: #{_lambda_.21} parent=0 // pred_check_branch
    %12 = sbr.rel (0) target = $region9
  $region8: #{_lambda_.21} parent=0 // pred_region
    _
  $region9: #{_lambda_.21} parent=0 // pred_fallthru
    _
  // Predicated region
  $region10: #{_lambda_.21} parent=0 // pred_check
    _
  $region11: #{_lambda_.21} parent=0 // pred_check_branch
    %14 = sbr.rel (0) target = $region13
  $region12: #{_lambda_.21} parent=0 // pred_region
    _
  $region13: #{_lambda_.21} parent=0 // pred_fallthru
    _
  // Predicated region
  $region14: #{_lambda_.21} parent=0 // pred_check
    _
  $region15: #{_lambda_.21} parent=0 // pred_check_branch
    %16 = sbr.rel (0) target = $region17
  $region16: #{_lambda_.21} parent=0 // pred_region
    _
  $region17: #{_lambda_.21} parent=0 // pred_fallthru
    _
  %v18 = vld [vmem:[%s0] sm:$0xf]
  %v19 = vld [vmem:[%s0 + $0x4] sm:$0xf]
  %v20 = vld [vmem:[%s1] sm:$0xf]
  %v21 = vld [vmem:[%s1 + $0x4] sm:$0xf]
  %v22 = vld [vmem:[%s1 + $0x8] sm:$0xf]
  %v23 = vld [vmem:[%s1 + $0xc] sm:$0xf]
  %v24 = vld [vmem:[%s2] sm:$0x1]
  %v26 = vperm.slane %v24, 0
  %v30 = vunpack.c.l.b16 %v18
  %v31 = vunpack.c.l.b16 %v19
  %v32 = vpack.c.b16 %v31, %v30
  %v37 = vunpack.c.l.b16 %v20
  %v38 = vunpack.c.l.b16 %v21
  %v39 = vunpack.c.l.b16 %v22
  %v40 = vunpack.c.l.b16 %v23
  %v41 = vpack.c.b16 %v38, %v37
  %v42 = vpack.c.b16 %v40, %v39
  %vm45 = vcmask 261120
  %v47 = vsel %vm45, %v32, 0
  %49 = vmatpush.bf16.msra.mxu0 0
  %50 = vmatpush.bf16.msra.mxu0 0
  %51 = vmatpush.bf16.msra.mxu0 0
  %52 = vmatpush.bf16.msra.mxu0 0
  %53 = vmatpush.bf16.msra.mxu0 0
  %54 = vmatpush.bf16.msra.mxu0 0
  %55 = vmatpush.bf16.msra.mxu0 %v42
  %56 = vmatpush.bf16.msra.mxu0 %v41
  %57 = vmatmul.bf16.gmra.mxu0 %v47
  %v58 = vpop.f32.mrf.mxu0
  %v59 = vadd.f32 %v26, %v58
  %v60 = vpop.f32.mrf.mxu0
  %v61 = vadd.f32 %v26, %v60
  %62 = vdwg.mxu0
  %v63 = vld [vmem:[%s3] sm:$0xff]
  %v64 = vld [vmem:[%s3 + $0x8] sm:$0xff]
  %v65 = vadd.f32 %v59, %v63
  %v66 = vadd.f32 %v61, %v64
  %67 = vst.msk [vmem:[%s4] sm:$0xff] %vm45, %v65
  %68 = vst.msk [vmem:[%s4 + $0x8] sm:$0xff] %vm45, %v66
  // Predicated region
  $region18: #{_lambda_.21} parent=0 // pred_check
    _
  $region19: #{_lambda_.21} parent=0 // pred_check_branch
    %70 = sbr.rel (0) target = $region21
  $region20: #{_lambda_.21} parent=0 // pred_region
    _
  $region21: #{_lambda_.21} parent=0 // pred_fallthru
    _
  // Predicated region
  $region22: #{_lambda_.21} parent=0 // pred_check
    _
  $region23: #{_lambda_.21} parent=0 // pred_check_branch
    %72 = sbr.rel (0) target = $region25
  $region24: #{_lambda_.21} parent=0 // pred_region
    _
  $region25: #{_lambda_.21} parent=0 // pred_fallthru
    _

// kernel: _lambda_.19
$region0: #{_lambda_.19}
  #allocation0 [shape = 'u32[]', space=smem, size = 0x4, offset = 0x4, fixed_abs, tag = 'smem constant byte address 0x4 - core index']
  #allocation1 [shape = 'u32[72,128]{1,0:T(1,128)}', space=vmem, size = 0x9000, scoped, tag = 'internal scratch']
  %s0 = inlined_call_operand.vmem [shape: f32[16,32], index: 0, kind: input, shape index: {}]
  %s1 = inlined_call_operand.vmem [shape: f32[1,32], index: 1, kind: input, shape index: {}]
  %s2 = inlined_call_operand.vmem [shape: f32[1,32], index: 2, kind: input, shape index: {}]
  %s3 = inlined_call_operand.vmem [shape: bf16[32,96], index: 3, kind: input, shape index: {}]
  %s4 = inlined_call_operand.vmem [shape: f32[1,96], index: 4, kind: input, shape index: {}]
  %s5 = inlined_call_operand.vmem [shape: bf16[16,96], index: 5, kind: output, shape index: {}]
  %s6 = sld [smem:[#allocation0]]
  $region30: #{_lambda_.19} parent=0
    _
  %s8 = ssub.s32 1, %s6
  %s9 = scalar_select 0, %s8, %s6
  // Predicated region
  $region2: #{_lambda_.19} parent=0 // pred_check
    _
  $region3: #{_lambda_.19} parent=0 // pred_check_branch
    %11 = sbr.rel (0) target = $region5
  $region4: #{_lambda_.19} parent=0 // pred_region
    _
  $region5: #{_lambda_.19} parent=0 // pred_fallthru
    _
  // Predicated region
  $region6: #{_lambda_.19} parent=0 // pred_check
    _
  $region7: #{_lambda_.19} parent=0 // pred_check_branch
    %13 = sbr.rel (0) target = $region9
  $region8: #{_lambda_.19} parent=0 // pred_region
    _
  $region9: #{_lambda_.19} parent=0 // pred_fallthru
    _
  // Predicated region
  $region10: #{_lambda_.19} parent=0 // pred_check
    _
  $region11: #{_lambda_.19} parent=0 // pred_check_branch
    %15 = sbr.rel (0) target = $region13
  $region12: #{_lambda_.19} parent=0 // pred_region
    _
  $region13: #{_lambda_.19} parent=0 // pred_fallthru
    _
  // Predicated region
  $region14: #{_lambda_.19} parent=0 // pred_check
    _
  $region15: #{_lambda_.19} parent=0 // pred_check_branch
    %17 = sbr.rel (0) target = $region17
  $region16: #{_lambda_.19} parent=0 // pred_region
    _
  $region17: #{_lambda_.19} parent=0 // pred_fallthru
    _
  // Predicated region
  $region18: #{_lambda_.19} parent=0 // pred_check
    _
  $region19: #{_lambda_.19} parent=0 // pred_check_branch
    %19 = sbr.rel (0) target = $region21
  $region20: #{_lambda_.19} parent=0 // pred_region
    _
  $region21: #{_lambda_.19} parent=0 // pred_fallthru
    _
  %v21 = vld [vmem:[%s0] sm:$0xff]
  %v22 = vld [vmem:[%s0 + $0x8] sm:$0xff]
  %vm23 = vcmask 261120
  %v24 = vsel %vm23, %v21, 0.0
  %25 = vadd.xlane.f32.xlu0 %v24
  %v26 = vpop.xlane.xlu0 %25
  %v27 = vsel %vm23, %v22, 0.0
  %28 = vadd.xlane.f32.xlu0 %v27
  %v29 = vpop.xlane.xlu0 %28
  %v30 = vrcp.pop 32.0
  %v31 = vmul.f32 32.0, %v30
  %v32 = vsub.f32 1.0, %v31
  %v33 = vmul.f32 %v30, %v32
  %v34 = vadd.f32 %v30, %v33
  %vm35 = vweird.f32 %v30
  %v36 = vsel %vm35, %v30, %v34
  %v37 = vmul.f32 %v26, %v36
  %v38 = vmul.f32 %v29, %v36
  %v39 = vsub.f32 %v21, %v37
  %v40 = vsub.f32 %v22, %v38
  %v41 = vmul.f32 %v39, %v39
  %v42 = vmul.f32 %v40, %v40
  %v43 = vsel %vm23, %v41, 0.0
  %44 = vadd.xlane.f32.xlu0 %v43
  %v45 = vpop.xlane.xlu0 %44
  %v46 = vsel %vm23, %v42, 0.0
  %47 = vadd.xlane.f32.xlu0 %v46
  %v48 = vpop.xlane.xlu0 %47
  %v49 = vmul.f32 %v45, %v36
  %v50 = vmul.f32 %v48, %v36
  %v51 = vadd.f32 %v49, 1e-05
  %v52 = vadd.f32 %v50, 1e-05
  %v53 = vrsqrt.pop %v51
  %v54 = vmul.f32 %v53, %v51
  %v55 = vmul.f32 %v54, %v53
  %v56 = vmul.f32 0.5, %v55
  %v57 = vsub.f32 1.5, %v56
  %v58 = vmul.f32 %v53, %v57
  %vm59 = vweird.f32 %v51
  %vm60 = vweird.f32 %v53
  %vm61 = vmor %vm59, %vm60
  %v62 = vsel %vm61, %v53, %v58
  %v63 = vrsqrt.pop %v52
  %v64 = vmul.f32 %v63, %v52
  %v65 = vmul.f32 %v64, %v63
  %v66 = vmul.f32 0.5, %v65
  %v67 = vsub.f32 1.5, %v66
  %v68 = vmul.f32 %v63, %v67
  %vm69 = vweird.f32 %v52
  %vm70 = vweird.f32 %v63
  %vm71 = vmor %vm69, %vm70
  %v72 = vsel %vm71, %v63, %v68
  %v73 = vmul.f32 %v39, %v62
  %v74 = vmul.f32 %v40, %v72
  %v75 = vld [vmem:[%s1] sm:$0x1]
  %v77 = vperm.slane %v75, 0
  %v79 = vmul.f32 %v73, %v77
  %v80 = vmul.f32 %v74, %v77
  %v81 = vld [vmem:[%s2] sm:$0x1]
  %v83 = vperm.slane %v81, 0
  %v85 = vadd.f32 %v79, %v83
  %v86 = vadd.f32 %v80, %v83
  %v87 = vpack.c.bf16 %v86, %v85
  %v88 = vld [vmem:[%s3] sm:$0xf]
  %v89 = vld [vmem:[%s3 + $0x4] sm:$0xf]
  %v90 = vld [vmem:[%s3 + $0x8] sm:$0xf]
  %v91 = vld [vmem:[%s3 + $0xc] sm:$0xf]
  %v92 = vld [vmem:[%s4] sm:$0x1]
  %v94 = vperm.slane %v92, 0
  %v100 = vunpack.c.l.b16 %v88
  %v101 = vunpack.c.l.b16 %v89
  %v102 = vunpack.c.l.b16 %v90
  %v103 = vunpack.c.l.b16 %v91
  %v104 = vpack.c.b16 %v101, %v100
  %v105 = vpack.c.b16 %v103, %v102
  %v109 = vsel %vm23, %v87, 0
  %111 = vmatpush.bf16.msra.mxu0 0
  %112 = vmatpush.bf16.msra.mxu0 0
  %113 = vmatpush.bf16.msra.mxu0 0
  %114 = vmatpush.bf16.msra.mxu0 0
  %115 = vmatpush.bf16.msra.mxu0 0
  %116 = vmatpush.bf16.msra.mxu0 0
  %117 = vmatpush.bf16.msra.mxu0 %v105
  %118 = vmatpush.bf16.msra.mxu0 %v104
  %119 = vmatmul.bf16.gmra.mxu0 %v109
  %v120 = vpop.f32.mrf.mxu0
  %v121 = vadd.f32 %v94, %v120
  %v122 = vpop.f32.mrf.mxu0
  %v123 = vadd.f32 %v94, %v122
  %124 = vdwg.mxu0
  %v125 = vpack.c.bf16 %v121, %v121
  %v126 = vpack.c.bf16 %v123, %v123
  %vm127 = vcmask 781312
  %128 = vst.msk [vmem:[%s5] sm:$0xf] %vm127, %v125
  %129 = vst.msk [vmem:[%s5 + $0x4] sm:$0xf] %vm127, %v126
  // Predicated region
  $region22: #{_lambda_.19} parent=0 // pred_check
    _
  $region23: #{_lambda_.19} parent=0 // pred_check_branch
    %131 = sbr.rel (0) target = $region25
  $region24: #{_lambda_.19} parent=0 // pred_region
    _
  $region25: #{_lambda_.19} parent=0 // pred_fallthru
    _
  // Predicated region
  $region26: #{_lambda_.19} parent=0 // pred_check
    _
  $region27: #{_lambda_.19} parent=0 // pred_check_branch
    %133 = sbr.rel (0) target = $region29
  $region28: #{_lambda_.19} parent=0 // pred_region
    _
  $region29: #{_lambda_.19} parent=0 // pred_fallthru
    _

// kernel: _lambda_.20
$region0: #{_lambda_.20}
  #allocation0 [shape = 'u32[]', space=smem, size = 0x4, offset = 0x4, fixed_abs, tag = 'smem constant byte address 0x4 - core index']
  #allocation1 [shape = 'u32[72,128]{1,0:T(1,128)}', space=vmem, size = 0x9000, scoped, tag = 'internal scratch']
  %s0 = inlined_call_operand.vmem [shape: bf16[2,8,96], index: 0, kind: input, shape index: {}]
  %s1 = inlined_call_operand.vmem [shape: f32[8,8], index: 1, kind: input, shape index: {}]
  %s2 = inlined_call_operand.vmem [shape: bf16[2,8,32], index: 2, kind: output, shape index: {}]
  %s3 = sld [smem:[#allocation0]]
  $region41: #{_lambda_.20} parent=0
    _
  %s5 = ssub.s32 1, %s3
  %s6 = scalar_select 0, %s5, %s3
  loop: start=0, step=1, limit=4
  $region2: #{_lambda_.20} parent=0 // loop_pre_header
    _
  $region3: #{_lambda_.20} parent=0 // loop_header
    %s8 = sphi 0, %s12
    %p9 = scmp.ge.s32.totalorder %s8, 4
    %s15 = sphi 0, %s27
    %s16 = sphi 0, %s23
    %s17 = sphi 0, %s15
    %s18 = sphi 0, %s16
    %s19 = sphi 0, %s17
    %s20 = sphi 0, %s18
    %s30 = sphi 0, %s32
    %s33 = sphi 0, %s30
    %s34 = sphi 0, %s33
    %s50 = sphi 0, %s34
    %s56 = sphi 0, %s58
    %s59 = sphi 0, %s56
    %s60 = sphi 0, %s59
    %s76 = sphi 0, %s60
    %s84 = sphi 0, %s86
    %s87 = sphi 0, %s84
    %s88 = sphi 0, %s87
    %s104 = sphi 0, %s88
  $region4: #{_lambda_.20} parent=0 // loop_header_branch
    %11 = sbr.rel (%p9) target = $region8
  $region5: #{_lambda_.20} parent=0 // loop_body
    %s13 = ssub.s32 %s8, 1
    %s14 = ssub.s32 %s8, 2
    %s21 = sadd.s32 1, %s16
    %p22 = scmp.ge.s32.totalorder %s21, 1
    %s23 = scalar_select %p22, 0, %s21
    %s24 = sadd.s32 1, %s15
    %s25 = scalar_select %p22, %s24, %s15
    %p26 = scmp.ge.s32.totalorder %s25, 2
    %s27 = scalar_select %p26, 0, %s25
    %s28 = ssub.s32 %s15, %s27
    %p29 = scmp.eq.s32.totalorder %s28, 0
    %s31 = sadd.s32 %s30, 1
    %s32 = scalar_select %p29, %s30, %s31
    %p35 = pneg %p29
    %p36 = scmp.eq.s32.totalorder %s8, 1
    %p37 = por %p35, %p36
    %p38 = scmp.ne.s32.totalorder %s30, %s33
    %p39 = scmp.eq.s32.totalorder %s8, 0
    %p40 = por %p38, %p39
    %p41 = scmp.ne.s32.totalorder %s30, %s33
    %p42 = scmp.eq.s32.totalorder %s13, 1
    %p43 = por %p41, %p42
    %p44 = scmp.ne.s32.totalorder %s33, %s34
    %p45 = scmp.eq.s32.totalorder %s13, 0
    %p46 = por %p44, %p45
    %p47 = scmp.ne.s32.totalorder %s33, %s34
    %p48 = scmp.eq.s32.totalorder %s14, 1
    %p49 = por %p47, %p48
    %p51 = scmp.ne.s32.totalorder %s34, %s50
    %p52 = scmp.eq.s32.totalorder %s14, 0
    %p53 = por %p51, %p52
    %s54 = ssub.s32 %s16, %s23
    %p55 = scmp.eq.s32.totalorder %s54, 0
    %s57 = sadd.s32 %s56, 1
    %s58 = scalar_select %p55, %s56, %s57
    %p61 = pneg %p55
    %p62 = scmp.eq.s32.totalorder %s8, 1
    %p63 = por %p61, %p62
    %p64 = scmp.ne.s32.totalorder %s56, %s59
    %p65 = scmp.eq.s32.totalorder %s8, 0
    %p66 = por %p64, %p65
    %p67 = scmp.ne.s32.totalorder %s56, %s59
    %p68 = scmp.eq.s32.totalorder %s13, 1
    %p69 = por %p67, %p68
    %p70 = scmp.ne.s32.totalorder %s59, %s60
    %p71 = scmp.eq.s32.totalorder %s13, 0
    %p72 = por %p70, %p71
    %p73 = scmp.ne.s32.totalorder %s59, %s60
    %p74 = scmp.eq.s32.totalorder %s14, 1
    %p75 = por %p73, %p74
    %p77 = scmp.ne.s32.totalorder %s60, %s76
    %p78 = scmp.eq.s32.totalorder %s14, 0
    %p79 = por %p77, %p78
    %s80 = ssub.s32 %s15, %s27
    %s81 = ssub.s32 %s16, %s23
    %s82 = sor.u32 %s80, %s81
    %p83 = scmp.eq.s32.totalorder %s82, 0
    %s85 = sadd.s32 %s84, 1
    %s86 = scalar_select %p83, %s84, %s85
    %p89 = pneg %p83
    %p90 = scmp.eq.s32.totalorder %s8, 1
    %p91 = por %p89, %p90
    %p92 = scmp.ne.s32.totalorder %s84, %s87
    %p93 = scmp.eq.s32.totalorder %s8, 0
    %p94 = por %p92, %p93
    %p95 = scmp.ne.s32.totalorder %s84, %s87
    %p96 = scmp.eq.s32.totalorder %s13, 1
    %p97 = por %p95, %p96
    %p98 = scmp.ne.s32.totalorder %s87, %s88
    %p99 = scmp.eq.s32.totalorder %s13, 0
    %p100 = por %p98, %p99
    %p101 = scmp.ne.s32.totalorder %s87, %s88
    %p102 = scmp.eq.s32.totalorder %s14, 1
    %p103 = por %p101, %p102
    %p105 = scmp.ne.s32.totalorder %s88, %s104
    %p106 = scmp.eq.s32.totalorder %s14, 0
    %p107 = por %p105, %p106
    %p108 = scmp.le.s32.totalorder 1, %s8
    %p109 = scmp.lt.s32.totalorder %s8, 3
    %p110 = pnand %p108, %p109
    %p111 = pneg %p110
    // Predicated region
    $region9: #{_lambda_.20} parent=5 // pred_check
      _
    $region10: #{_lambda_.20} parent=5 // pred_check_branch
      %113 = sbr.rel (%p110) target = $region12
    $region11: #{_lambda_.20} parent=5 // pred_region
      %s114 = ssub.s32 %s8, 1
      // Predicated region
      $region13: #{_lambda_.20} parent=11 // pred_check
        %p115 = pneg %p72
      $region14: #{_lambda_.20} parent=11 // pred_check_branch
        %117 = sbr.rel (%p115) target = $region16
      $region15: #{_lambda_.20} parent=11 // pred_region
        %p118 = scmp.lt.s32.totalorder %s18, 0
        %s119 = scalar_select %p118, %s18, 0
        %s120 = smul.addr %s119, 8
        %s121 = scalar_lea.vmem %s1, %s120
      $region16: #{_lambda_.20} parent=11 // pred_fallthru
        _
    $region12: #{_lambda_.20} parent=5 // pred_fallthru
      _
    %p122 = scmp.lt.s32.totalorder %s8, 2
    // Predicated region
    $region17: #{_lambda_.20} parent=5 // pred_check
      %p123 = pneg %p122
    $region18: #{_lambda_.20} parent=5 // pred_check_branch
      %125 = sbr.rel (%p123) target = $region20
    $region19: #{_lambda_.20} parent=5 // pred_region
      // Predicated region
      $region21: #{_lambda_.20} parent=19 // pred_check
        %p126 = pneg %p40
      $region22: #{_lambda_.20} parent=19 // pred_check_branch
        %128 = sbr.rel (%p126) target = $region24
      $region23: #{_lambda_.20} parent=19 // pred_region
        %p129 = scmp.lt.s32.totalorder %s15, 1
        %s130 = scalar_select %p129, %s15, 1
        %s131 = smul.addr %s130, 4
        %s132 = scalar_lea.vmem %s0, %s131
      $region24: #{_lambda_.20} parent=19 // pred_fallthru
        _
    $region20: #{_lambda_.20} parent=5 // pred_fallthru
      _
    %p133 = scmp.le.s32.totalorder 1, %s8
    %p134 = scmp.lt.s32.totalorder %s8, 3
    %p135 = pnand %p133, %p134
    %p136 = pneg %p135
    // Predicated region
    $region25: #{_lambda_.20} parent=5 // pred_check
      _
    $region26: #{_lambda_.20} parent=5 // pred_check_branch
      %138 = sbr.rel (%p135) target = $region28
    $region27: #{_lambda_.20} parent=5 // pred_region
      %s139 = ssub.s32 %s8, 1
      %p140 = scmp.lt.s32.totalorder %s17, 1
      %s141 = scalar_select %p140, %s17, 1
      %s142 = smul.addr %s141, 4
      %s143 = scalar_lea.vmem %s0, %s142
      %p144 = pneg %p46
      %p145 = pneg %p43
      %p146 = scmp.lt.s32.totalorder %s18, 0
      %s147 = scalar_select %p146, %s18, 0
      %s148 = smul.addr %s147, 8
      %s149 = scalar_lea.vmem %s1, %s148
      %p150 = pneg %p72
      %p151 = pneg %p69
      %p152 = pneg %p100
      %p153 = pneg %p97
      %p154 = scmp.lt.s32.totalorder %s17, 1
      %s155 = scalar_select %p154, %s17, 1
      %p156 = scmp.lt.s32.totalorder %s18, 0
      %s157 = scalar_select %p156, %s18, 0
      %s158 = sadd.s32 %s157, %s155
      %s159 = smul.addr %s158, 4
      %s160 = scalar_lea.vmem %s2, %s159
      %p161 = scmp.lt.s32.totalorder %s17, 1
      %s162 = scalar_select %p161, %s17, 1
      %s163 = smul.addr %s162, 4
      %s164 = scalar_lea.vmem %s0, %s163
      %p165 = scmp.lt.s32.totalorder %s18, 0
      %s166 = scalar_select %p165, %s18, 0
      %s167 = smul.addr %s166, 8
      %s168 = scalar_lea.vmem %s1, %s167
      %p169 = scmp.lt.s32.totalorder %s17, 1
      %s170 = scalar_select %p169, %s17, 1
      %p171 = scmp.lt.s32.totalorder %s18, 0
      %s172 = scalar_select %p171, %s18, 0
      %s173 = sadd.s32 %s172, %s170
      %s174 = smul.addr %s173, 4
      %s175 = scalar_lea.vmem %s2, %s174
      %v177 = vld [vmem:[%s164] sm:$0xf]
      %v179 = vunpack.c.l.b16 %v177
      %v180 = vpack.c.b16 %v179, %v179
      %181 = vrot.lane.b32.xlu0 %v180, 96
      %v182 = vpop.permute.xlu0 %181
      %vm183 = vcmask 64512
      %v185 = vsel %vm183, %v177, 0
      %v188 = vsel %vm183, %v182, 0
      %190 = vmatpush.bf16.xpose.msra.mxu0 0
      %191 = vmatpush.bf16.xpose.msra.mxu0 0
      %192 = vmatpush.bf16.xpose.msra.mxu0 0
      %193 = vmatpush.bf16.xpose.msra.mxu0 0
      %194 = vmatpush.bf16.xpose.msra.mxu0 0
      %195 = vmatpush.bf16.xpose.msra.mxu0 0
      %196 = vmatpush.bf16.xpose.msra.mxu0 0
      %197 = vmatpush.bf16.xpose.msra.mxu0 %v188
      %198 = vmatmul.bf16.gmra.mxu0 %v185
      %v199 = vpop.f32.mrf.mxu0
      %v200 = vadd.f32 0.0, %v199
      %v201 = vpop.f32.mrf.mxu0
      %202 = vdwg.mxu0
      %v203 = vmul.f32 %v200, 0.35355338
      %v204 = vld [vmem:[%s168] sm:$0xff]
      %v205 = vadd.f32 %v203, %v204
      %v206 = vsel %vm183, %v205, -inf
      %207 = vmax.xlane.f32.xlu0 %v206
      %v208 = vpop.xlane.xlu0 %207
      %v209 = vsub.f32 %v205, %v208
      %v210 = vmul.f32 %v209, 1.442695
      %v211 = vpow.pop %v210
      %v212 = vsel %vm183, %v211, 0.0
      %213 = vadd.xlane.f32.xlu0 %v212
      %v214 = vpop.xlane.xlu0 %213
      %v215 = vrcp.pop %v214
      %v216 = vmul.f32 %v211, %v215
      %v217 = vpack.c.bf16 %v216, %v216
      %218 = vrot.lane.b32.xlu0 %v180, 64
      %v219 = vpop.permute.xlu0 %218
      %v221 = vsel %vm183, %v217, 0
      %vm223 = vcmask 1043456
      %v225 = vsel %vm223, %v219, 0
      %227 = vmatpush.bf16.msra.mxu0 0
      %228 = vmatpush.bf16.msra.mxu0 0
      %229 = vmatpush.bf16.msra.mxu0 0
      %230 = vmatpush.bf16.msra.mxu0 0
      %231 = vmatpush.bf16.msra.mxu0 0
      %232 = vmatpush.bf16.msra.mxu0 0
      %233 = vmatpush.bf16.msra.mxu0 0
      %234 = vmatpush.bf16.msra.mxu0 %v225
      %235 = vmatmul.bf16.gmra.mxu0 %v221
      %v236 = vpop.f32.mrf.mxu0
      %v237 = vadd.f32 0.0, %v236
      %v238 = vpop.f32.mrf.mxu0
      %239 = vdwg.mxu0
      %v240 = vpack.c.bf16 %v237, %v237
      %vm241 = vcmask 60416
      %242 = vst.msk [vmem:[%s175] sm:$0xf] %vm241, %v240
      %v243 = vld [vmem:[%s164] sm:$0xf]
      %v245 = vunpack.c.l.b16 %v243
      %v246 = vpack.c.b16 %v245, %v245
      %247 = vrot.lane.b32.xlu0 %v246, 120
      %v248 = vpop.permute.xlu0 %247
      %249 = vrot.lane.b32.xlu0 %v246, 88
      %v250 = vpop.permute.xlu0 %249
      %v252 = vsel %vm183, %v248, 0
      %v255 = vsel %vm183, %v250, 0
      %257 = vmatpush.bf16.xpose.msra.mxu0 0
      %258 = vmatpush.bf16.xpose.msra.mxu0 0
      %259 = vmatpush.bf16.xpose.msra.mxu0 0
      %260 = vmatpush.bf16.xpose.msra.mxu0 0
      %261 = vmatpush.bf16.xpose.msra.mxu0 0
      %262 = vmatpush.bf16.xpose.msra.mxu0 0
      %263 = vmatpush.bf16.xpose.msra.mxu0 0
      %264 = vmatpush.bf16.xpose.msra.mxu0 %v255
      %265 = vmatmul.bf16.gmra.mxu0 %v252
      %v266 = vpop.f32.mrf.mxu0
      %v267 = vadd.f32 0.0, %v266
      %v268 = vpop.f32.mrf.mxu0
      %269 = vdwg.mxu0
      %v270 = vmul.f32 %v267, 0.35355338
      %v271 = vld [vmem:[%s168] sm:$0xff]
      %v272 = vadd.f32 %v270, %v271
      %v273 = vsel %vm183, %v272, -inf
      %274 = vmax.xlane.f32.xlu0 %v273
      %v275 = vpop.xlane.xlu0 %274
      %v276 = vsub.f32 %v272, %v275
      %v277 = vmul.f32 %v276, 1.442695
      %v278 = vpow.pop %v277
      %v279 = vsel %vm183, %v278, 0.0
      %280 = vadd.xlane.f32.xlu0 %v279
      %v281 = vpop.xlane.xlu0 %280
      %v282 = vrcp.pop %v281
      %v283 = vmul.f32 %v278, %v282
      %v284 = vpack.c.bf16 %v283, %v283
      %285 = vrot.lane.b32.xlu0 %v246, 56
      %v286 = vpop.permute.xlu0 %285
      %v288 = vsel %vm183, %v284, 0
      %v291 = vsel %vm223, %v286, 0
      %293 = vmatpush.bf16.msra.mxu0 0
      %294 = vmatpush.bf16.msra.mxu0 0
      %295 = vmatpush.bf16.msra.mxu0 0
      %296 = vmatpush.bf16.msra.mxu0 0
      %297 = vmatpush.bf16.msra.mxu0 0
      %298 = vmatpush.bf16.msra.mxu0 0
      %299 = vmatpush.bf16.msra.mxu0 0
      %300 = vmatpush.bf16.msra.mxu0 %v291
      %301 = vmatmul.bf16.gmra.mxu0 %v288
      %v302 = vpop.f32.mrf.mxu0
      %v303 = vadd.f32 0.0, %v302
      %v304 = vpop.f32.mrf.mxu0
      %305 = vdwg.mxu0
      %v306 = vpack.c.bf16 %v303, %v303
      %308 = vrot.lane.b32.xlu0 %v306, 8
      %v309 = vpop.permute.xlu0 %308
      %vm311 = vcmask 126016
      %312 = vst.msk [vmem:[%s175] sm:$0xf] %vm311, %v309
      %v313 = vld [vmem:[%s164] sm:$0xf]
      %v315 = vunpack.c.l.b16 %v313
      %v316 = vpack.c.b16 %v315, %v315
      %317 = vrot.lane.b32.xlu0 %v316, 112
      %v318 = vpop.permute.xlu0 %317
      %319 = vrot.lane.b32.xlu0 %v316, 80
      %v320 = vpop.permute.xlu0 %319
      %v322 = vsel %vm183, %v318, 0
      %v325 = vsel %vm183, %v320, 0
      %327 = vmatpush.bf16.xpose.msra.mxu0 0
      %328 = vmatpush.bf16.xpose.msra.mxu0 0
      %329 = vmatpush.bf16.xpose.msra.mxu0 0
      %330 = vmatpush.bf16.xpose.msra.mxu0 0
      %331 = vmatpush.bf16.xpose.msra.mxu0 0
      %332 = vmatpush.bf16.xpose.msra.mxu0 0
      %333 = vmatpush.bf16.xpose.msra.mxu0 0
      %334 = vmatpush.bf16.xpose.msra.mxu0 %v325
      %335 = vmatmul.bf16.gmra.mxu0 %v322
      %v336 = vpop.f32.mrf.mxu0
      %v337 = vadd.f32 0.0, %v336
      %v338 = vpop.f32.mrf.mxu0
      %339 = vdwg.mxu0
      %v340 = vmul.f32 %v337, 0.35355338
      %v341 = vld [vmem:[%s168] sm:$0xff]
      %v342 = vadd.f32 %v340, %v341
      %v343 = vsel %vm183, %v342, -inf
      %344 = vmax.xlane.f32.xlu0 %v343
      %v345 = vpop.xlane.xlu0 %344
      %v346 = vsub.f32 %v342, %v345
      %v347 = vmul.f32 %v346, 1.442695
      %v348 = vpow.pop %v347
      %v349 = vsel %vm183, %v348, 0.0
      %350 = vadd.xlane.f32.xlu0 %v349
      %v351 = vpop.xlane.xlu0 %350
      %v352 = vrcp.pop %v351
      %v353 = vmul.f32 %v348, %v352
      %v354 = vpack.c.bf16 %v353, %v353
      %355 = vrot.lane.b32.xlu0 %v316, 48
      %v356 = vpop.permute.xlu0 %355
      %v358 = vsel %vm183, %v354, 0
      %v361 = vsel %vm223, %v356, 0
      %363 = vmatpush.bf16.msra.mxu0 0
      %364 = vmatpush.bf16.msra.mxu0 0
      %365 = vmatpush.bf16.msra.mxu0 0
      %366 = vmatpush.bf16.msra.mxu0 0
      %367 = vmatpush.bf16.msra.mxu0 0
      %368 = vmatpush.bf16.msra.mxu0 0
      %369 = vmatpush.bf16.msra.mxu0 0
      %370 = vmatpush.bf16.msra.mxu0 %v361
      %371 = vmatmul.bf16.gmra.mxu0 %v358
      %v372 = vpop.f32.mrf.mxu0
      %v373 = vadd.f32 0.0, %v372
      %v374 = vpop.f32.mrf.mxu0
      %375 = vdwg.mxu0
      %v376 = vpack.c.bf16 %v373, %v373
      %378 = vrot.lane.b32.xlu0 %v376, 16
      %v379 = vpop.permute.xlu0 %378
      %vm381 = vcmask 191616
      %382 = vst.msk [vmem:[%s175] sm:$0xf] %vm381, %v379
      %v383 = vld [vmem:[%s164] sm:$0xf]
      %v385 = vunpack.c.l.b16 %v383
      %v386 = vpack.c.b16 %v385, %v385
      %387 = vrot.lane.b32.xlu0 %v386, 104
      %v388 = vpop.permute.xlu0 %387
      %389 = vrot.lane.b32.xlu0 %v386, 72
      %v390 = vpop.permute.xlu0 %389
      %v392 = vsel %vm183, %v388, 0
      %v395 = vsel %vm183, %v390, 0
      %397 = vmatpush.bf16.xpose.msra.mxu0 0
      %398 = vmatpush.bf16.xpose.msra.mxu0 0
      %399 = vmatpush.bf16.xpose.msra.mxu0 0
      %400 = vmatpush.bf16.xpose.msra.mxu0 0
      %401 = vmatpush.bf16.xpose.msra.mxu0 0
      %402 = vmatpush.bf16.xpose.msra.mxu0 0
      %403 = vmatpush.bf16.xpose.msra.mxu0 0
      %404 = vmatpush.bf16.xpose.msra.mxu0 %v395
      %405 = vmatmul.bf16.gmra.mxu0 %v392
      %v406 = vpop.f32.mrf.mxu0
      %v407 = vadd.f32 0.0, %v406
      %v408 = vpop.f32.mrf.mxu0
      %409 = vdwg.mxu0
      %v410 = vmul.f32 %v407, 0.35355338
      %v411 = vld [vmem:[%s168] sm:$0xff]
      %v412 = vadd.f32 %v410, %v411
      %v413 = vsel %vm183, %v412, -inf
      %414 = vmax.xlane.f32.xlu0 %v413
      %v415 = vpop.xlane.xlu0 %414
      %v416 = vsub.f32 %v412, %v415
      %v417 = vmul.f32 %v416, 1.442695
      %v418 = vpow.pop %v417
      %v419 = vsel %vm183, %v418, 0.0
      %420 = vadd.xlane.f32.xlu0 %v419
      %v421 = vpop.xlane.xlu0 %420
      %v422 = vrcp.pop %v421
      %v423 = vmul.f32 %v418, %v422
      %v424 = vpack.c.bf16 %v423, %v423
      %425 = vrot.lane.b32.xlu0 %v386, 40
      %v426 = vpop.permute.xlu0 %425
      %v428 = vsel %vm183, %v424, 0
      %v431 = vsel %vm223, %v426, 0
      %433 = vmatpush.bf16.msra.mxu0 0
      %434 = vmatpush.bf16.msra.mxu0 0
      %435 = vmatpush.bf16.msra.mxu0 0
      %436 = vmatpush.bf16.msra.mxu0 0
      %437 = vmatpush.bf16.msra.mxu0 0
      %438 = vmatpush.bf16.msra.mxu0 0
      %439 = vmatpush.bf16.msra.mxu0 0
      %440 = vmatpush.bf16.msra.mxu0 %v431
      %441 = vmatmul.bf16.gmra.mxu0 %v428
      %v442 = vpop.f32.mrf.mxu0
      %v443 = vadd.f32 0.0, %v442
      %v444 = vpop.f32.mrf.mxu0
      %445 = vdwg.mxu0
      %v446 = vpack.c.bf16 %v443, %v443
      %448 = vrot.lane.b32.xlu0 %v446, 24
      %v449 = vpop.permute.xlu0 %448
      %vm451 = vcmask 257216
      %452 = vst.msk [vmem:[%s175] sm:$0xf] %vm451, %v449
      %p453 = scmp.lt.s32.totalorder %s17, 1
      %s454 = scalar_select %p453, %s17, 1
      %p455 = scmp.lt.s32.totalorder %s18, 0
      %s456 = scalar_select %p455, %s18, 0
      %s457 = sadd.s32 %s456, %s454
      %s458 = smul.addr %s457, 4
      %s459 = scalar_lea.vmem %s2, %s458
      // Predicated region
      $region29: #{_lambda_.20} parent=27 // pred_check
        %p460 = pneg %p97
      $region30: #{_lambda_.20} parent=27 // pred_check_branch
        %462 = sbr.rel (%p460) target = $region32
      $region31: #{_lambda_.20} parent=27 // pred_region
        _
      $region32: #{_lambda_.20} parent=27 // pred_fallthru
        _
    $region28: #{_lambda_.20} parent=5 // pred_fallthru
      _
    %p463 = scmp.le.s32.totalorder 2, %s8
    // Predicated region
    $region33: #{_lambda_.20} parent=5 // pred_check
      %p464 = pneg %p463
    $region34: #{_lambda_.20} parent=5 // pred_check_branch
      %466 = sbr.rel (%p464) target = $region36
    $region35: #{_lambda_.20} parent=5 // pred_region
      %s467 = ssub.s32 %s8, 2
      // Predicated region
      $region37: #{_lambda_.20} parent=35 // pred_check
        %p468 = pneg %p103
      $region38: #{_lambda_.20} parent=35 // pred_check_branch
        %470 = sbr.rel (%p468) target = $region40
      $region39: #{_lambda_.20} parent=35 // pred_region
        %p471 = scmp.lt.s32.totalorder %s19, 1
        %s472 = scalar_select %p471, %s19, 1
        %p473 = scmp.lt.s32.totalorder %s20, 0
        %s474 = scalar_select %p473, %s20, 0
        %s475 = sadd.s32 %s474, %s472
        %s476 = smul.addr %s475, 4
        %s477 = scalar_lea.vmem %s2, %s476
      $region40: #{_lambda_.20} parent=35 // pred_fallthru
        _
    $region36: #{_lambda_.20} parent=5 // pred_fallthru
      _
  $region6: #{_lambda_.20} parent=0 // loop_footer
    %s12 = sadd.s32 1, %s8
  $region7: #{_lambda_.20} parent=0 // loop_footer_branch
    %7 = sbr.rel target = $region3
  $region8: #{_lambda_.20} parent=0 // loop_exit
    _

// kernel: _lambda_.22
$region0: #{_lambda_.22}
  #allocation0 [shape = 'u32[]', space=smem, size = 0x4, offset = 0x4, fixed_abs, tag = 'smem constant byte address 0x4 - core index']
  #allocation1 [shape = 'u32[72,128]{1,0:T(1,128)}', space=vmem, size = 0x9000, scoped, tag = 'internal scratch']
  %s0 = inlined_call_operand.vmem [shape: f32[16,32], index: 0, kind: input, shape index: {}]
  %s1 = inlined_call_operand.hbm [shape: f32[1,32], index: 1, kind: input, shape index: {}]
  %s2 = inlined_call_operand.vmem [shape: f32[1,32], index: 2, kind: input, shape index: {}]
  %s3 = inlined_call_operand.vmem [shape: bf16[32,32], index: 3, kind: input, shape index: {}]
  %s4 = inlined_call_operand.hbm [shape: f32[1,32], index: 4, kind: input, shape index: {}]
  %s5 = inlined_call_operand.vmem [shape: bf16[16,32], index: 5, kind: output, shape index: {}]
  %s6 = sld [smem:[#allocation0]]
  $region38: #{_lambda_.22} parent=0
    _
  %s8 = ssub.s32 1, %s6
  %s9 = scalar_select 0, %s8, %s6
  $region1: #{_lambda_.22} parent=0
    #allocation2 [shape = 'u8[512]{0}', space=vmem, size = 0x400, scoped, tag = 'input window, operand 1, single buffered']
    #allocation3 [shape = 's32[1]{0}', space=sflag, size = 0x4, scoped, tag = 'scoped memory for _lambda_.22']
    #allocation4 [shape = 'u8[512]{0}', space=vmem, size = 0x400, scoped, tag = 'input window, operand 4, single buffered']
    #allocation5 [shape = 's32[1]{0}', space=sflag, size = 0x4, scoped, tag = 'scoped memory for _lambda_.22']
    %10 = vsyncpa [#allocation3], 0
    %11 = vsyncpa [#allocation5], 0
    // Predicated region
    $region2: #{_lambda_.22} parent=1 // pred_check
      _
    $region3: #{_lambda_.22} parent=1 // pred_check_branch
      %13 = sbr.rel (0) target = $region5
    $region4: #{_lambda_.22} parent=1 // pred_region
      _
    $region5: #{_lambda_.22} parent=1 // pred_fallthru
      _
    // Predicated region
    $region6: #{_lambda_.22} parent=1 // pred_check
      _
    $region7: #{_lambda_.22} parent=1 // pred_check_branch
      %15 = sbr.rel (0) target = $region9
    $region8: #{_lambda_.22} parent=1 // pred_region
      %17 = vsyncadd [#allocation3], 0
      %s19 = sshll.u32 %s1, 4
      %s20 = int_to_ptr.hbm [resolvable:$true] %s19
      %s21 = sshll.u32 [#allocation2], 4
      %s22 = int_to_ptr.vmem [resolvable:$true] %s21
      %24 = dma.hbm_to_vmem [thread:$0]  %s20, 16, %s22, [#allocation3]
    $region9: #{_lambda_.22} parent=1 // pred_fallthru
      _
    // Predicated region
    $region10: #{_lambda_.22} parent=1 // pred_check
      _
    $region11: #{_lambda_.22} parent=1 // pred_check_branch
      %26 = sbr.rel (0) target = $region13
    $region12: #{_lambda_.22} parent=1 // pred_region
      _
    $region13: #{_lambda_.22} parent=1 // pred_fallthru
      _
    // Predicated region
    $region14: #{_lambda_.22} parent=1 // pred_check
      _
    $region15: #{_lambda_.22} parent=1 // pred_check_branch
      %28 = sbr.rel (0) target = $region17
    $region16: #{_lambda_.22} parent=1 // pred_region
      _
    $region17: #{_lambda_.22} parent=1 // pred_fallthru
      _
    // Predicated region
    $region18: #{_lambda_.22} parent=1 // pred_check
      _
    $region19: #{_lambda_.22} parent=1 // pred_check_branch
      %30 = sbr.rel (0) target = $region21
    $region20: #{_lambda_.22} parent=1 // pred_region
      %32 = vsyncadd [#allocation5], 0
      %s34 = sshll.u32 %s4, 4
      %s35 = int_to_ptr.hbm [resolvable:$true] %s34
      %s36 = sshll.u32 [#allocation4], 4
      %s37 = int_to_ptr.vmem [resolvable:$true] %s36
      %39 = dma.hbm_to_vmem [thread:$0]  %s35, 16, %s37, [#allocation5]
    $region21: #{_lambda_.22} parent=1 // pred_fallthru
      _
    // Predicated region
    $region22: #{_lambda_.22} parent=1 // pred_check
      _
    $region23: #{_lambda_.22} parent=1 // pred_check_branch
      %41 = sbr.rel (0) target = $region25
    $region24: #{_lambda_.22} parent=1 // pred_region
      %43 = dma.done [#allocation3], 16
    $region25: #{_lambda_.22} parent=1 // pred_fallthru
      _
    // Predicated region
    $region26: #{_lambda_.22} parent=1 // pred_check
      _
    $region27: #{_lambda_.22} parent=1 // pred_check_branch
      %45 = sbr.rel (0) target = $region29
    $region28: #{_lambda_.22} parent=1 // pred_region
      %47 = dma.done [#allocation5], 16
    $region29: #{_lambda_.22} parent=1 // pred_fallthru
      _
    %v49 = vld [vmem:[%s0] sm:$0xff]
    %v50 = vld [vmem:[%s0 + $0x8] sm:$0xff]
    %vm51 = vcmask 261120
    %v52 = vsel %vm51, %v49, 0.0
    %53 = vadd.xlane.f32.xlu0 %v52
    %v54 = vpop.xlane.xlu0 %53
    %v55 = vsel %vm51, %v50, 0.0
    %56 = vadd.xlane.f32.xlu0 %v55
    %v57 = vpop.xlane.xlu0 %56
    %v58 = vrcp.pop 32.0
    %v59 = vmul.f32 32.0, %v58
    %v60 = vsub.f32 1.0, %v59
    %v61 = vmul.f32 %v58, %v60
    %v62 = vadd.f32 %v58, %v61
    %vm63 = vweird.f32 %v58
    %v64 = vsel %vm63, %v58, %v62
    %v65 = vmul.f32 %v54, %v64
    %v66 = vmul.f32 %v57, %v64
    %v67 = vsub.f32 %v49, %v65
    %v68 = vsub.f32 %v50, %v66
    %v69 = vmul.f32 %v67, %v67
    %v70 = vmul.f32 %v68, %v68
    %v71 = vsel %vm51, %v69, 0.0
    %72 = vadd.xlane.f32.xlu0 %v71
    %v73 = vpop.xlane.xlu0 %72
    %v74 = vsel %vm51, %v70, 0.0
    %75 = vadd.xlane.f32.xlu0 %v74
    %v76 = vpop.xlane.xlu0 %75
    %v77 = vmul.f32 %v73, %v64
    %v78 = vmul.f32 %v76, %v64
    %v79 = vadd.f32 %v77, 1e-05
    %v80 = vadd.f32 %v78, 1e-05
    %v81 = vrsqrt.pop %v79
    %v82 = vmul.f32 %v81, %v79
    %v83 = vmul.f32 %v82, %v81
    %v84 = vmul.f32 0.5, %v83
    %v85 = vsub.f32 1.5, %v84
    %v86 = vmul.f32 %v81, %v85
    %vm87 = vweird.f32 %v79
    %vm88 = vweird.f32 %v81
    %vm89 = vmor %vm87, %vm88
    %v90 = vsel %vm89, %v81, %v86
    %v91 = vrsqrt.pop %v80
    %v92 = vmul.f32 %v91, %v80
    %v93 = vmul.f32 %v92, %v91
    %v94 = vmul.f32 0.5, %v93
    %v95 = vsub.f32 1.5, %v94
    %v96 = vmul.f32 %v91, %v95
    %vm97 = vweird.f32 %v80
    %vm98 = vweird.f32 %v91
    %vm99 = vmor %vm97, %vm98
    %v100 = vsel %vm99, %v91, %v96
    %v101 = vmul.f32 %v67, %v90
    %v102 = vmul.f32 %v68, %v100
    %v103 = vld [vmem:[#allocation2] sm:$0x1]
    %v105 = vperm.slane %v103, 0
    %v107 = vmul.f32 %v101, %v105
    %v108 = vmul.f32 %v102, %v105
    %v109 = vld [vmem:[%s2] sm:$0x1]
    %v111 = vperm.slane %v109, 0
    %v113 = vadd.f32 %v107, %v111
    %v114 = vadd.f32 %v108, %v111
    %v115 = vpack.c.bf16 %v114, %v113
    %v116 = vld [vmem:[%s3] sm:$0xf]
    %v117 = vld [vmem:[%s3 + $0x4] sm:$0xf]
    %v118 = vld [vmem:[%s3 + $0x8] sm:$0xf]
    %v119 = vld [vmem:[%s3 + $0xc] sm:$0xf]
    %v120 = vld [vmem:[#allocation4] sm:$0x1]
    %v122 = vperm.slane %v120, 0
    %v128 = vunpack.c.l.b16 %v116
    %v129 = vunpack.c.l.b16 %v117
    %v130 = vunpack.c.l.b16 %v118
    %v131 = vunpack.c.l.b16 %v119
    %v132 = vpack.c.b16 %v129, %v128
    %v133 = vpack.c.b16 %v131, %v130
    %v137 = vsel %vm51, %v115, 0
    %139 = vmatpush.bf16.msra.mxu0 0
    %140 = vmatpush.bf16.msra.mxu0 0
    %141 = vmatpush.bf16.msra.mxu0 0
    %142 = vmatpush.bf16.msra.mxu0 0
    %143 = vmatpush.bf16.msra.mxu0 0
    %144 = vmatpush.bf16.msra.mxu0 0
    %145 = vmatpush.bf16.msra.mxu0 %v133
    %146 = vmatpush.bf16.msra.mxu0 %v132
    %147 = vmatmul.bf16.gmra.mxu0 %v137
    %v148 = vpop.f32.mrf.mxu0
    %v149 = vadd.f32 %v122, %v148
    %v150 = vpop.f32.mrf.mxu0
    %v151 = vadd.f32 %v122, %v150
    %152 = vdwg.mxu0
    %v153 = vpack.c.bf16 %v149, %v149
    %v154 = vpack.c.bf16 %v151, %v151
    %vm155 = vcmask 257024
    %156 = vst.msk [vmem:[%s5] sm:$0xf] %vm155, %v153
    %157 = vst.msk [vmem:[%s5 + $0x4] sm:$0xf] %vm155, %v154
    // Predicated region
    $region30: #{_lambda_.22} parent=1 // pred_check
      _
    $region31: #{_lambda_.22} parent=1 // pred_check_branch
      %159 = sbr.rel (0) target = $region33
    $region32: #{_lambda_.22} parent=1 // pred_region
      _
    $region33: #{_lambda_.22} parent=1 // pred_fallthru
      _
    // Predicated region
    $region34: #{_lambda_.22} parent=1 // pred_check
      _
    $region35: #{_lambda_.22} parent=1 // pred_check_branch
      %161 = sbr.rel (0) target = $region37
    $region36: #{_lambda_.22} parent=1 // pred_region
      _
    $region37: #{_lambda_.22} parent=1 // pred_fallthru
      _
    %162 = vsyncpa [#allocation3], 1
    %163 = vsyncpa [#allocation5], 1

// kernel: _lambda_.23
$region0: #{_lambda_.23}
  #allocation0 [shape = 'u32[]', space=smem, size = 0x4, offset = 0x4, fixed_abs, tag = 'smem constant byte address 0x4 - core index']
  #allocation1 [shape = 'u32[72,128]{1,0:T(1,128)}', space=vmem, size = 0x9000, scoped, tag = 'internal scratch']
  %s0 = inlined_call_operand.hbm [shape: f32[16,32], index: 0, kind: input, shape index: {}]
  %s1 = inlined_call_operand.hbm [shape: bf16[32,64], index: 1, kind: input, shape index: {}]
  %s2 = inlined_call_operand.hbm [shape: f32[1,64], index: 2, kind: input, shape index: {}]
  %s3 = inlined_call_operand.vmem [shape: bf16[16,64], index: 3, kind: output, shape index: {}]
  %s4 = sld [smem:[#allocation0]]
  $region34: #{_lambda_.23} parent=0
    _
  %s6 = ssub.s32 1, %s4
  %s7 = scalar_select 0, %s6, %s4
  $region1: #{_lambda_.23} parent=0
    #allocation2 [shape = 'u8[8192]{0}', space=vmem, size = 0x2000, scoped, tag = 'input window, operand 0, single buffered']
    #allocation3 [shape = 's32[1]{0}', space=sflag, size = 0x4, scoped, tag = 'scoped memory for _lambda_.23']
    #allocation4 [shape = 'u8[8192]{0}', space=vmem, size = 0x2000, scoped, tag = 'input window, operand 1, single buffered']
    #allocation5 [shape = 's32[1]{0}', space=sflag, size = 0x4, scoped, tag = 'scoped memory for _lambda_.23']
    #allocation6 [shape = 'u8[512]{0}', space=vmem, size = 0x400, scoped, tag = 'input window, operand 2, single buffered']
    %8 = vsyncpa [#allocation3], 0
    %9 = vsyncpa [#allocation5], 0
    // Predicated region
    $region2: #{_lambda_.23} parent=1 // pred_check
      _
    $region3: #{_lambda_.23} parent=1 // pred_check_branch
      %11 = sbr.rel (0) target = $region5
    $region4: #{_lambda_.23} parent=1 // pred_region
      %13 = vsyncadd [#allocation3], 0
      %s14 = sshll.u32 %s0, 4
      %s15 = int_to_ptr.hbm [resolvable:$true] %s14
      %s16 = sshll.u32 [#allocation2], 4
      %s17 = int_to_ptr.vmem [resolvable:$true] %s16
      %22 = dma.hbm_to_vmem [thread:$0]  %s15, 256, %s17, [#allocation3], 128, 128, 8
    $region5: #{_lambda_.23} parent=1 // pred_fallthru
      _
    // Predicated region
    $region6: #{_lambda_.23} parent=1 // pred_check
      _
    $region7: #{_lambda_.23} parent=1 // pred_check_branch
      %24 = sbr.rel (0) target = $region9
    $region8: #{_lambda_.23} parent=1 // pred_region
      %26 = vsyncadd [#allocation5], 0
      %s27 = sshll.u32 %s1, 4
      %s28 = int_to_ptr.hbm [resolvable:$true] %s27
      %s29 = sshll.u32 [#allocation4], 4
      %s30 = int_to_ptr.vmem [resolvable:$true] %s29
      %35 = dma.hbm_to_vmem [thread:$0]  %s28, 256, %s30, [#allocation5], 64, 64, 4
    $region9: #{_lambda_.23} parent=1 // pred_fallthru
      _
    // Predicated region
    $region10: #{_lambda_.23} parent=1 // pred_check
      _
    $region11: #{_lambda_.23} parent=1 // pred_check_branch
      %37 = sbr.rel (0) target = $region13
    $region12: #{_lambda_.23} parent=1 // pred_region
      %39 = vsyncadd [#allocation5], 0
      %s41 = sshll.u32 %s2, 4
      %s42 = int_to_ptr.hbm [resolvable:$true] %s41
      %s43 = sshll.u32 [#allocation6], 4
      %s44 = int_to_ptr.vmem [resolvable:$true] %s43
      %46 = dma.hbm_to_vmem [thread:$0]  %s42, 16, %s44, [#allocation5]
    $region13: #{_lambda_.23} parent=1 // pred_fallthru
      _
    // Predicated region
    $region14: #{_lambda_.23} parent=1 // pred_check
      _
    $region15: #{_lambda_.23} parent=1 // pred_check_branch
      %48 = sbr.rel (0) target = $region17
    $region16: #{_lambda_.23} parent=1 // pred_region
      %50 = dma.done [#allocation3], 256
    $region17: #{_lambda_.23} parent=1 // pred_fallthru
      _
    // Predicated region
    $region18: #{_lambda_.23} parent=1 // pred_check
      _
    $region19: #{_lambda_.23} parent=1 // pred_check_branch
      %52 = sbr.rel (0) target = $region21
    $region20: #{_lambda_.23} parent=1 // pred_region
      %54 = dma.done [#allocation5], 256
    $region21: #{_lambda_.23} parent=1 // pred_fallthru
      _
    // Predicated region
    $region22: #{_lambda_.23} parent=1 // pred_check
      _
    $region23: #{_lambda_.23} parent=1 // pred_check_branch
      %56 = sbr.rel (0) target = $region25
    $region24: #{_lambda_.23} parent=1 // pred_region
      %58 = dma.done [#allocation5], 16
    $region25: #{_lambda_.23} parent=1 // pred_fallthru
      _
    %v60 = vld [vmem:[#allocation2] sm:$0xff]
    %v61 = vld [vmem:[#allocation2 + $0x8] sm:$0xff]
    %v62 = vpack.c.bf16 %v61, %v60
    %v63 = vld [vmem:[#allocation4] sm:$0xf]
    %v64 = vld [vmem:[#allocation4 + $0x4] sm:$0xf]
    %v65 = vld [vmem:[#allocation4 + $0x8] sm:$0xf]
    %v66 = vld [vmem:[#allocation4 + $0xc] sm:$0xf]
    %v67 = vld [vmem:[#allocation6] sm:$0x1]
    %v69 = vperm.slane %v67, 0
    %v75 = vunpack.c.l.b16 %v63
    %v76 = vunpack.c.l.b16 %v64
    %v77 = vunpack.c.l.b16 %v65
    %v78 = vunpack.c.l.b16 %v66
    %v79 = vpack.c.b16 %v76, %v75
    %v80 = vpack.c.b16 %v78, %v77
    %vm83 = vcmask 261120
    %v85 = vsel %vm83, %v62, 0
    %87 = vmatpush.bf16.msra.mxu0 0
    %88 = vmatpush.bf16.msra.mxu0 0
    %89 = vmatpush.bf16.msra.mxu0 0
    %90 = vmatpush.bf16.msra.mxu0 0
    %91 = vmatpush.bf16.msra.mxu0 0
    %92 = vmatpush.bf16.msra.mxu0 0
    %93 = vmatpush.bf16.msra.mxu0 %v80
    %94 = vmatpush.bf16.msra.mxu0 %v79
    %95 = vmatmul.bf16.gmra.mxu0 %v85
    %v96 = vpop.f32.mrf.mxu0
    %v97 = vadd.f32 %v69, %v96
    %v98 = vpop.f32.mrf.mxu0
    %v99 = vadd.f32 %v69, %v98
    %100 = vdwg.mxu0
    %v101 = vpack.c.bf16 %v97, %v97
    %v102 = vpack.c.bf16 %v99, %v99
    %vm103 = vcmask 519168
    %104 = vst.msk [vmem:[%s3] sm:$0xf] %vm103, %v101
    %105 = vst.msk [vmem:[%s3 + $0x4] sm:$0xf] %vm103, %v102
    // Predicated region
    $region26: #{_lambda_.23} parent=1 // pred_check
      _
    $region27: #{_lambda_.23} parent=1 // pred_check_branch
      %107 = sbr.rel (0) target = $region29
    $region28: #{_lambda_.23} parent=1 // pred_region
      _
    $region29: #{_lambda_.23} parent=1 // pred_fallthru
      _
    // Predicated region
    $region30: #{_lambda_.23} parent=1 // pred_check
      _
    $region31: #{_lambda_.23} parent=1 // pred_check_branch
      %109 = sbr.rel (0) target = $region33
    $region32: #{_lambda_.23} parent=1 // pred_region
      _
    $region33: #{_lambda_.23} parent=1 // pred_fallthru
      _
    %110 = vsyncpa [#allocation3], 1
    %111 = vsyncpa [#allocation5], 1

// kernel: _lambda_.25
$region0: #{_lambda_.25}
  #allocation0 [shape = 'u32[]', space=smem, size = 0x4, offset = 0x4, fixed_abs, tag = 'smem constant byte address 0x4 - core index']
  #allocation1 [shape = 'u32[72,128]{1,0:T(1,128)}', space=vmem, size = 0x9000, scoped, tag = 'internal scratch']
  %s0 = inlined_call_operand.vmem [shape: bf16[16,32], index: 0, kind: input, shape index: {}]
  %s1 = inlined_call_operand.hbm [shape: bf16[32,32], index: 1, kind: input, shape index: {}]
  %s2 = inlined_call_operand.hbm [shape: f32[1,32], index: 2, kind: input, shape index: {}]
  %s3 = inlined_call_operand.vmem [shape: f32[16,32], index: 3, kind: input, shape index: {}]
  %s4 = inlined_call_operand.vmem [shape: f32[16,32], index: 4, kind: output, shape index: {}]
  %s5 = sld [smem:[#allocation0]]
  $region34: #{_lambda_.25} parent=0
    _
  %s7 = ssub.s32 1, %s5
  %s8 = scalar_select 0, %s7, %s5
  $region1: #{_lambda_.25} parent=0
    #allocation2 [shape = 'u8[8192]{0}', space=vmem, size = 0x2000, scoped, tag = 'input window, operand 1, single buffered']
    #allocation3 [shape = 's32[1]{0}', space=sflag, size = 0x4, scoped, tag = 'scoped memory for _lambda_.25']
    #allocation4 [shape = 'u8[512]{0}', space=vmem, size = 0x400, scoped, tag = 'input window, operand 2, single buffered']
    #allocation5 [shape = 's32[1]{0}', space=sflag, size = 0x4, scoped, tag = 'scoped memory for _lambda_.25']
    %9 = vsyncpa [#allocation3], 0
    %10 = vsyncpa [#allocation5], 0
    // Predicated region
    $region2: #{_lambda_.25} parent=1 // pred_check
      _
    $region3: #{_lambda_.25} parent=1 // pred_check_branch
      %12 = sbr.rel (0) target = $region5
    $region4: #{_lambda_.25} parent=1 // pred_region
      _
    $region5: #{_lambda_.25} parent=1 // pred_fallthru
      _
    // Predicated region
    $region6: #{_lambda_.25} parent=1 // pred_check
      _
    $region7: #{_lambda_.25} parent=1 // pred_check_branch
      %14 = sbr.rel (0) target = $region9
    $region8: #{_lambda_.25} parent=1 // pred_region
      %16 = vsyncadd [#allocation3], 0
      %s17 = sshll.u32 %s1, 4
      %s18 = int_to_ptr.hbm [resolvable:$true] %s17
      %s19 = sshll.u32 [#allocation2], 4
      %s20 = int_to_ptr.vmem [resolvable:$true] %s19
      %25 = dma.hbm_to_vmem [thread:$0]  %s18, 256, %s20, [#allocation3], 64, 64, 4
    $region9: #{_lambda_.25} parent=1 // pred_fallthru
      _
    // Predicated region
    $region10: #{_lambda_.25} parent=1 // pred_check
      _
    $region11: #{_lambda_.25} parent=1 // pred_check_branch
      %27 = sbr.rel (0) target = $region13
    $region12: #{_lambda_.25} parent=1 // pred_region
      %29 = vsyncadd [#allocation5], 0
      %s31 = sshll.u32 %s2, 4
      %s32 = int_to_ptr.hbm [resolvable:$true] %s31
      %s33 = sshll.u32 [#allocation4], 4
      %s34 = int_to_ptr.vmem [resolvable:$true] %s33
      %36 = dma.hbm_to_vmem [thread:$0]  %s32, 16, %s34, [#allocation5]
    $region13: #{_lambda_.25} parent=1 // pred_fallthru
      _
    // Predicated region
    $region14: #{_lambda_.25} parent=1 // pred_check
      _
    $region15: #{_lambda_.25} parent=1 // pred_check_branch
      %38 = sbr.rel (0) target = $region17
    $region16: #{_lambda_.25} parent=1 // pred_region
      _
    $region17: #{_lambda_.25} parent=1 // pred_fallthru
      _
    // Predicated region
    $region18: #{_lambda_.25} parent=1 // pred_check
      _
    $region19: #{_lambda_.25} parent=1 // pred_check_branch
      %40 = sbr.rel (0) target = $region21
    $region20: #{_lambda_.25} parent=1 // pred_region
      %42 = dma.done [#allocation3], 256
    $region21: #{_lambda_.25} parent=1 // pred_fallthru
      _
    // Predicated region
    $region22: #{_lambda_.25} parent=1 // pred_check
      _
    $region23: #{_lambda_.25} parent=1 // pred_check_branch
      %44 = sbr.rel (0) target = $region25
    $region24: #{_lambda_.25} parent=1 // pred_region
      %46 = dma.done [#allocation5], 16
    $region25: #{_lambda_.25} parent=1 // pred_fallthru
      _
    %v48 = vld [vmem:[%s0] sm:$0xf]
    %v49 = vld [vmem:[%s0 + $0x4] sm:$0xf]
    %v50 = vld [vmem:[#allocation2] sm:$0xf]
    %v51 = vld [vmem:[#allocation2 + $0x4] sm:$0xf]
    %v52 = vld [vmem:[#allocation2 + $0x8] sm:$0xf]
    %v53 = vld [vmem:[#allocation2 + $0xc] sm:$0xf]
    %v54 = vld [vmem:[#allocation4] sm:$0x1]
    %v56 = vperm.slane %v54, 0
    %v60 = vunpack.c.l.b16 %v48
    %v61 = vunpack.c.l.b16 %v49
    %v62 = vpack.c.b16 %v61, %v60
    %v67 = vunpack.c.l.b16 %v50
    %v68 = vunpack.c.l.b16 %v51
    %v69 = vunpack.c.l.b16 %v52
    %v70 = vunpack.c.l.b16 %v53
    %v71 = vpack.c.b16 %v68, %v67
    %v72 = vpack.c.b16 %v70, %v69
    %vm75 = vcmask 261120
    %v77 = vsel %vm75, %v62, 0
    %79 = vmatpush.bf16.msra.mxu0 0
    %80 = vmatpush.bf16.msra.mxu0 0
    %81 = vmatpush.bf16.msra.mxu0 0
    %82 = vmatpush.bf16.msra.mxu0 0
    %83 = vmatpush.bf16.msra.mxu0 0
    %84 = vmatpush.bf16.msra.mxu0 0
    %85 = vmatpush.bf16.msra.mxu0 %v72
    %86 = vmatpush.bf16.msra.mxu0 %v71
    %87 = vmatmul.bf16.gmra.mxu0 %v77
    %v88 = vpop.f32.mrf.mxu0
    %v89 = vadd.f32 %v56, %v88
    %v90 = vpop.f32.mrf.mxu0
    %v91 = vadd.f32 %v56, %v90
    %92 = vdwg.mxu0
    %v93 = vld [vmem:[%s3] sm:$0xff]
    %v94 = vld [vmem:[%s3 + $0x8] sm:$0xff]
    %v95 = vadd.f32 %v89, %v93
    %v96 = vadd.f32 %v91, %v94
    %97 = vst.msk [vmem:[%s4] sm:$0xff] %vm75, %v95
    %98 = vst.msk [vmem:[%s4 + $0x8] sm:$0xff] %vm75, %v96
    // Predicated region
    $region26: #{_lambda_.25} parent=1 // pred_check
      _
    $region27: #{_lambda_.25} parent=1 // pred_check_branch
      %100 = sbr.rel (0) target = $region29
    $region28: #{_lambda_.25} parent=1 // pred_region
      _
    $region29: #{_lambda_.25} parent=1 // pred_fallthru
      _
    // Predicated region
    $region30: #{_lambda_.25} parent=1 // pred_check
      _
    $region31: #{_lambda_.25} parent=1 // pred_check_branch
      %102 = sbr.rel (0) target = $region33
    $region32: #{_lambda_.25} parent=1 // pred_region
      _
    $region33: #{_lambda_.25} parent=1 // pred_fallthru
      _
    %103 = vsyncpa [#allocation3], 1
    %104 = vsyncpa [#allocation5], 1

// kernel: _lambda_.24
$region0: #{_lambda_.24}
  #allocation0 [shape = 'u32[]', space=smem, size = 0x4, offset = 0x4, fixed_abs, tag = 'smem constant byte address 0x4 - core index']
  #allocation1 [shape = 'u32[72,128]{1,0:T(1,128)}', space=vmem, size = 0x9000, scoped, tag = 'internal scratch']
  %s0 = inlined_call_operand.vmem [shape: bf16[2,8,32], index: 0, kind: input, shape index: {}]
  %s1 = inlined_call_operand.vmem [shape: bf16[2,8,64], index: 1, kind: input, shape index: {}]
  %s2 = inlined_call_operand.vmem [shape: bf16[2,8,32], index: 2, kind: output, shape index: {}]
  %s3 = sld [smem:[#allocation0]]
  $region41: #{_lambda_.24} parent=0
    _
  %s5 = ssub.s32 1, %s3
  %s6 = scalar_select 0, %s5, %s3
  loop: start=0, step=1, limit=4
  $region2: #{_lambda_.24} parent=0 // loop_pre_header
    _
  $region3: #{_lambda_.24} parent=0 // loop_header
    %s8 = sphi 0, %s12
    %p9 = scmp.ge.s32.totalorder %s8, 4
    %s15 = sphi 0, %s27
    %s16 = sphi 0, %s23
    %s17 = sphi 0, %s15
    %s18 = sphi 0, %s16
    %s19 = sphi 0, %s17
    %s20 = sphi 0, %s18
    %s32 = sphi 0, %s34
    %s35 = sphi 0, %s32
    %s36 = sphi 0, %s35
    %s52 = sphi 0, %s36
    %s58 = sphi 0, %s60
    %s61 = sphi 0, %s58
    %s62 = sphi 0, %s61
    %s78 = sphi 0, %s62
    %s86 = sphi 0, %s88
    %s89 = sphi 0, %s86
    %s90 = sphi 0, %s89
    %s106 = sphi 0, %s90
  $region4: #{_lambda_.24} parent=0 // loop_header_branch
    %11 = sbr.rel (%p9) target = $region8
  $region5: #{_lambda_.24} parent=0 // loop_body
    %s13 = ssub.s32 %s8, 1
    %s14 = ssub.s32 %s8, 2
    %s21 = sadd.s32 1, %s16
    %p22 = scmp.ge.s32.totalorder %s21, 1
    %s23 = scalar_select %p22, 0, %s21
    %s24 = sadd.s32 1, %s15
    %s25 = scalar_select %p22, %s24, %s15
    %p26 = scmp.ge.s32.totalorder %s25, 2
    %s27 = scalar_select %p26, 0, %s25
    %s28 = ssub.s32 %s15, %s27
    %s29 = ssub.s32 %s16, %s23
    %s30 = sor.u32 %s28, %s29
    %p31 = scmp.eq.s32.totalorder %s30, 0
    %s33 = sadd.s32 %s32, 1
    %s34 = scalar_select %p31, %s32, %s33
    %p37 = pneg %p31
    %p38 = scmp.eq.s32.totalorder %s8, 1
    %p39 = por %p37, %p38
    %p40 = scmp.ne.s32.totalorder %s32, %s35
    %p41 = scmp.eq.s32.totalorder %s8, 0
    %p42 = por %p40, %p41
    %p43 = scmp.ne.s32.totalorder %s32, %s35
    %p44 = scmp.eq.s32.totalorder %s13, 1
    %p45 = por %p43, %p44
    %p46 = scmp.ne.s32.totalorder %s35, %s36
    %p47 = scmp.eq.s32.totalorder %s13, 0
    %p48 = por %p46, %p47
    %p49 = scmp.ne.s32.totalorder %s35, %s36
    %p50 = scmp.eq.s32.totalorder %s14, 1
    %p51 = por %p49, %p50
    %p53 = scmp.ne.s32.totalorder %s36, %s52
    %p54 = scmp.eq.s32.totalorder %s14, 0
    %p55 = por %p53, %p54
    %s56 = ssub.s32 %s15, %s27
    %p57 = scmp.eq.s32.totalorder %s56, 0
    %s59 = sadd.s32 %s58, 1
    %s60 = scalar_select %p57, %s58, %s59
    %p63 = pneg %p57
    %p64 = scmp.eq.s32.totalorder %s8, 1
    %p65 = por %p63, %p64
    %p66 = scmp.ne.s32.totalorder %s58, %s61
    %p67 = scmp.eq.s32.totalorder %s8, 0
    %p68 = por %p66, %p67
    %p69 = scmp.ne.s32.totalorder %s58, %s61
    %p70 = scmp.eq.s32.totalorder %s13, 1
    %p71 = por %p69, %p70
    %p72 = scmp.ne.s32.totalorder %s61, %s62
    %p73 = scmp.eq.s32.totalorder %s13, 0
    %p74 = por %p72, %p73
    %p75 = scmp.ne.s32.totalorder %s61, %s62
    %p76 = scmp.eq.s32.totalorder %s14, 1
    %p77 = por %p75, %p76
    %p79 = scmp.ne.s32.totalorder %s62, %s78
    %p80 = scmp.eq.s32.totalorder %s14, 0
    %p81 = por %p79, %p80
    %s82 = ssub.s32 %s15, %s27
    %s83 = ssub.s32 %s16, %s23
    %s84 = sor.u32 %s82, %s83
    %p85 = scmp.eq.s32.totalorder %s84, 0
    %s87 = sadd.s32 %s86, 1
    %s88 = scalar_select %p85, %s86, %s87
    %p91 = pneg %p85
    %p92 = scmp.eq.s32.totalorder %s8, 1
    %p93 = por %p91, %p92
    %p94 = scmp.ne.s32.totalorder %s86, %s89
    %p95 = scmp.eq.s32.totalorder %s8, 0
    %p96 = por %p94, %p95
    %p97 = scmp.ne.s32.totalorder %s86, %s89
    %p98 = scmp.eq.s32.totalorder %s13, 1
    %p99 = por %p97, %p98
    %p100 = scmp.ne.s32.totalorder %s89, %s90
    %p101 = scmp.eq.s32.totalorder %s13, 0
    %p102 = por %p100, %p101
    %p103 = scmp.ne.s32.totalorder %s89, %s90
    %p104 = scmp.eq.s32.totalorder %s14, 1
    %p105 = por %p103, %p104
    %p107 = scmp.ne.s32.totalorder %s90, %s106
    %p108 = scmp.eq.s32.totalorder %s14, 0
    %p109 = por %p107, %p108
    %p110 = scmp.le.s32.totalorder 1, %s8
    %p111 = scmp.lt.s32.totalorder %s8, 3
    %p112 = pnand %p110, %p111
    %p113 = pneg %p112
    // Predicated region
    $region9: #{_lambda_.24} parent=5 // pred_check
      _
    $region10: #{_lambda_.24} parent=5 // pred_check_branch
      %115 = sbr.rel (%p112) target = $region12
    $region11: #{_lambda_.24} parent=5 // pred_region
      %s116 = ssub.s32 %s8, 1
    $region12: #{_lambda_.24} parent=5 // pred_fallthru
      _
    %p117 = scmp.lt.s32.totalorder %s8, 2
    // Predicated region
    $region13: #{_lambda_.24} parent=5 // pred_check
      %p118 = pneg %p117
    $region14: #{_lambda_.24} parent=5 // pred_check_branch
      %120 = sbr.rel (%p118) target = $region16
    $region15: #{_lambda_.24} parent=5 // pred_region
      // Predicated region
      $region17: #{_lambda_.24} parent=15 // pred_check
        %p121 = pneg %p42
      $region18: #{_lambda_.24} parent=15 // pred_check_branch
        %123 = sbr.rel (%p121) target = $region20
      $region19: #{_lambda_.24} parent=15 // pred_region
        %p124 = scmp.lt.s32.totalorder %s15, 1
        %s125 = scalar_select %p124, %s15, 1
        %p126 = scmp.lt.s32.totalorder %s16, 0
        %s127 = scalar_select %p126, %s16, 0
        %s128 = sadd.s32 %s127, %s125
        %s129 = smul.addr %s128, 4
        %s130 = scalar_lea.vmem %s0, %s129
      $region20: #{_lambda_.24} parent=15 // pred_fallthru
        _
      // Predicated region
      $region21: #{_lambda_.24} parent=15 // pred_check
        %p131 = pneg %p68
      $region22: #{_lambda_.24} parent=15 // pred_check_branch
        %133 = sbr.rel (%p131) target = $region24
      $region23: #{_lambda_.24} parent=15 // pred_region
        %p134 = scmp.lt.s32.totalorder %s15, 1
        %s135 = scalar_select %p134, %s15, 1
        %s136 = smul.addr %s135, 4
        %s137 = scalar_lea.vmem %s1, %s136
      $region24: #{_lambda_.24} parent=15 // pred_fallthru
        _
    $region16: #{_lambda_.24} parent=5 // pred_fallthru
      _
    %p138 = scmp.le.s32.totalorder 1, %s8
    %p139 = scmp.lt.s32.totalorder %s8, 3
    %p140 = pnand %p138, %p139
    %p141 = pneg %p140
    // Predicated region
    $region25: #{_lambda_.24} parent=5 // pred_check
      _
    $region26: #{_lambda_.24} parent=5 // pred_check_branch
      %143 = sbr.rel (%p140) target = $region28
    $region27: #{_lambda_.24} parent=5 // pred_region
      %s144 = ssub.s32 %s8, 1
      %p145 = scmp.lt.s32.totalorder %s17, 1
      %s146 = scalar_select %p145, %s17, 1
      %p147 = scmp.lt.s32.totalorder %s18, 0
      %s148 = scalar_select %p147, %s18, 0
      %s149 = sadd.s32 %s148, %s146
      %s150 = smul.addr %s149, 4
      %s151 = scalar_lea.vmem %s0, %s150
      %p152 = pneg %p48
      %p153 = pneg %p45
      %p154 = scmp.lt.s32.totalorder %s17, 1
      %s155 = scalar_select %p154, %s17, 1
      %s156 = smul.addr %s155, 4
      %s157 = scalar_lea.vmem %s1, %s156
      %p158 = pneg %p74
      %p159 = pneg %p71
      %p160 = pneg %p102
      %p161 = pneg %p99
      %p162 = scmp.lt.s32.totalorder %s17, 1
      %s163 = scalar_select %p162, %s17, 1
      %p164 = scmp.lt.s32.totalorder %s18, 0
      %s165 = scalar_select %p164, %s18, 0
      %s166 = sadd.s32 %s165, %s163
      %s167 = smul.addr %s166, 4
      %s168 = scalar_lea.vmem %s2, %s167
      %p169 = scmp.lt.s32.totalorder %s17, 1
      %s170 = scalar_select %p169, %s17, 1
      %p171 = scmp.lt.s32.totalorder %s18, 0
      %s172 = scalar_select %p171, %s18, 0
      %s173 = sadd.s32 %s172, %s170
      %s174 = smul.addr %s173, 4
      %s175 = scalar_lea.vmem %s0, %s174
      %p176 = scmp.lt.s32.totalorder %s17, 1
      %s177 = scalar_select %p176, %s17, 1
      %s178 = smul.addr %s177, 4
      %s179 = scalar_lea.vmem %s1, %s178
      %p180 = scmp.lt.s32.totalorder %s17, 1
      %s181 = scalar_select %p180, %s17, 1
      %p182 = scmp.lt.s32.totalorder %s18, 0
      %s183 = scalar_select %p182, %s18, 0
      %s184 = sadd.s32 %s183, %s181
      %s185 = smul.addr %s184, 4
      %s186 = scalar_lea.vmem %s2, %s185
      %v188 = vld [vmem:[%s175] sm:$0xf]
      %v189 = vld [vmem:[%s179] sm:$0xf]
      %vm190 = vcmask 64512
      %v192 = vsel %vm190, %v188, 0
      %v195 = vsel %vm190, %v189, 0
      %197 = vmatpush.bf16.xpose.msra.mxu0 0
      %198 = vmatpush.bf16.xpose.msra.mxu0 0
      %199 = vmatpush.bf16.xpose.msra.mxu0 0
      %200 = vmatpush.bf16.xpose.msra.mxu0 0
      %201 = vmatpush.bf16.xpose.msra.mxu0 0
      %202 = vmatpush.bf16.xpose.msra.mxu0 0
      %203 = vmatpush.bf16.xpose.msra.mxu0 0
      %204 = vmatpush.bf16.xpose.msra.mxu0 %v195
      %205 = vmatmul.bf16.gmra.mxu0 %v192
      %v206 = vpop.f32.mrf.mxu0
      %v207 = vadd.f32 0.0, %v206
      %v208 = vpop.f32.mrf.mxu0
      %209 = vdwg.mxu0
      %v210 = vmul.f32 %v207, 0.35355338
      %v211 = vsel %vm190, %v210, -inf
      %212 = vmax.xlane.f32.xlu0 %v211
      %v213 = vpop.xlane.xlu0 %212
      %v214 = vsub.f32 %v210, %v213
      %v215 = vmul.f32 %v214, 1.442695
      %v216 = vpow.pop %v215
      %v217 = vsel %vm190, %v216, 0.0
      %218 = vadd.xlane.f32.xlu0 %v217
      %v219 = vpop.xlane.xlu0 %218
      %v220 = vrcp.pop %v219
      %v221 = vmul.f32 %v216, %v220
      %v222 = vpack.c.bf16 %v221, %v221
      %v224 = vunpack.c.l.b16 %v189
      %v225 = vpack.c.b16 %v224, %v224
      %226 = vrot.lane.b32.xlu0 %v225, 96
      %v227 = vpop.permute.xlu0 %226
      %v229 = vsel %vm190, %v222, 0
      %vm231 = vcmask 1043456
      %v233 = vsel %vm231, %v227, 0
      %235 = vmatpush.bf16.msra.mxu0 0
      %236 = vmatpush.bf16.msra.mxu0 0
      %237 = vmatpush.bf16.msra.mxu0 0
      %238 = vmatpush.bf16.msra.mxu0 0
      %239 = vmatpush.bf16.msra.mxu0 0
      %240 = vmatpush.bf16.msra.mxu0 0
      %241 = vmatpush.bf16.msra.mxu0 0
      %242 = vmatpush.bf16.msra.mxu0 %v233
      %243 = vmatmul.bf16.gmra.mxu0 %v229
      %v244 = vpop.f32.mrf.mxu0
      %v245 = vadd.f32 0.0, %v244
      %v246 = vpop.f32.mrf.mxu0
      %247 = vdwg.mxu0
      %v248 = vpack.c.bf16 %v245, %v245
      %vm249 = vcmask 60416
      %250 = vst.msk [vmem:[%s186] sm:$0xf] %vm249, %v248
      %v251 = vld [vmem:[%s175] sm:$0xf]
      %v252 = vld [vmem:[%s179] sm:$0xf]
      %v254 = vunpack.c.l.b16 %v251
      %v255 = vpack.c.b16 %v254, %v254
      %256 = vrot.lane.b32.xlu0 %v255, 120
      %v257 = vpop.permute.xlu0 %256
      %v259 = vunpack.c.l.b16 %v252
      %v260 = vpack.c.b16 %v259, %v259
      %261 = vrot.lane.b32.xlu0 %v260, 120
      %v262 = vpop.permute.xlu0 %261
      %v264 = vsel %vm190, %v257, 0
      %v267 = vsel %vm190, %v262, 0
      %269 = vmatpush.bf16.xpose.msra.mxu0 0
      %270 = vmatpush.bf16.xpose.msra.mxu0 0
      %271 = vmatpush.bf16.xpose.msra.mxu0 0
      %272 = vmatpush.bf16.xpose.msra.mxu0 0
      %273 = vmatpush.bf16.xpose.msra.mxu0 0
      %274 = vmatpush.bf16.xpose.msra.mxu0 0
      %275 = vmatpush.bf16.xpose.msra.mxu0 0
      %276 = vmatpush.bf16.xpose.msra.mxu0 %v267
      %277 = vmatmul.bf16.gmra.mxu0 %v264
      %v278 = vpop.f32.mrf.mxu0
      %v279 = vadd.f32 0.0, %v278
      %v280 = vpop.f32.mrf.mxu0
      %281 = vdwg.mxu0
      %v282 = vmul.f32 %v279, 0.35355338
      %v283 = vsel %vm190, %v282, -inf
      %284 = vmax.xlane.f32.xlu0 %v283
      %v285 = vpop.xlane.xlu0 %284
      %v286 = vsub.f32 %v282, %v285
      %v287 = vmul.f32 %v286, 1.442695
      %v288 = vpow.pop %v287
      %v289 = vsel %vm190, %v288, 0.0
      %290 = vadd.xlane.f32.xlu0 %v289
      %v291 = vpop.xlane.xlu0 %290
      %v292 = vrcp.pop %v291
      %v293 = vmul.f32 %v288, %v292
      %v294 = vpack.c.bf16 %v293, %v293
      %295 = vrot.lane.b32.xlu0 %v260, 88
      %v296 = vpop.permute.xlu0 %295
      %v298 = vsel %vm190, %v294, 0
      %v301 = vsel %vm231, %v296, 0
      %303 = vmatpush.bf16.msra.mxu0 0
      %304 = vmatpush.bf16.msra.mxu0 0
      %305 = vmatpush.bf16.msra.mxu0 0
      %306 = vmatpush.bf16.msra.mxu0 0
      %307 = vmatpush.bf16.msra.mxu0 0
      %308 = vmatpush.bf16.msra.mxu0 0
      %309 = vmatpush.bf16.msra.mxu0 0
      %310 = vmatpush.bf16.msra.mxu0 %v301
      %311 = vmatmul.bf16.gmra.mxu0 %v298
      %v312 = vpop.f32.mrf.mxu0
      %v313 = vadd.f32 0.0, %v312
      %v314 = vpop.f32.mrf.mxu0
      %315 = vdwg.mxu0
      %v316 = vpack.c.bf16 %v313, %v313
      %318 = vrot.lane.b32.xlu0 %v316, 8
      %v319 = vpop.permute.xlu0 %318
      %vm321 = vcmask 126016
      %322 = vst.msk [vmem:[%s186] sm:$0xf] %vm321, %v319
      %v323 = vld [vmem:[%s175] sm:$0xf]
      %v324 = vld [vmem:[%s179] sm:$0xf]
      %v326 = vunpack.c.l.b16 %v323
      %v327 = vpack.c.b16 %v326, %v326
      %328 = vrot.lane.b32.xlu0 %v327, 112
      %v329 = vpop.permute.xlu0 %328
      %v331 = vunpack.c.l.b16 %v324
      %v332 = vpack.c.b16 %v331, %v331
      %333 = vrot.lane.b32.xlu0 %v332, 112
      %v334 = vpop.permute.xlu0 %333
      %v336 = vsel %vm190, %v329, 0
      %v339 = vsel %vm190, %v334, 0
      %341 = vmatpush.bf16.xpose.msra.mxu0 0
      %342 = vmatpush.bf16.xpose.msra.mxu0 0
      %343 = vmatpush.bf16.xpose.msra.mxu0 0
      %344 = vmatpush.bf16.xpose.msra.mxu0 0
      %345 = vmatpush.bf16.xpose.msra.mxu0 0
      %346 = vmatpush.bf16.xpose.msra.mxu0 0
      %347 = vmatpush.bf16.xpose.msra.mxu0 0
      %348 = vmatpush.bf16.xpose.msra.mxu0 %v339
      %349 = vmatmul.bf16.gmra.mxu0 %v336
      %v350 = vpop.f32.mrf.mxu0
      %v351 = vadd.f32 0.0, %v350
      %v352 = vpop.f32.mrf.mxu0
      %353 = vdwg.mxu0
      %v354 = vmul.f32 %v351, 0.35355338
      %v355 = vsel %vm190, %v354, -inf
      %356 = vmax.xlane.f32.xlu0 %v355
      %v357 = vpop.xlane.xlu0 %356
      %v358 = vsub.f32 %v354, %v357
      %v359 = vmul.f32 %v358, 1.442695
      %v360 = vpow.pop %v359
      %v361 = vsel %vm190, %v360, 0.0
      %362 = vadd.xlane.f32.xlu0 %v361
      %v363 = vpop.xlane.xlu0 %362
      %v364 = vrcp.pop %v363
      %v365 = vmul.f32 %v360, %v364
      %v366 = vpack.c.bf16 %v365, %v365
      %367 = vrot.lane.b32.xlu0 %v332, 80
      %v368 = vpop.permute.xlu0 %367
      %v370 = vsel %vm190, %v366, 0
      %v373 = vsel %vm231, %v368, 0
      %375 = vmatpush.bf16.msra.mxu0 0
      %376 = vmatpush.bf16.msra.mxu0 0
      %377 = vmatpush.bf16.msra.mxu0 0
      %378 = vmatpush.bf16.msra.mxu0 0
      %379 = vmatpush.bf16.msra.mxu0 0
      %380 = vmatpush.bf16.msra.mxu0 0
      %381 = vmatpush.bf16.msra.mxu0 0
      %382 = vmatpush.bf16.msra.mxu0 %v373
      %383 = vmatmul.bf16.gmra.mxu0 %v370
      %v384 = vpop.f32.mrf.mxu0
      %v385 = vadd.f32 0.0, %v384
      %v386 = vpop.f32.mrf.mxu0
      %387 = vdwg.mxu0
      %v388 = vpack.c.bf16 %v385, %v385
      %390 = vrot.lane.b32.xlu0 %v388, 16
      %v391 = vpop.permute.xlu0 %390
      %vm393 = vcmask 191616
      %394 = vst.msk [vmem:[%s186] sm:$0xf] %vm393, %v391
      %v395 = vld [vmem:[%s175] sm:$0xf]
      %v396 = vld [vmem:[%s179] sm:$0xf]
      %v398 = vunpack.c.l.b16 %v395
      %v399 = vpack.c.b16 %v398, %v398
      %400 = vrot.lane.b32.xlu0 %v399, 104
      %v401 = vpop.permute.xlu0 %400
      %v403 = vunpack.c.l.b16 %v396
      %v404 = vpack.c.b16 %v403, %v403
      %405 = vrot.lane.b32.xlu0 %v404, 104
      %v406 = vpop.permute.xlu0 %405
      %v408 = vsel %vm190, %v401, 0
      %v411 = vsel %vm190, %v406, 0
      %413 = vmatpush.bf16.xpose.msra.mxu0 0
      %414 = vmatpush.bf16.xpose.msra.mxu0 0
      %415 = vmatpush.bf16.xpose.msra.mxu0 0
      %416 = vmatpush.bf16.xpose.msra.mxu0 0
      %417 = vmatpush.bf16.xpose.msra.mxu0 0
      %418 = vmatpush.bf16.xpose.msra.mxu0 0
      %419 = vmatpush.bf16.xpose.msra.mxu0 0
      %420 = vmatpush.bf16.xpose.msra.mxu0 %v411
      %421 = vmatmul.bf16.gmra.mxu0 %v408
      %v422 = vpop.f32.mrf.mxu0
      %v423 = vadd.f32 0.0, %v422
      %v424 = vpop.f32.mrf.mxu0
      %425 = vdwg.mxu0
      %v426 = vmul.f32 %v423, 0.35355338
      %v427 = vsel %vm190, %v426, -inf
      %428 = vmax.xlane.f32.xlu0 %v427
      %v429 = vpop.xlane.xlu0 %428
      %v430 = vsub.f32 %v426, %v429
      %v431 = vmul.f32 %v430, 1.442695
      %v432 = vpow.pop %v431
      %v433 = vsel %vm190, %v432, 0.0
      %434 = vadd.xlane.f32.xlu0 %v433
      %v435 = vpop.xlane.xlu0 %434
      %v436 = vrcp.pop %v435
      %v437 = vmul.f32 %v432, %v436
      %v438 = vpack.c.bf16 %v437, %v437
      %439 = vrot.lane.b32.xlu0 %v404, 72
      %v440 = vpop.permute.xlu0 %439
      %v442 = vsel %vm190, %v438, 0
      %v445 = vsel %vm231, %v440, 0
      %447 = vmatpush.bf16.msra.mxu0 0
      %448 = vmatpush.bf16.msra.mxu0 0
      %449 = vmatpush.bf16.msra.mxu0 0
      %450 = vmatpush.bf16.msra.mxu0 0
      %451 = vmatpush.bf16.msra.mxu0 0
      %452 = vmatpush.bf16.msra.mxu0 0
      %453 = vmatpush.bf16.msra.mxu0 0
      %454 = vmatpush.bf16.msra.mxu0 %v445
      %455 = vmatmul.bf16.gmra.mxu0 %v442
      %v456 = vpop.f32.mrf.mxu0
      %v457 = vadd.f32 0.0, %v456
      %v458 = vpop.f32.mrf.mxu0
      %459 = vdwg.mxu0
      %v460 = vpack.c.bf16 %v457, %v457
      %462 = vrot.lane.b32.xlu0 %v460, 24
      %v463 = vpop.permute.xlu0 %462
      %vm465 = vcmask 257216
      %466 = vst.msk [vmem:[%s186] sm:$0xf] %vm465, %v463
      %p467 = scmp.lt.s32.totalorder %s17, 1
      %s468 = scalar_select %p467, %s17, 1
      %p469 = scmp.lt.s32.totalorder %s18, 0
      %s470 = scalar_select %p469, %s18, 0
      %s471 = sadd.s32 %s470, %s468
      %s472 = smul.addr %s471, 4
      %s473 = scalar_lea.vmem %s2, %s472
      // Predicated region
      $region29: #{_lambda_.24} parent=27 // pred_check
        %p474 = pneg %p99
      $region30: #{_lambda_.24} parent=27 // pred_check_branch
        %476 = sbr.rel (%p474) target = $region32
      $region31: #{_lambda_.24} parent=27 // pred_region
        _
      $region32: #{_lambda_.24} parent=27 // pred_fallthru
        _
    $region28: #{_lambda_.24} parent=5 // pred_fallthru
      _
    %p477 = scmp.le.s32.totalorder 2, %s8
    // Predicated region
    $region33: #{_lambda_.24} parent=5 // pred_check
      %p478 = pneg %p477
    $region34: #{_lambda_.24} parent=5 // pred_check_branch
      %480 = sbr.rel (%p478) target = $region36
    $region35: #{_lambda_.24} parent=5 // pred_region
      %s481 = ssub.s32 %s8, 2
      // Predicated region
      $region37: #{_lambda_.24} parent=35 // pred_check
        %p482 = pneg %p105
      $region38: #{_lambda_.24} parent=35 // pred_check_branch
        %484 = sbr.rel (%p482) target = $region40
      $region39: #{_lambda_.24} parent=35 // pred_region
        %p485 = scmp.lt.s32.totalorder %s19, 1
        %s486 = scalar_select %p485, %s19, 1
        %p487 = scmp.lt.s32.totalorder %s20, 0
        %s488 = scalar_select %p487, %s20, 0
        %s489 = sadd.s32 %s488, %s486
        %s490 = smul.addr %s489, 4
        %s491 = scalar_lea.vmem %s2, %s490
      $region40: #{_lambda_.24} parent=35 // pred_fallthru
        _
    $region36: #{_lambda_.24} parent=5 // pred_fallthru
      _
  $region6: #{_lambda_.24} parent=0 // loop_footer
    %s12 = sadd.s32 1, %s8
  $region7: #{_lambda_.24} parent=0 // loop_footer_branch
    %7 = sbr.rel target = $region3
  $region8: #{_lambda_.24} parent=0 // loop_exit
    _

// kernel: _lambda_.26
$region0: #{_lambda_.26}
  #allocation0 [shape = 'u32[]', space=smem, size = 0x4, offset = 0x4, fixed_abs, tag = 'smem constant byte address 0x4 - core index']
  #allocation1 [shape = 'u32[72,128]{1,0:T(1,128)}', space=vmem, size = 0x9000, scoped, tag = 'internal scratch']
  %s0 = inlined_call_operand.vmem [shape: f32[16,32], index: 0, kind: input, shape index: {}]
  %s1 = inlined_call_operand.hbm [shape: f32[1,32], index: 1, kind: input, shape index: {}]
  %s2 = inlined_call_operand.hbm [shape: f32[1,32], index: 2, kind: input, shape index: {}]
  %s3 = inlined_call_operand.hbm [shape: bf16[32,128], index: 3, kind: input, shape index: {}]
  %s4 = inlined_call_operand.hbm [shape: f32[1,128], index: 4, kind: input, shape index: {}]
  %s5 = inlined_call_operand.vmem [shape: bf16[16,128], index: 5, kind: output, shape index: {}]
  %s6 = sld [smem:[#allocation0]]
  $region46: #{_lambda_.26} parent=0
    _
  %s8 = ssub.s32 1, %s6
  %s9 = scalar_select 0, %s8, %s6
  $region1: #{_lambda_.26} parent=0
    #allocation2 [shape = 'u8[512]{0}', space=vmem, size = 0x400, scoped, tag = 'input window, operand 1, single buffered']
    #allocation3 [shape = 's32[1]{0}', space=sflag, size = 0x4, scoped, tag = 'scoped memory for _lambda_.26']
    #allocation4 [shape = 'u8[512]{0}', space=vmem, size = 0x400, scoped, tag = 'input window, operand 2, single buffered']
    #allocation5 [shape = 's32[1]{0}', space=sflag, size = 0x4, scoped, tag = 'scoped memory for _lambda_.26']
    #allocation6 [shape = 'u8[8192]{0}', space=vmem, size = 0x2000, scoped, tag = 'input window, operand 3, single buffered']
    #allocation7 [shape = 'u8[512]{0}', space=vmem, size = 0x400, scoped, tag = 'input window, operand 4, single buffered']
    #allocation8 [shape = 's32[1]{0}', space=sflag, size = 0x4, scoped, tag = 'scoped memory for _lambda_.26']
    %10 = vsyncpa [#allocation3], 0
    %11 = vsyncpa [#allocation5], 0
    %12 = vsyncpa [#allocation8], 0
    // Predicated region
    $region2: #{_lambda_.26} parent=1 // pred_check
      _
    $region3: #{_lambda_.26} parent=1 // pred_check_branch
      %14 = sbr.rel (0) target = $region5
    $region4: #{_lambda_.26} parent=1 // pred_region
      _
    $region5: #{_lambda_.26} parent=1 // pred_fallthru
      _
    // Predicated region
    $region6: #{_lambda_.26} parent=1 // pred_check
      _
    $region7: #{_lambda_.26} parent=1 // pred_check_branch
      %16 = sbr.rel (0) target = $region9
    $region8: #{_lambda_.26} parent=1 // pred_region
      %18 = vsyncadd [#allocation3], 0
      %s20 = sshll.u32 %s1, 4
      %s21 = int_to_ptr.hbm [resolvable:$true] %s20
      %s22 = sshll.u32 [#allocation2], 4
      %s23 = int_to_ptr.vmem [resolvable:$true] %s22
      %25 = dma.hbm_to_vmem [thread:$0]  %s21, 16, %s23, [#allocation3]
    $region9: #{_lambda_.26} parent=1 // pred_fallthru
      _
    // Predicated region
    $region10: #{_lambda_.26} parent=1 // pred_check
      _
    $region11: #{_lambda_.26} parent=1 // pred_check_branch
      %27 = sbr.rel (0) target = $region13
    $region12: #{_lambda_.26} parent=1 // pred_region
      %29 = vsyncadd [#allocation5], 0
      %s31 = sshll.u32 %s2, 4
      %s32 = int_to_ptr.hbm [resolvable:$true] %s31
      %s33 = sshll.u32 [#allocation4], 4
      %s34 = int_to_ptr.vmem [resolvable:$true] %s33
      %36 = dma.hbm_to_vmem [thread:$0]  %s32, 16, %s34, [#allocation5]
    $region13: #{_lambda_.26} parent=1 // pred_fallthru
      _
    // Predicated region
    $region14: #{_lambda_.26} parent=1 // pred_check
      _
    $region15: #{_lambda_.26} parent=1 // pred_check_branch
      %38 = sbr.rel (0) target = $region17
    $region16: #{_lambda_.26} parent=1 // pred_region
      %40 = vsyncadd [#allocation5], 0
      %s41 = sshll.u32 %s3, 4
      %s42 = int_to_ptr.hbm [resolvable:$true] %s41
      %s43 = sshll.u32 [#allocation6], 4
      %s44 = int_to_ptr.vmem [resolvable:$true] %s43
      %49 = dma.hbm_to_vmem [thread:$0]  %s42, 256, %s44, [#allocation5], 64, 64, 4
    $region17: #{_lambda_.26} parent=1 // pred_fallthru
      _
    // Predicated region
    $region18: #{_lambda_.26} parent=1 // pred_check
      _
    $region19: #{_lambda_.26} parent=1 // pred_check_branch
      %51 = sbr.rel (0) target = $region21
    $region20: #{_lambda_.26} parent=1 // pred_region
      %53 = vsyncadd [#allocation8], 0
      %s55 = sshll.u32 %s4, 4
      %s56 = int_to_ptr.hbm [resolvable:$true] %s55
      %s57 = sshll.u32 [#allocation7], 4
      %s58 = int_to_ptr.vmem [resolvable:$true] %s57
      %60 = dma.hbm_to_vmem [thread:$0]  %s56, 16, %s58, [#allocation8]
    $region21: #{_lambda_.26} parent=1 // pred_fallthru
      _
    // Predicated region
    $region22: #{_lambda_.26} parent=1 // pred_check
      _
    $region23: #{_lambda_.26} parent=1 // pred_check_branch
      %62 = sbr.rel (0) target = $region25
    $region24: #{_lambda_.26} parent=1 // pred_region
      %64 = dma.done [#allocation3], 16
    $region25: #{_lambda_.26} parent=1 // pred_fallthru
      _
    // Predicated region
    $region26: #{_lambda_.26} parent=1 // pred_check
      _
    $region27: #{_lambda_.26} parent=1 // pred_check_branch
      %66 = sbr.rel (0) target = $region29
    $region28: #{_lambda_.26} parent=1 // pred_region
      %68 = dma.done [#allocation5], 16
    $region29: #{_lambda_.26} parent=1 // pred_fallthru
      _
    // Predicated region
    $region30: #{_lambda_.26} parent=1 // pred_check
      _
    $region31: #{_lambda_.26} parent=1 // pred_check_branch
      %70 = sbr.rel (0) target = $region33
    $region32: #{_lambda_.26} parent=1 // pred_region
      %72 = dma.done [#allocation5], 256
    $region33: #{_lambda_.26} parent=1 // pred_fallthru
      _
    // Predicated region
    $region34: #{_lambda_.26} parent=1 // pred_check
      _
    $region35: #{_lambda_.26} parent=1 // pred_check_branch
      %74 = sbr.rel (0) target = $region37
    $region36: #{_lambda_.26} parent=1 // pred_region
      %76 = dma.done [#allocation8], 16
    $region37: #{_lambda_.26} parent=1 // pred_fallthru
      _
    %v78 = vld [vmem:[%s0] sm:$0xff]
    %v79 = vld [vmem:[%s0 + $0x8] sm:$0xff]
    %vm80 = vcmask 261120
    %v81 = vsel %vm80, %v78, 0.0
    %82 = vadd.xlane.f32.xlu0 %v81
    %v83 = vpop.xlane.xlu0 %82
    %v84 = vsel %vm80, %v79, 0.0
    %85 = vadd.xlane.f32.xlu0 %v84
    %v86 = vpop.xlane.xlu0 %85
    %v87 = vrcp.pop 32.0
    %v88 = vmul.f32 32.0, %v87
    %v89 = vsub.f32 1.0, %v88
    %v90 = vmul.f32 %v87, %v89
    %v91 = vadd.f32 %v87, %v90
    %vm92 = vweird.f32 %v87
    %v93 = vsel %vm92, %v87, %v91
    %v94 = vmul.f32 %v83, %v93
    %v95 = vmul.f32 %v86, %v93
    %v96 = vsub.f32 %v78, %v94
    %v97 = vsub.f32 %v79, %v95
    %v98 = vmul.f32 %v96, %v96
    %v99 = vmul.f32 %v97, %v97
    %v100 = vsel %vm80, %v98, 0.0
    %101 = vadd.xlane.f32.xlu0 %v100
    %v102 = vpop.xlane.xlu0 %101
    %v103 = vsel %vm80, %v99, 0.0
    %104 = vadd.xlane.f32.xlu0 %v103
    %v105 = vpop.xlane.xlu0 %104
    %v106 = vmul.f32 %v102, %v93
    %v107 = vmul.f32 %v105, %v93
    %v108 = vadd.f32 %v106, 1e-05
    %v109 = vadd.f32 %v107, 1e-05
    %v110 = vrsqrt.pop %v108
    %v111 = vmul.f32 %v110, %v108
    %v112 = vmul.f32 %v111, %v110
    %v113 = vmul.f32 0.5, %v112
    %v114 = vsub.f32 1.5, %v113
    %v115 = vmul.f32 %v110, %v114
    %vm116 = vweird.f32 %v108
    %vm117 = vweird.f32 %v110
    %vm118 = vmor %vm116, %vm117
    %v119 = vsel %vm118, %v110, %v115
    %v120 = vrsqrt.pop %v109
    %v121 = vmul.f32 %v120, %v109
    %v122 = vmul.f32 %v121, %v120
    %v123 = vmul.f32 0.5, %v122
    %v124 = vsub.f32 1.5, %v123
    %v125 = vmul.f32 %v120, %v124
    %vm126 = vweird.f32 %v109
    %vm127 = vweird.f32 %v120
    %vm128 = vmor %vm126, %vm127
    %v129 = vsel %vm128, %v120, %v125
    %v130 = vmul.f32 %v96, %v119
    %v131 = vmul.f32 %v97, %v129
    %v132 = vld [vmem:[#allocation2] sm:$0x1]
    %v134 = vperm.slane %v132, 0
    %v136 = vmul.f32 %v130, %v134
    %v137 = vmul.f32 %v131, %v134
    %v138 = vld [vmem:[#allocation4] sm:$0x1]
    %v140 = vperm.slane %v138, 0
    %v142 = vadd.f32 %v136, %v140
    %v143 = vadd.f32 %v137, %v140
    %v144 = vpack.c.bf16 %v143, %v142
    %v145 = vld [vmem:[#allocation6] sm:$0xf]
    %v146 = vld [vmem:[#allocation6 + $0x4] sm:$0xf]
    %v147 = vld [vmem:[#allocation6 + $0x8] sm:$0xf]
    %v148 = vld [vmem:[#allocation6 + $0xc] sm:$0xf]
    %v149 = vld [vmem:[#allocation7] sm:$0x1]
    %v151 = vperm.slane %v149, 0
    %v157 = vunpack.c.l.b16 %v145
    %v158 = vunpack.c.l.b16 %v146
    %v159 = vunpack.c.l.b16 %v147
    %v160 = vunpack.c.l.b16 %v148
    %v161 = vpack.c.b16 %v158, %v157
    %v162 = vpack.c.b16 %v160, %v159
    %v166 = vsel %vm80, %v144, 0
    %168 = vmatpush.bf16.msra.mxu0 0
    %169 = vmatpush.bf16.msra.mxu0 0
    %170 = vmatpush.bf16.msra.mxu0 0
    %171 = vmatpush.bf16.msra.mxu0 0
    %172 = vmatpush.bf16.msra.mxu0 0
    %173 = vmatpush.bf16.msra.mxu0 0
    %174 = vmatpush.bf16.msra.mxu0 %v162
    %175 = vmatpush.bf16.msra.mxu0 %v161
    %176 = vmatmul.bf16.gmra.mxu0 %v166
    %v177 = vpop.f32.mrf.mxu0
    %v178 = vadd.f32 %v151, %v177
    %v179 = vpop.f32.mrf.mxu0
    %v180 = vadd.f32 %v151, %v179
    %181 = vdwg.mxu0
    %v182 = vmul.f32 %v178, 0.5
    %v183 = vmul.f32 %v180, 0.5
    %v184 = vmul.f32 %v178, 0.044715
    %v185 = vmul.f32 %v180, 0.044715
    %v186 = vmul.f32 %v184, %v178
    %v187 = vmul.f32 %v185, %v180
    %v188 = vmul.f32 %v186, %v178
    %v189 = vmul.f32 %v187, %v180
    %v190 = vadd.f32 %v178, %v188
    %v191 = vadd.f32 %v180, %v189
    %v192 = vmul.f32 %v190, 0.7978846
    %v193 = vmul.f32 %v191, 0.7978846
    %v194 = vtanh.pop %v192
    %v195 = vtanh.pop %v193
    %v196 = vadd.f32 %v194, 1.0
    %v197 = vadd.f32 %v195, 1.0
    %v198 = vmul.f32 %v182, %v196
    %v199 = vmul.f32 %v183, %v197
    %v200 = vpack.c.bf16 %v198, %v198
    %v201 = vpack.c.bf16 %v199, %v199
    %202 = vst [vmem:[%s5] sm:$0xf] %v200
    %203 = vst [vmem:[%s5 + $0x4] sm:$0xf] %v201
    // Predicated region
    $region38: #{_lambda_.26} parent=1 // pred_check
      _
    $region39: #{_lambda_.26} parent=1 // pred_check_branch
      %205 = sbr.rel (0) target = $region41
    $region40: #{_lambda_.26} parent=1 // pred_region
      _
    $region41: #{_lambda_.26} parent=1 // pred_fallthru
      _
    // Predicated region
    $region42: #{_lambda_.26} parent=1 // pred_check
      _
    $region43: #{_lambda_.26} parent=1 // pred_check_branch
      %207 = sbr.rel (0) target = $region45
    $region44: #{_lambda_.26} parent=1 // pred_region
      _
    $region45: #{_lambda_.26} parent=1 // pred_fallthru
      _
    %208 = vsyncpa [#allocation3], 1
    %209 = vsyncpa [#allocation5], 1
    %210 = vsyncpa [#allocation8], 1

// kernel: _lambda_.27
$region0: #{_lambda_.27}
  #allocation0 [shape = 'u32[]', space=smem, size = 0x4, offset = 0x4, fixed_abs, tag = 'smem constant byte address 0x4 - core index']
  #allocation1 [shape = 'u32[72,128]{1,0:T(1,128)}', space=vmem, size = 0x9000, scoped, tag = 'internal scratch']
  %s0 = inlined_call_operand.vmem [shape: bf16[16,128], index: 0, kind: input, shape index: {}]
  %s1 = inlined_call_operand.vmem [shape: bf16[128,32], index: 1, kind: input, shape index: {}]
  %s2 = inlined_call_operand.vmem [shape: f32[1,32], index: 2, kind: input, shape index: {}]
  %s3 = inlined_call_operand.vmem [shape: f32[16,32], index: 3, kind: input, shape index: {}]
  %s4 = inlined_call_operand.vmem [shape: f32[16,32], index: 4, kind: output, shape index: {}]
  %s5 = sld [smem:[#allocation0]]
  $region26: #{_lambda_.27} parent=0
    _
  %s7 = ssub.s32 1, %s5
  %s8 = scalar_select 0, %s7, %s5
  // Predicated region
  $region2: #{_lambda_.27} parent=0 // pred_check
    _
  $region3: #{_lambda_.27} parent=0 // pred_check_branch
    %10 = sbr.rel (0) target = $region5
  $region4: #{_lambda_.27} parent=0 // pred_region
    _
  $region5: #{_lambda_.27} parent=0 // pred_fallthru
    _
  // Predicated region
  $region6: #{_lambda_.27} parent=0 // pred_check
    _
  $region7: #{_lambda_.27} parent=0 // pred_check_branch
    %12 = sbr.rel (0) target = $region9
  $region8: #{_lambda_.27} parent=0 // pred_region
    _
  $region9: #{_lambda_.27} parent=0 // pred_fallthru
    _
  // Predicated region
  $region10: #{_lambda_.27} parent=0 // pred_check
    _
  $region11: #{_lambda_.27} parent=0 // pred_check_branch
    %14 = sbr.rel (0) target = $region13
  $region12: #{_lambda_.27} parent=0 // pred_region
    _
  $region13: #{_lambda_.27} parent=0 // pred_fallthru
    _
  // Predicated region
  $region14: #{_lambda_.27} parent=0 // pred_check
    _
  $region15: #{_lambda_.27} parent=0 // pred_check_branch
    %16 = sbr.rel (0) target = $region17
  $region16: #{_lambda_.27} parent=0 // pred_region
    _
  $region17: #{_lambda_.27} parent=0 // pred_fallthru
    _
  %v17 = vld [vmem:[%s0] sm:$0xf]
  %v18 = vld [vmem:[%s0 + $0x4] sm:$0xf]
  %v19 = vld [vmem:[%s1] sm:$0xf]
  %v20 = vld [vmem:[%s1 + $0x4] sm:$0xf]
  %v21 = vld [vmem:[%s1 + $0x8] sm:$0xf]
  %v22 = vld [vmem:[%s1 + $0xc] sm:$0xf]
  %v23 = vld [vmem:[%s1 + $0x10] sm:$0xf]
  %v24 = vld [vmem:[%s1 + $0x14] sm:$0xf]
  %v25 = vld [vmem:[%s1 + $0x18] sm:$0xf]
  %v26 = vld [vmem:[%s1 + $0x1c] sm:$0xf]
  %v27 = vld [vmem:[%s1 + $0x20] sm:$0xf]
  %v28 = vld [vmem:[%s1 + $0x24] sm:$0xf]
  %v29 = vld [vmem:[%s1 + $0x28] sm:$0xf]
  %v30 = vld [vmem:[%s1 + $0x2c] sm:$0xf]
  %v31 = vld [vmem:[%s1 + $0x30] sm:$0xf]
  %v32 = vld [vmem:[%s1 + $0x34] sm:$0xf]
  %v33 = vld [vmem:[%s1 + $0x38] sm:$0xf]
  %v34 = vld [vmem:[%s1 + $0x3c] sm:$0xf]
  %v35 = vld [vmem:[%s2] sm:$0x1]
  %v37 = vperm.slane %v35, 0
  %v41 = vunpack.c.l.b16 %v17
  %v42 = vunpack.c.l.b16 %v18
  %v43 = vpack.c.b16 %v42, %v41
  %v61 = vunpack.c.l.b16 %v19
  %v62 = vunpack.c.l.b16 %v20
  %v63 = vunpack.c.l.b16 %v21
  %v64 = vunpack.c.l.b16 %v22
  %v65 = vunpack.c.l.b16 %v23
  %v66 = vunpack.c.l.b16 %v24
  %v67 = vunpack.c.l.b16 %v25
  %v68 = vunpack.c.l.b16 %v26
  %v69 = vunpack.c.l.b16 %v27
  %v70 = vunpack.c.l.b16 %v28
  %v71 = vunpack.c.l.b16 %v29
  %v72 = vunpack.c.l.b16 %v30
  %v73 = vunpack.c.l.b16 %v31
  %v74 = vunpack.c.l.b16 %v32
  %v75 = vunpack.c.l.b16 %v33
  %v76 = vunpack.c.l.b16 %v34
  %v77 = vpack.c.b16 %v62, %v61
  %v78 = vpack.c.b16 %v64, %v63
  %v79 = vpack.c.b16 %v66, %v65
  %v80 = vpack.c.b16 %v68, %v67
  %v81 = vpack.c.b16 %v70, %v69
  %v82 = vpack.c.b16 %v72, %v71
  %v83 = vpack.c.b16 %v74, %v73
  %v84 = vpack.c.b16 %v76, %v75
  %93 = vmatpush.bf16.msra.mxu0 %v84
  %94 = vmatpush.bf16.msra.mxu0 %v83
  %95 = vmatpush.bf16.msra.mxu0 %v82
  %96 = vmatpush.bf16.msra.mxu0 %v81
  %97 = vmatpush.bf16.msra.mxu0 %v80
  %98 = vmatpush.bf16.msra.mxu0 %v79
  %99 = vmatpush.bf16.msra.mxu0 %v78
  %100 = vmatpush.bf16.msra.mxu0 %v77
  %101 = vmatmul.bf16.gmra.mxu0 %v43
  %v102 = vpop.f32.mrf.mxu0
  %v103 = vadd.f32 %v37, %v102
  %v104 = vpop.f32.mrf.mxu0
  %v105 = vadd.f32 %v37, %v104
  %106 = vdwg.mxu0
  %v107 = vld [vmem:[%s3] sm:$0xff]
  %v108 = vld [vmem:[%s3 + $0x8] sm:$0xff]
  %v109 = vadd.f32 %v103, %v107
  %v110 = vadd.f32 %v105, %v108
  %vm111 = vcmask 261120
  %112 = vst.msk [vmem:[%s4] sm:$0xff] %vm111, %v109
  %113 = vst.msk [vmem:[%s4 + $0x8] sm:$0xff] %vm111, %v110
  // Predicated region
  $region18: #{_lambda_.27} parent=0 // pred_check
    _
  $region19: #{_lambda_.27} parent=0 // pred_check_branch
    %115 = sbr.rel (0) target = $region21
  $region20: #{_lambda_.27} parent=0 // pred_region
    _
  $region21: #{_lambda_.27} parent=0 // pred_fallthru
    _
  // Predicated region
  $region22: #{_lambda_.27} parent=0 // pred_check
    _
  $region23: #{_lambda_.27} parent=0 // pred_check_branch
    %117 = sbr.rel (0) target = $region25
  $region24: #{_lambda_.27} parent=0 // pred_region
    _
  $region25: #{_lambda_.27} parent=0 // pred_fallthru
    _

// kernel: _lambda_.32
$region0: #{_lambda_.32}
  #allocation0 [shape = 'u32[]', space=smem, size = 0x4, offset = 0x4, fixed_abs, tag = 'smem constant byte address 0x4 - core index']
  #allocation1 [shape = 'u32[72,128]{1,0:T(1,128)}', space=vmem, size = 0x9000, scoped, tag = 'internal scratch']
  %s0 = inlined_call_operand.vmem [shape: f32[16,32], index: 0, kind: input, shape index: {}]
  %s1 = inlined_call_operand.vmem [shape: bf16[32,64], index: 1, kind: input, shape index: {}]
  %s2 = inlined_call_operand.vmem [shape: f32[1,64], index: 2, kind: input, shape index: {}]
  %s3 = inlined_call_operand.vmem [shape: bf16[16,64], index: 3, kind: output, shape index: {}]
  %s4 = sld [smem:[#allocation0]]
  $region22: #{_lambda_.32} parent=0
    _
  %s6 = ssub.s32 1, %s4
  %s7 = scalar_select 0, %s6, %s4
  // Predicated region
  $region2: #{_lambda_.32} parent=0 // pred_check
    _
  $region3: #{_lambda_.32} parent=0 // pred_check_branch
    %9 = sbr.rel (0) target = $region5
  $region4: #{_lambda_.32} parent=0 // pred_region
    _
  $region5: #{_lambda_.32} parent=0 // pred_fallthru
    _
  // Predicated region
  $region6: #{_lambda_.32} parent=0 // pred_check
    _
  $region7: #{_lambda_.32} parent=0 // pred_check_branch
    %11 = sbr.rel (0) target = $region9
  $region8: #{_lambda_.32} parent=0 // pred_region
    _
  $region9: #{_lambda_.32} parent=0 // pred_fallthru
    _
  // Predicated region
  $region10: #{_lambda_.32} parent=0 // pred_check
    _
  $region11: #{_lambda_.32} parent=0 // pred_check_branch
    %13 = sbr.rel (0) target = $region13
  $region12: #{_lambda_.32} parent=0 // pred_region
    _
  $region13: #{_lambda_.32} parent=0 // pred_fallthru
    _
  %v15 = vld [vmem:[%s0] sm:$0xff]
  %v16 = vld [vmem:[%s0 + $0x8] sm:$0xff]
  %v17 = vpack.c.bf16 %v16, %v15
  %v18 = vld [vmem:[%s1] sm:$0xf]
  %v19 = vld [vmem:[%s1 + $0x4] sm:$0xf]
  %v20 = vld [vmem:[%s1 + $0x8] sm:$0xf]
  %v21 = vld [vmem:[%s1 + $0xc] sm:$0xf]
  %v22 = vld [vmem:[%s2] sm:$0x1]
  %v24 = vperm.slane %v22, 0
  %v30 = vunpack.c.l.b16 %v18
  %v31 = vunpack.c.l.b16 %v19
  %v32 = vunpack.c.l.b16 %v20
  %v33 = vunpack.c.l.b16 %v21
  %v34 = vpack.c.b16 %v31, %v30
  %v35 = vpack.c.b16 %v33, %v32
  %vm38 = vcmask 261120
  %v40 = vsel %vm38, %v17, 0
  %42 = vmatpush.bf16.msra.mxu0 0
  %43 = vmatpush.bf16.msra.mxu0 0
  %44 = vmatpush.bf16.msra.mxu0 0
  %45 = vmatpush.bf16.msra.mxu0 0
  %46 = vmatpush.bf16.msra.mxu0 0
  %47 = vmatpush.bf16.msra.mxu0 0
  %48 = vmatpush.bf16.msra.mxu0 %v35
  %49 = vmatpush.bf16.msra.mxu0 %v34
  %50 = vmatmul.bf16.gmra.mxu0 %v40
  %v51 = vpop.f32.mrf.mxu0
  %v52 = vadd.f32 %v24, %v51
  %v53 = vpop.f32.mrf.mxu0
  %v54 = vadd.f32 %v24, %v53
  %55 = vdwg.mxu0
  %v56 = vpack.c.bf16 %v52, %v52
  %v57 = vpack.c.bf16 %v54, %v54
  %vm58 = vcmask 519168
  %59 = vst.msk [vmem:[%s3] sm:$0xf] %vm58, %v56
  %60 = vst.msk [vmem:[%s3 + $0x4] sm:$0xf] %vm58, %v57
  // Predicated region
  $region14: #{_lambda_.32} parent=0 // pred_check
    _
  $region15: #{_lambda_.32} parent=0 // pred_check_branch
    %62 = sbr.rel (0) target = $region17
  $region16: #{_lambda_.32} parent=0 // pred_region
    _
  $region17: #{_lambda_.32} parent=0 // pred_fallthru
    _
  // Predicated region
  $region18: #{_lambda_.32} parent=0 // pred_check
    _
  $region19: #{_lambda_.32} parent=0 // pred_check_branch
    %64 = sbr.rel (0) target = $region21
  $region20: #{_lambda_.32} parent=0 // pred_region
    _
  $region21: #{_lambda_.32} parent=0 // pred_fallthru
    _

// kernel: _lambda_.31
$region0: #{_lambda_.31}
  #allocation0 [shape = 'u32[]', space=smem, size = 0x4, offset = 0x4, fixed_abs, tag = 'smem constant byte address 0x4 - core index']
  #allocation1 [shape = 'u32[72,128]{1,0:T(1,128)}', space=vmem, size = 0x9000, scoped, tag = 'internal scratch']
  %s0 = inlined_call_operand.vmem [shape: f32[16,32], index: 0, kind: input, shape index: {}]
  %s1 = inlined_call_operand.vmem [shape: f32[1,32], index: 1, kind: input, shape index: {}]
  %s2 = inlined_call_operand.vmem [shape: f32[1,32], index: 2, kind: input, shape index: {}]
  %s3 = inlined_call_operand.vmem [shape: bf16[32,32], index: 3, kind: input, shape index: {}]
  %s4 = inlined_call_operand.vmem [shape: f32[1,32], index: 4, kind: input, shape index: {}]
  %s5 = inlined_call_operand.vmem [shape: bf16[16,32], index: 5, kind: output, shape index: {}]
  %s6 = sld [smem:[#allocation0]]
  $region30: #{_lambda_.31} parent=0
    _
  %s8 = ssub.s32 1, %s6
  %s9 = scalar_select 0, %s8, %s6
  // Predicated region
  $region2: #{_lambda_.31} parent=0 // pred_check
    _
  $region3: #{_lambda_.31} parent=0 // pred_check_branch
    %11 = sbr.rel (0) target = $region5
  $region4: #{_lambda_.31} parent=0 // pred_region
    _
  $region5: #{_lambda_.31} parent=0 // pred_fallthru
    _
  // Predicated region
  $region6: #{_lambda_.31} parent=0 // pred_check
    _
  $region7: #{_lambda_.31} parent=0 // pred_check_branch
    %13 = sbr.rel (0) target = $region9
  $region8: #{_lambda_.31} parent=0 // pred_region
    _
  $region9: #{_lambda_.31} parent=0 // pred_fallthru
    _
  // Predicated region
  $region10: #{_lambda_.31} parent=0 // pred_check
    _
  $region11: #{_lambda_.31} parent=0 // pred_check_branch
    %15 = sbr.rel (0) target = $region13
  $region12: #{_lambda_.31} parent=0 // pred_region
    _
  $region13: #{_lambda_.31} parent=0 // pred_fallthru
    _
  // Predicated region
  $region14: #{_lambda_.31} parent=0 // pred_check
    _
  $region15: #{_lambda_.31} parent=0 // pred_check_branch
    %17 = sbr.rel (0) target = $region17
  $region16: #{_lambda_.31} parent=0 // pred_region
    _
  $region17: #{_lambda_.31} parent=0 // pred_fallthru
    _
  // Predicated region
  $region18: #{_lambda_.31} parent=0 // pred_check
    _
  $region19: #{_lambda_.31} parent=0 // pred_check_branch
    %19 = sbr.rel (0) target = $region21
  $region20: #{_lambda_.31} parent=0 // pred_region
    _
  $region21: #{_lambda_.31} parent=0 // pred_fallthru
    _
  %v21 = vld [vmem:[%s0] sm:$0xff]
  %v22 = vld [vmem:[%s0 + $0x8] sm:$0xff]
  %vm23 = vcmask 261120
  %v24 = vsel %vm23, %v21, 0.0
  %25 = vadd.xlane.f32.xlu0 %v24
  %v26 = vpop.xlane.xlu0 %25
  %v27 = vsel %vm23, %v22, 0.0
  %28 = vadd.xlane.f32.xlu0 %v27
  %v29 = vpop.xlane.xlu0 %28
  %v30 = vrcp.pop 32.0
  %v31 = vmul.f32 32.0, %v30
  %v32 = vsub.f32 1.0, %v31
  %v33 = vmul.f32 %v30, %v32
  %v34 = vadd.f32 %v30, %v33
  %vm35 = vweird.f32 %v30
  %v36 = vsel %vm35, %v30, %v34
  %v37 = vmul.f32 %v26, %v36
  %v38 = vmul.f32 %v29, %v36
  %v39 = vsub.f32 %v21, %v37
  %v40 = vsub.f32 %v22, %v38
  %v41 = vmul.f32 %v39, %v39
  %v42 = vmul.f32 %v40, %v40
  %v43 = vsel %vm23, %v41, 0.0
  %44 = vadd.xlane.f32.xlu0 %v43
  %v45 = vpop.xlane.xlu0 %44
  %v46 = vsel %vm23, %v42, 0.0
  %47 = vadd.xlane.f32.xlu0 %v46
  %v48 = vpop.xlane.xlu0 %47
  %v49 = vmul.f32 %v45, %v36
  %v50 = vmul.f32 %v48, %v36
  %v51 = vadd.f32 %v49, 1e-05
  %v52 = vadd.f32 %v50, 1e-05
  %v53 = vrsqrt.pop %v51
  %v54 = vmul.f32 %v53, %v51
  %v55 = vmul.f32 %v54, %v53
  %v56 = vmul.f32 0.5, %v55
  %v57 = vsub.f32 1.5, %v56
  %v58 = vmul.f32 %v53, %v57
  %vm59 = vweird.f32 %v51
  %vm60 = vweird.f32 %v53
  %vm61 = vmor %vm59, %vm60
  %v62 = vsel %vm61, %v53, %v58
  %v63 = vrsqrt.pop %v52
  %v64 = vmul.f32 %v63, %v52
  %v65 = vmul.f32 %v64, %v63
  %v66 = vmul.f32 0.5, %v65
  %v67 = vsub.f32 1.5, %v66
  %v68 = vmul.f32 %v63, %v67
  %vm69 = vweird.f32 %v52
  %vm70 = vweird.f32 %v63
  %vm71 = vmor %vm69, %vm70
  %v72 = vsel %vm71, %v63, %v68
  %v73 = vmul.f32 %v39, %v62
  %v74 = vmul.f32 %v40, %v72
  %v75 = vld [vmem:[%s1] sm:$0x1]
  %v77 = vperm.slane %v75, 0
  %v79 = vmul.f32 %v73, %v77
  %v80 = vmul.f32 %v74, %v77
  %v81 = vld [vmem:[%s2] sm:$0x1]
  %v83 = vperm.slane %v81, 0
  %v85 = vadd.f32 %v79, %v83
  %v86 = vadd.f32 %v80, %v83
  %v87 = vpack.c.bf16 %v86, %v85
  %v88 = vld [vmem:[%s3] sm:$0xf]
  %v89 = vld [vmem:[%s3 + $0x4] sm:$0xf]
  %v90 = vld [vmem:[%s3 + $0x8] sm:$0xf]
  %v91 = vld [vmem:[%s3 + $0xc] sm:$0xf]
  %v92 = vld [vmem:[%s4] sm:$0x1]
  %v94 = vperm.slane %v92, 0
  %v100 = vunpack.c.l.b16 %v88
  %v101 = vunpack.c.l.b16 %v89
  %v102 = vunpack.c.l.b16 %v90
  %v103 = vunpack.c.l.b16 %v91
  %v104 = vpack.c.b16 %v101, %v100
  %v105 = vpack.c.b16 %v103, %v102
  %v109 = vsel %vm23, %v87, 0
  %111 = vmatpush.bf16.msra.mxu0 0
  %112 = vmatpush.bf16.msra.mxu0 0
  %113 = vmatpush.bf16.msra.mxu0 0
  %114 = vmatpush.bf16.msra.mxu0 0
  %115 = vmatpush.bf16.msra.mxu0 0
  %116 = vmatpush.bf16.msra.mxu0 0
  %117 = vmatpush.bf16.msra.mxu0 %v105
  %118 = vmatpush.bf16.msra.mxu0 %v104
  %119 = vmatmul.bf16.gmra.mxu0 %v109
  %v120 = vpop.f32.mrf.mxu0
  %v121 = vadd.f32 %v94, %v120
  %v122 = vpop.f32.mrf.mxu0
  %v123 = vadd.f32 %v94, %v122
  %124 = vdwg.mxu0
  %v125 = vpack.c.bf16 %v121, %v121
  %v126 = vpack.c.bf16 %v123, %v123
  %vm127 = vcmask 257024
  %128 = vst.msk [vmem:[%s5] sm:$0xf] %vm127, %v125
  %129 = vst.msk [vmem:[%s5 + $0x4] sm:$0xf] %vm127, %v126
  // Predicated region
  $region22: #{_lambda_.31} parent=0 // pred_check
    _
  $region23: #{_lambda_.31} parent=0 // pred_check_branch
    %131 = sbr.rel (0) target = $region25
  $region24: #{_lambda_.31} parent=0 // pred_region
    _
  $region25: #{_lambda_.31} parent=0 // pred_fallthru
    _
  // Predicated region
  $region26: #{_lambda_.31} parent=0 // pred_check
    _
  $region27: #{_lambda_.31} parent=0 // pred_check_branch
    %133 = sbr.rel (0) target = $region29
  $region28: #{_lambda_.31} parent=0 // pred_region
    _
  $region29: #{_lambda_.31} parent=0 // pred_fallthru
    _

// kernel: _lambda_.34
$region0: #{_lambda_.34}
  #allocation0 [shape = 'u32[]', space=smem, size = 0x4, offset = 0x4, fixed_abs, tag = 'smem constant byte address 0x4 - core index']
  #allocation1 [shape = 'u32[72,128]{1,0:T(1,128)}', space=vmem, size = 0x9000, scoped, tag = 'internal scratch']
  %s0 = inlined_call_operand.vmem [shape: bf16[16,32], index: 0, kind: input, shape index: {}]
  %s1 = inlined_call_operand.hbm [shape: bf16[32,32], index: 1, kind: input, shape index: {}]
  %s2 = inlined_call_operand.vmem [shape: f32[1,32], index: 2, kind: input, shape index: {}]
  %s3 = inlined_call_operand.vmem [shape: f32[16,32], index: 3, kind: input, shape index: {}]
  %s4 = inlined_call_operand.vmem [shape: f32[16,32], index: 4, kind: output, shape index: {}]
  %s5 = sld [smem:[#allocation0]]
  $region30: #{_lambda_.34} parent=0
    _
  %s7 = ssub.s32 1, %s5
  %s8 = scalar_select 0, %s7, %s5
  $region1: #{_lambda_.34} parent=0
    #allocation2 [shape = 'u8[8192]{0}', space=vmem, size = 0x2000, scoped, tag = 'input window, operand 1, single buffered']
    #allocation3 [shape = 's32[1]{0}', space=sflag, size = 0x4, scoped, tag = 'scoped memory for _lambda_.34']
    %9 = vsyncpa [#allocation3], 0
    // Predicated region
    $region2: #{_lambda_.34} parent=1 // pred_check
      _
    $region3: #{_lambda_.34} parent=1 // pred_check_branch
      %11 = sbr.rel (0) target = $region5
    $region4: #{_lambda_.34} parent=1 // pred_region
      _
    $region5: #{_lambda_.34} parent=1 // pred_fallthru
      _
    // Predicated region
    $region6: #{_lambda_.34} parent=1 // pred_check
      _
    $region7: #{_lambda_.34} parent=1 // pred_check_branch
      %13 = sbr.rel (0) target = $region9
    $region8: #{_lambda_.34} parent=1 // pred_region
      %15 = vsyncadd [#allocation3], 0
      %s16 = sshll.u32 %s1, 4
      %s17 = int_to_ptr.hbm [resolvable:$true] %s16
      %s18 = sshll.u32 [#allocation2], 4
      %s19 = int_to_ptr.vmem [resolvable:$true] %s18
      %24 = dma.hbm_to_vmem [thread:$0]  %s17, 256, %s19, [#allocation3], 64, 64, 4
    $region9: #{_lambda_.34} parent=1 // pred_fallthru
      _
    // Predicated region
    $region10: #{_lambda_.34} parent=1 // pred_check
      _
    $region11: #{_lambda_.34} parent=1 // pred_check_branch
      %26 = sbr.rel (0) target = $region13
    $region12: #{_lambda_.34} parent=1 // pred_region
      _
    $region13: #{_lambda_.34} parent=1 // pred_fallthru
      _
    // Predicated region
    $region14: #{_lambda_.34} parent=1 // pred_check
      _
    $region15: #{_lambda_.34} parent=1 // pred_check_branch
      %28 = sbr.rel (0) target = $region17
    $region16: #{_lambda_.34} parent=1 // pred_region
      _
    $region17: #{_lambda_.34} parent=1 // pred_fallthru
      _
    // Predicated region
    $region18: #{_lambda_.34} parent=1 // pred_check
      _
    $region19: #{_lambda_.34} parent=1 // pred_check_branch
      %30 = sbr.rel (0) target = $region21
    $region20: #{_lambda_.34} parent=1 // pred_region
      %32 = dma.done [#allocation3], 256
    $region21: #{_lambda_.34} parent=1 // pred_fallthru
      _
    %v34 = vld [vmem:[%s0] sm:$0xf]
    %v35 = vld [vmem:[%s0 + $0x4] sm:$0xf]
    %v36 = vld [vmem:[#allocation2] sm:$0xf]
    %v37 = vld [vmem:[#allocation2 + $0x4] sm:$0xf]
    %v38 = vld [vmem:[#allocation2 + $0x8] sm:$0xf]
    %v39 = vld [vmem:[#allocation2 + $0xc] sm:$0xf]
    %v40 = vld [vmem:[%s2] sm:$0x1]
    %v42 = vperm.slane %v40, 0
    %v46 = vunpack.c.l.b16 %v34
    %v47 = vunpack.c.l.b16 %v35
    %v48 = vpack.c.b16 %v47, %v46
    %v53 = vunpack.c.l.b16 %v36
    %v54 = vunpack.c.l.b16 %v37
    %v55 = vunpack.c.l.b16 %v38
    %v56 = vunpack.c.l.b16 %v39
    %v57 = vpack.c.b16 %v54, %v53
    %v58 = vpack.c.b16 %v56, %v55
    %vm61 = vcmask 261120
    %v63 = vsel %vm61, %v48, 0
    %65 = vmatpush.bf16.msra.mxu0 0
    %66 = vmatpush.bf16.msra.mxu0 0
    %67 = vmatpush.bf16.msra.mxu0 0
    %68 = vmatpush.bf16.msra.mxu0 0
    %69 = vmatpush.bf16.msra.mxu0 0
    %70 = vmatpush.bf16.msra.mxu0 0
    %71 = vmatpush.bf16.msra.mxu0 %v58
    %72 = vmatpush.bf16.msra.mxu0 %v57
    %73 = vmatmul.bf16.gmra.mxu0 %v63
    %v74 = vpop.f32.mrf.mxu0
    %v75 = vadd.f32 %v42, %v74
    %v76 = vpop.f32.mrf.mxu0
    %v77 = vadd.f32 %v42, %v76
    %78 = vdwg.mxu0
    %v79 = vld [vmem:[%s3] sm:$0xff]
    %v80 = vld [vmem:[%s3 + $0x8] sm:$0xff]
    %v81 = vadd.f32 %v75, %v79
    %v82 = vadd.f32 %v77, %v80
    %83 = vst.msk [vmem:[%s4] sm:$0xff] %vm61, %v81
    %84 = vst.msk [vmem:[%s4 + $0x8] sm:$0xff] %vm61, %v82
    // Predicated region
    $region22: #{_lambda_.34} parent=1 // pred_check
      _
    $region23: #{_lambda_.34} parent=1 // pred_check_branch
      %86 = sbr.rel (0) target = $region25
    $region24: #{_lambda_.34} parent=1 // pred_region
      _
    $region25: #{_lambda_.34} parent=1 // pred_fallthru
      _
    // Predicated region
    $region26: #{_lambda_.34} parent=1 // pred_check
      _
    $region27: #{_lambda_.34} parent=1 // pred_check_branch
      %88 = sbr.rel (0) target = $region29
    $region28: #{_lambda_.34} parent=1 // pred_region
      _
    $region29: #{_lambda_.34} parent=1 // pred_fallthru
      _
    %89 = vsyncpa [#allocation3], 1

// kernel: _lambda_.37
$region0: #{_lambda_.37}
  #allocation0 [shape = 'u32[]', space=smem, size = 0x4, offset = 0x4, fixed_abs, tag = 'smem constant byte address 0x4 - core index']
  #allocation1 [shape = 'u32[72,128]{1,0:T(1,128)}', space=vmem, size = 0x9000, scoped, tag = 'internal scratch']
  %s0 = inlined_call_operand.vmem [shape: f32[16,32], index: 0, kind: input, shape index: {}]
  %s1 = inlined_call_operand.vmem [shape: f32[1,32], index: 1, kind: input, shape index: {}]
  %s2 = inlined_call_operand.vmem [shape: f32[1,32], index: 2, kind: input, shape index: {}]
  %s3 = inlined_call_operand.hbm [shape: f32[16,32], index: 3, kind: output, shape index: {}]
  %s4 = sld [smem:[#allocation0]]
  $region22: #{_lambda_.37} parent=0
    _
  %s6 = ssub.s32 1, %s4
  %s7 = scalar_select 0, %s6, %s4
  $region1: #{_lambda_.37} parent=0
    #allocation2 [shape = 'u8[8192]{0}', space=vmem, size = 0x2000, scoped, tag = 'output window, operand 0, single buffered']
    #allocation3 [shape = 's32[1]{0}', space=sflag, size = 0x4, scoped, tag = 'scoped memory for _lambda_.37']
    %8 = vsyncpa [#allocation3], 0
    // Predicated region
    $region2: #{_lambda_.37} parent=1 // pred_check
      _
    $region3: #{_lambda_.37} parent=1 // pred_check_branch
      %10 = sbr.rel (0) target = $region5
    $region4: #{_lambda_.37} parent=1 // pred_region
      _
    $region5: #{_lambda_.37} parent=1 // pred_fallthru
      _
    // Predicated region
    $region6: #{_lambda_.37} parent=1 // pred_check
      _
    $region7: #{_lambda_.37} parent=1 // pred_check_branch
      %12 = sbr.rel (0) target = $region9
    $region8: #{_lambda_.37} parent=1 // pred_region
      _
    $region9: #{_lambda_.37} parent=1 // pred_fallthru
      _
    // Predicated region
    $region10: #{_lambda_.37} parent=1 // pred_check
      _
    $region11: #{_lambda_.37} parent=1 // pred_check_branch
      %14 = sbr.rel (0) target = $region13
    $region12: #{_lambda_.37} parent=1 // pred_region
      _
    $region13: #{_lambda_.37} parent=1 // pred_fallthru
      _
    %v15 = vld [vmem:[%s0] sm:$0xff]
    %v16 = vld [vmem:[%s0 + $0x8] sm:$0xff]
    %vm17 = vcmask 261120
    %v18 = vsel %vm17, %v15, 0.0
    %19 = vadd.xlane.f32.xlu0 %v18
    %v20 = vpop.xlane.xlu0 %19
    %v21 = vsel %vm17, %v16, 0.0
    %22 = vadd.xlane.f32.xlu0 %v21
    %v23 = vpop.xlane.xlu0 %22
    %v24 = vrcp.pop 32.0
    %v25 = vmul.f32 32.0, %v24
    %v26 = vsub.f32 1.0, %v25
    %v27 = vmul.f32 %v24, %v26
    %v28 = vadd.f32 %v24, %v27
    %vm29 = vweird.f32 %v24
    %v30 = vsel %vm29, %v24, %v28
    %v31 = vmul.f32 %v20, %v30
    %v32 = vmul.f32 %v23, %v30
    %v33 = vsub.f32 %v15, %v31
    %v34 = vsub.f32 %v16, %v32
    %v35 = vmul.f32 %v33, %v33
    %v36 = vmul.f32 %v34, %v34
    %v37 = vsel %vm17, %v35, 0.0
    %38 = vadd.xlane.f32.xlu0 %v37
    %v39 = vpop.xlane.xlu0 %38
    %v40 = vsel %vm17, %v36, 0.0
    %41 = vadd.xlane.f32.xlu0 %v40
    %v42 = vpop.xlane.xlu0 %41
    %v43 = vmul.f32 %v39, %v30
    %v44 = vmul.f32 %v42, %v30
    %v45 = vadd.f32 %v43, 1e-05
    %v46 = vadd.f32 %v44, 1e-05
    %v47 = vrsqrt.pop %v45
    %v48 = vmul.f32 %v47, %v45
    %v49 = vmul.f32 %v48, %v47
    %v50 = vmul.f32 0.5, %v49
    %v51 = vsub.f32 1.5, %v50
    %v52 = vmul.f32 %v47, %v51
    %vm53 = vweird.f32 %v45
    %vm54 = vweird.f32 %v47
    %vm55 = vmor %vm53, %vm54
    %v56 = vsel %vm55, %v47, %v52
    %v57 = vrsqrt.pop %v46
    %v58 = vmul.f32 %v57, %v46
    %v59 = vmul.f32 %v58, %v57
    %v60 = vmul.f32 0.5, %v59
    %v61 = vsub.f32 1.5, %v60
    %v62 = vmul.f32 %v57, %v61
    %vm63 = vweird.f32 %v46
    %vm64 = vweird.f32 %v57
    %vm65 = vmor %vm63, %vm64
    %v66 = vsel %vm65, %v57, %v62
    %v67 = vmul.f32 %v33, %v56
    %v68 = vmul.f32 %v34, %v66
    %v69 = vld [vmem:[%s1] sm:$0x1]
    %v71 = vperm.slane %v69, 0
    %v73 = vmul.f32 %v67, %v71
    %v74 = vmul.f32 %v68, %v71
    %v75 = vld [vmem:[%s2] sm:$0x1]
    %v77 = vperm.slane %v75, 0
    %v79 = vadd.f32 %v73, %v77
    %v80 = vadd.f32 %v74, %v77
    %81 = vst.msk [vmem:[#allocation2] sm:$0xff] %vm17, %v79
    %82 = vst.msk [vmem:[#allocation2 + $0x8] sm:$0xff] %vm17, %v80
    // Predicated region
    $region14: #{_lambda_.37} parent=1 // pred_check
      _
    $region15: #{_lambda_.37} parent=1 // pred_check_branch
      %84 = sbr.rel (0) target = $region17
    $region16: #{_lambda_.37} parent=1 // pred_region
      %86 = vsyncadd [#allocation3], 0
      %s87 = sshll.u32 [#allocation2], 4
      %s88 = int_to_ptr.vmem [resolvable:$true] %s87
      %s89 = sshll.u32 %s3, 4
      %s90 = int_to_ptr.hbm [resolvable:$true] %s89
      %95 = dma.vmem_to_hbm [thread:$0]  %s88, 256, %s90, [#allocation3], 128, 128, 8
    $region17: #{_lambda_.37} parent=1 // pred_fallthru
      _
    // Predicated region
    $region18: #{_lambda_.37} parent=1 // pred_check
      _
    $region19: #{_lambda_.37} parent=1 // pred_check_branch
      %97 = sbr.rel (0) target = $region21
    $region20: #{_lambda_.37} parent=1 // pred_region
      %99 = dma.done [#allocation3], 256
    $region21: #{_lambda_.37} parent=1 // pred_fallthru
      _
    %100 = vsyncpa [#allocation3], 1

</llo_original>
